<compile_context>
chip_gen: v7x
topology: tpu7x:2x2x1
jax: 0.10.0
libtpu: 0.0.40
codegen_flags: <defaults>
</compile_context>

<pallas_src>
import jax
import jax.numpy as jnp
from jax.experimental import pallas as pl
from jax.experimental.pallas import tpu as pltpu


# ---------------------------------------------------------------------------
# Kernels
# ---------------------------------------------------------------------------

def _pos_emb_kernel_halves(pos_ref, inv_ref, out_ref):
    # pos_ref: (TS, 1) f32, inv_ref: (1, H) f32, out_ref: (TS, 2*H) out_dtype
    # H % 128 == 0 -> both half stores are unmasked, lane-dense vst.
    # Sequenced sin -> store -> cos -> store so peak live vector data is
    # ~2 block-widths (no (TS, 2H) concat intermediate) and large TS tiles
    # at demb >= 2048 don't spill.
    H = inv_ref.shape[1]
    sinusoid = pos_ref[...] * inv_ref[...]                 # outer product (TS, H)
    out_ref[:, :H] = jnp.sin(sinusoid).astype(out_ref.dtype)
    out_ref[:, H:] = jnp.cos(sinusoid).astype(out_ref.dtype)


def _pos_emb_kernel_concat(pos_ref, inv_ref, out_ref):
    # H % 128 != 0: a single full-row lane-dense store beats two masked
    # half-width vst.msk stores, at the cost of one concat intermediate.
    sinusoid = pos_ref[...] * inv_ref[...]                 # (TS, H)
    out_ref[...] = jnp.concatenate(
        [jnp.sin(sinusoid), jnp.cos(sinusoid)], axis=-1
    ).astype(out_ref.dtype)


# ---------------------------------------------------------------------------
# Fallback + tiling helpers
# ---------------------------------------------------------------------------

def _pos_emb_xla(pos_seq, inv_freq, out_dtype):
    # Small-size / narrow-demb fallback: let XLA fuse it.
    sinusoid = (pos_seq[:, None].astype(jnp.float32)
                * inv_freq[None, :].astype(jnp.float32))
    return jnp.concatenate(
        [jnp.sin(sinusoid), jnp.cos(sinusoid)], axis=-1
    ).astype(out_dtype)


_OUT_BLOCK_VMEM_BUDGET = 12 * 1024 * 1024     # double-buffered output block cap


def _round_up(x, m):
    return (x + m - 1) // m * m


def _choose_row_tile(S, demb, out_bytes):
    # (1) VMEM budget: 2 * TS * demb * out_bytes <= ~12 MiB.
    ts_budget = _OUT_BLOCK_VMEM_BUDGET // (2 * demb * out_bytes)
    ts_budget = max(8, (ts_budget // 8) * 8)
    # (2) v6e-friendly 1024-row cap at modest demb (8 MiB f32 double-buffered),
    #     512 otherwise.
    ts_cap = 1024 if demb <= 2048 else 512
    # (3) Keep >= ~4 grid steps so the parallel row axis can shard across both
    #     v7x TensorCores (and the pipeline has steps to overlap).
    ts_split = max(8, 8 * ((S + 31) // 32))
    ts = min(ts_cap, ts_budget, ts_split)
    if ts >= S:
        ts = S            # full-extent block is always layout-legal
    return ts


def _vmem_limit_bytes(TS, H, demb, out_bytes):
    out_blk = 2 * TS * demb * out_bytes                 # double-buffered output
    pos_blk = 2 * TS * 128 * 4                          # (TS,1) f32, lane-padded
    inv_blk = 2 * 8 * _round_up(H, 128) * 4             # (1,H) f32, sublane-padded
    slack = 2 * 1024 * 1024                             # internal scratch headroom
    return int(min(out_blk + pos_blk + inv_blk + slack, 32 * 1024 * 1024))


# ---------------------------------------------------------------------------
# Public wrapper (forward pass of the PyTorch module)
# ---------------------------------------------------------------------------

def positional_embedding(pos_seq, inv_freq, bsz=None, *,
                         out_dtype=jnp.float32, min_pallas_elems=65536):
    """pos_seq: (S,), inv_freq: (demb//2,) -> (S, bsz or 1, demb).

    out_dtype=float32 matches the PyTorch module exactly; pass jnp.bfloat16
    in production on v5e/v6e (writeback-bound there -> ~2x from halved bytes).
    """
    S = int(pos_seq.shape[0])
    H = int(inv_freq.shape[0])
    demb = 2 * H
    out_bytes = jnp.dtype(out_dtype).itemsize

    # Fallback: tiny problems (fixed pallas_call overhead dominates) and
    # demb < 128 (output last dim below one lane group -> masked stores).
    if demb < 128 or S * demb < min_pallas_elems:
        pos_emb = _pos_emb_xla(pos_seq, inv_freq, out_dtype)
    else:
        TS = _choose_row_tile(S, demb, out_bytes)
        pos2d = pos_seq.reshape(S, 1).astype(jnp.float32)
        inv2d = inv_freq.reshape(1, H).astype(jnp.float32)
        kernel = (_pos_emb_kernel_halves if H % 128 == 0
                  else _pos_emb_kernel_concat)

        pos_emb = pl.pallas_call(
            kernel,
            out_shape=jax.ShapeDtypeStruct((S, demb), out_dtype),
            grid=((S + TS - 1) // TS,),
            in_specs=[
                pl.BlockSpec((TS, 1), lambda i: (i, 0)),   # row tile of positions
                pl.BlockSpec((1, H), lambda i: (0, 0)),    # inv_freq, resident
            ],
            out_specs=pl.BlockSpec((TS, demb), lambda i: (i, 0)),
            compiler_params=pltpu.CompilerParams(
                # TODO(synk): if an xprof trace shows only one TC busy on v7x,
                # switch this axis to pltpu.CORE_PARALLEL (grid has >= 2 steps).
                dimension_semantics=("parallel",),
                vmem_limit_bytes=_vmem_limit_bytes(TS, H, demb, out_bytes),
            ),
        )(pos2d, inv2d)

    # Batch axis exactly like the PyTorch module. Keep callers inside jit so
    # the broadcast stays lazy (PyTorch .expand() is a view).
    pos_emb = pos_emb[:, None, :]                          # (S, 1, demb)
    if bsz is not None:
        pos_emb = jnp.broadcast_to(pos_emb, (S, bsz, demb))
    return pos_emb


def make_inv_freq(demb):
    # inv_freq = 1 / 10000 ** (arange(0, demb, 2) / demb)   (demb assumed even)
    return 1.0 / (10000.0 ** (jnp.arange(0.0, demb, 2.0) / demb))


# ---------------------------------------------------------------------------
# Demo / self-test
# ---------------------------------------------------------------------------

if __name__ == "__main__":
    key = jax.random.PRNGKey(0)
    offset = jax.random.uniform(key, (), dtype=jnp.float32, minval=0.0, maxval=1.0)

    def ref_pos_emb(pos_seq, inv_freq, bsz):
        sinusoid = pos_seq[:, None] * inv_freq[None, :]
        pe = jnp.concatenate([jnp.sin(sinusoid), jnp.cos(sinusoid)], axis=-1)
        return jnp.broadcast_to(pe[:, None, :], (pos_seq.shape[0], bsz, pe.shape[-1]))

    bsz = 2

    # Case A: module-faithful small shapes (seq=8, demb=32) -> XLA fallback
    # (demb < 128 and under the element threshold by design).
    seq_a, demb_a = 8, 32
    pos_a = jnp.arange(seq_a - 1, -1, -1, dtype=jnp.float32) + offset
    inv_a = make_inv_freq(demb_a)
    out_a = jax.block_until_ready(positional_embedding(pos_a, inv_a, bsz=bsz))
    ref_a = ref_pos_emb(pos_a, inv_a, bsz)
    assert out_a.shape == (seq_a, bsz, demb_a)
    assert jnp.allclose(out_a, ref_a, atol=1e-6), "fallback path mismatch"

    # Case B: Pallas path (seq=512, demb=256 -> H=128, lane-aligned half stores,
    # grid of 4 row tiles of 128).
    seq_b, demb_b = 512, 256
    pos_b = jnp.arange(seq_b - 1, -1, -1, dtype=jnp.float32) + offset
    inv_b = make_inv_freq(demb_b)
    out_b = jax.block_until_ready(positional_embedding(pos_b, inv_b, bsz=bsz))
    ref_b = ref_pos_emb(pos_b, inv_b, bsz)
    assert out_b.shape == (seq_b, bsz, demb_b)
    assert jnp.allclose(out_b, ref_b, atol=1e-3), "pallas f32 path mismatch"

    # Case C: bf16 production dtype on the Pallas path (halved writeback bytes).
    out_b16 = jax.block_until_ready(
        positional_embedding(pos_b, inv_b, bsz=bsz, out_dtype=jnp.bfloat16))
    assert out_b16.dtype == jnp.bfloat16
    assert jnp.allclose(out_b16.astype(jnp.float32), ref_b, atol=1.5e-2), \
        "pallas bf16 path mismatch"

    print("KERNEL_OK")
</pallas_src>

<mosaic_0001>
module attributes {stable_mosaic.version = 11 : i64} {
  func.func @_pos_emb_kernel_halves(%arg0: i32, %arg1: memref<128x1xf32, #tpu.memory_space<vmem>>, %arg2: memref<1x128xf32, #tpu.memory_space<vmem>>, %arg3: memref<128x256xf32, #tpu.memory_space<vmem>>) attributes {dimension_semantics = [#tpu.dimension_semantics<parallel>], iteration_bounds = array<i64: 4>, scalar_prefetch = 0 : i64, scratch_operands = 0 : i64, tpu.core_type = #tpu.core_type<tc>, window_params = [{transform_indices = @transform_0, window_bounds = array<i64: 128, 1>}, {pipeline_mode = #tpu.pipeline_mode<synchronous>, transform_indices = @transform_1, window_bounds = array<i64: 1, 128>}, {transform_indices = @transform_2, window_bounds = array<i64: 128, 256>}]} {
    %c0 = arith.constant 0 : index
    %c0_0 = arith.constant 0 : index
    %0 = vector.load %arg1[%c0, %c0_0] : memref<128x1xf32, #tpu.memory_space<vmem>>, vector<128x1xf32>
    %c0_1 = arith.constant 0 : index
    %c0_2 = arith.constant 0 : index
    %1 = vector.load %arg2[%c0_1, %c0_2] : memref<1x128xf32, #tpu.memory_space<vmem>>, vector<1x128xf32>
    %2 = vector.broadcast %0 : vector<128x1xf32> to vector<128x128xf32>
    %3 = vector.broadcast %1 : vector<1x128xf32> to vector<128x128xf32>
    %4 = arith.mulf %2, %3 : vector<128x128xf32>
    %5 = math.sin %4 : vector<128x128xf32>
    %c0_3 = arith.constant 0 : index
    %c0_4 = arith.constant 0 : index
    %6 = vector.load %arg3[%c0_3, %c0_4] : memref<128x256xf32, #tpu.memory_space<vmem>>, vector<128x128xf32>
    tpu.vector_store %arg3[%c0_3, %c0_4], %5 {strides = array<i32>} : memref<128x256xf32, #tpu.memory_space<vmem>>, vector<128x128xf32>,
    %7 = math.cos %4 : vector<128x128xf32>
    %c0_5 = arith.constant 0 : index
    %c128 = arith.constant 128 : index
    %8 = vector.load %arg3[%c0_5, %c128] : memref<128x256xf32, #tpu.memory_space<vmem>>, vector<128x128xf32>
    tpu.vector_store %arg3[%c0_5, %c128], %7 {strides = array<i32>} : memref<128x256xf32, #tpu.memory_space<vmem>>, vector<128x128xf32>,
    return
  }
  func.func @transform_0(%arg0: i32) -> (i32, i32) {
    %c0_i32 = arith.constant 0 : i32
    %c0_i32_0 = arith.constant 0 : i32
    return %arg0, %c0_i32 : i32, i32
  }
  func.func @transform_1(%arg0: i32) -> (i32, i32) {
    %c0_i32 = arith.constant 0 : i32
    %c0_i32_0 = arith.constant 0 : i32
    %c0_i32_1 = arith.constant 0 : i32
    return %c0_i32, %c0_i32_0 : i32, i32
  }
  func.func @transform_2(%arg0: i32) -> (i32, i32) {
    %c0_i32 = arith.constant 0 : i32
    %c0_i32_0 = arith.constant 0 : i32
    return %arg0, %c0_i32 : i32, i32
  }
}

</mosaic_0001>

<llo_original>
// kernel: tpu_custom_call.1
$region0: #{tpu_custom_call.1}
  #allocation0 [shape = 'u32[]', space=smem, size = 0x4, offset = 0x4, fixed_abs, tag = 'smem constant byte address 0x4 - core index']
  #allocation1 [shape = 'u32[144,128]{1,0:T(1,128)}', space=vmem, size = 0x12000, scoped, tag = 'internal scratch']
  %s0 = inlined_call_operand.vmem [shape: f32[512,1], index: 0, kind: input, shape index: {}]
  %s1 = inlined_call_operand.vmem [shape: f32[1,128], index: 1, kind: input, shape index: {}]
  %s2 = inlined_call_operand.hbm [shape: f32[512,256], index: 2, kind: output, shape index: {}]
  %s3 = sld [smem:[#allocation0]]
  $region41: #{tpu_custom_call.1} parent=0
    _
  %s5 = ssub.s32 1, %s3
  %s6 = scalar_select 0, %s5, %s3
  $region1: #{tpu_custom_call.1} parent=0
    #allocation2 [shape = 'u8[262144]{0}', space=vmem, size = 0x40000, scoped, tag = 'output window, operand 0']
    #allocation3 [shape = 's32[2]{0}', space=sflag, size = 0x8, scoped, tag = 'scoped memory for tpu_custom_call.1']
    %7 = vsyncpa [#allocation3], 0
    %s8 = scalar_lea.sflag [#allocation3], 1
    %9 = vsyncpa %s8, 0
    loop: start=0, step=1, limit=6
    $region2: #{tpu_custom_call.1} parent=1 // loop_pre_header
      _
    $region3: #{tpu_custom_call.1} parent=1 // loop_header
      %s11 = sphi 0, %s15
      %p12 = scmp.ge.s32.totalorder %s11, 6
      %s21 = sphi 0, %s23
      %s24 = sphi 0, %s21
      %s25 = sphi 0, %s24
      %s41 = sphi 0, %s25
      %s45 = sphi 0, %s45
      %s47 = sphi 0, %s45
      %s48 = sphi 0, %s47
      %s62 = sphi 0, %s48
      %s68 = sphi 0, %s70
      %s71 = sphi 0, %s68
      %s72 = sphi 0, %s71
      %s88 = sphi 0, %s72
    $region4: #{tpu_custom_call.1} parent=1 // loop_header_branch
      %14 = sbr.rel (%p12) target = $region8
    $region5: #{tpu_custom_call.1} parent=1 // loop_body
      %s16 = ssub.s32 %s11, 1
      %s17 = ssub.s32 %s11, 2
      %s18 = sadd.s32 %s11, 1
      %s19 = ssub.s32 %s11, %s18
      %p20 = scmp.eq.s32.totalorder %s19, 0
      %s22 = sadd.s32 %s21, 1
      %s23 = scalar_select %p20, %s21, %s22
      %p26 = pneg %p20
      %p27 = scmp.eq.s32.totalorder %s11, 3
      %p28 = por %p26, %p27
      %p29 = scmp.ne.s32.totalorder %s21, %s24
      %p30 = scmp.eq.s32.totalorder %s11, 0
      %p31 = por %p29, %p30
      %p32 = scmp.ne.s32.totalorder %s21, %s24
      %p33 = scmp.eq.s32.totalorder %s16, 3
      %p34 = por %p32, %p33
      %p35 = scmp.ne.s32.totalorder %s24, %s25
      %p36 = scmp.eq.s32.totalorder %s16, 0
      %p37 = por %p35, %p36
      %p38 = scmp.ne.s32.totalorder %s24, %s25
      %p39 = scmp.eq.s32.totalorder %s17, 3
      %p40 = por %p38, %p39
      %p42 = scmp.ne.s32.totalorder %s25, %s41
      %p43 = scmp.eq.s32.totalorder %s17, 0
      %p44 = por %p42, %p43
      %s46 = sadd.s32 %s45, 1
      %p49 = scmp.eq.s32.totalorder %s11, 3
      %p50 = scmp.ne.s32.totalorder %s45, %s47
      %p51 = scmp.eq.s32.totalorder %s11, 0
      %p52 = por %p50, %p51
      %p53 = scmp.ne.s32.totalorder %s45, %s47
      %p54 = scmp.eq.s32.totalorder %s16, 3
      %p55 = por %p53, %p54
      %p56 = scmp.ne.s32.totalorder %s47, %s48
      %p57 = scmp.eq.s32.totalorder %s16, 0
      %p58 = por %p56, %p57
      %p59 = scmp.ne.s32.totalorder %s47, %s48
      %p60 = scmp.eq.s32.totalorder %s17, 3
      %p61 = por %p59, %p60
      %p63 = scmp.ne.s32.totalorder %s48, %s62
      %p64 = scmp.eq.s32.totalorder %s17, 0
      %p65 = por %p63, %p64
      %s66 = ssub.s32 %s11, %s18
      %p67 = scmp.eq.s32.totalorder %s66, 0
      %s69 = sadd.s32 %s68, 1
      %s70 = scalar_select %p67, %s68, %s69
      %p73 = pneg %p67
      %p74 = scmp.eq.s32.totalorder %s11, 3
      %p75 = por %p73, %p74
      %p76 = scmp.ne.s32.totalorder %s68, %s71
      %p77 = scmp.eq.s32.totalorder %s11, 0
      %p78 = por %p76, %p77
      %p79 = scmp.ne.s32.totalorder %s68, %s71
      %p80 = scmp.eq.s32.totalorder %s16, 3
      %p81 = por %p79, %p80
      %p82 = scmp.ne.s32.totalorder %s71, %s72
      %p83 = scmp.eq.s32.totalorder %s16, 0
      %p84 = por %p82, %p83
      %p85 = scmp.ne.s32.totalorder %s71, %s72
      %p86 = scmp.eq.s32.totalorder %s17, 3
      %p87 = por %p85, %p86
      %p89 = scmp.ne.s32.totalorder %s72, %s88
      %p90 = scmp.eq.s32.totalorder %s17, 0
      %p91 = por %p89, %p90
      %p92 = scmp.le.s32.totalorder 1, %s11
      %p93 = scmp.lt.s32.totalorder %s11, 5
      %p94 = pnand %p92, %p93
      %p95 = pneg %p94
      // Predicated region
      $region9: #{tpu_custom_call.1} parent=5 // pred_check
        _
      $region10: #{tpu_custom_call.1} parent=5 // pred_check_branch
        %97 = sbr.rel (%p94) target = $region12
      $region11: #{tpu_custom_call.1} parent=5 // pred_region
        %s98 = ssub.s32 %s11, 1
        // Predicated region
        $region13: #{tpu_custom_call.1} parent=11 // pred_check
          %p99 = pneg %p58
        $region14: #{tpu_custom_call.1} parent=11 // pred_check_branch
          %101 = sbr.rel (%p99) target = $region16
        $region15: #{tpu_custom_call.1} parent=11 // pred_region
          _
        $region16: #{tpu_custom_call.1} parent=11 // pred_fallthru
          _
      $region12: #{tpu_custom_call.1} parent=5 // pred_fallthru
        _
      %p102 = scmp.lt.s32.totalorder %s11, 4
      // Predicated region
      $region17: #{tpu_custom_call.1} parent=5 // pred_check
        %p103 = pneg %p102
      $region18: #{tpu_custom_call.1} parent=5 // pred_check_branch
        %105 = sbr.rel (%p103) target = $region20
      $region19: #{tpu_custom_call.1} parent=5 // pred_region
        // Predicated region
        $region21: #{tpu_custom_call.1} parent=19 // pred_check
          %p106 = pneg %p31
        $region22: #{tpu_custom_call.1} parent=19 // pred_check_branch
          %108 = sbr.rel (%p106) target = $region24
        $region23: #{tpu_custom_call.1} parent=19 // pred_region
          %s109 = smul.u32 16, %s11
          %p110 = scmp.lt.s32.totalorder %s109, 63
          %s111 = scalar_select %p110, %s109, 63
          %s112 = smul.addr %s111, 8
          %s113 = scalar_lea.vmem %s0, %s112
          %s114 = smul.u32 16, %s11
        $region24: #{tpu_custom_call.1} parent=19 // pred_fallthru
          _
      $region20: #{tpu_custom_call.1} parent=5 // pred_fallthru
        _
      %p115 = scmp.le.s32.totalorder 1, %s11
      %p116 = scmp.lt.s32.totalorder %s11, 5
      %p117 = pnand %p115, %p116
      %p118 = pneg %p117
      // Predicated region
      $region25: #{tpu_custom_call.1} parent=5 // pred_check
        _
      $region26: #{tpu_custom_call.1} parent=5 // pred_check_branch
        %120 = sbr.rel (%p117) target = $region28
      $region27: #{tpu_custom_call.1} parent=5 // pred_region
        %s121 = ssub.s32 %s11, 1
        %s122 = smul.u32 16, %s16
        %p123 = scmp.lt.s32.totalorder %s122, 63
        %s124 = scalar_select %p123, %s122, 63
        %s125 = smul.addr %s124, 8
        %s126 = scalar_lea.vmem %s0, %s125
        %p127 = pneg %p37
        %p128 = pneg %p34
        %p129 = pneg %p58
        %p130 = pneg %p55
        %p131 = pneg %p84
        %p132 = pneg %p81
        %s133 = sand.u32 %s71, 1
        %s134 = scalar_lea.sflag [#allocation3], %s133
        %s135 = sand.u32 %s71, 1
        %s136 = smul.addr %s135, 256
        %s137 = scalar_lea.vmem [#allocation2], %s136
        %s138 = smul.u32 16, %s16
        %p139 = scmp.lt.s32.totalorder %s138, 63
        %s140 = scalar_select %p139, %s138, 63
        %s141 = smul.addr %s140, 8
        %s142 = scalar_lea.vmem %s0, %s141
        %s143 = smul.u32 16, %s16
        %s144 = smul.u32 16, %s16
        %v145 = vld [vmem:[%s142] sm:$0xff]
        %v146 = vld [vmem:[%s142 + $0x8] sm:$0xff]
        %v147 = vld [vmem:[%s142 + $0x10] sm:$0xff]
        %v148 = vld [vmem:[%s142 + $0x18] sm:$0xff]
        %v149 = vld [vmem:[%s142 + $0x20] sm:$0xff]
        %v150 = vld [vmem:[%s142 + $0x28] sm:$0xff]
        %v151 = vld [vmem:[%s142 + $0x30] sm:$0xff]
        %v152 = vld [vmem:[%s142 + $0x38] sm:$0xff]
        %v153 = vld [vmem:[%s142 + $0x40] sm:$0xff]
        %v154 = vld [vmem:[%s142 + $0x48] sm:$0xff]
        %v155 = vld [vmem:[%s142 + $0x50] sm:$0xff]
        %v156 = vld [vmem:[%s142 + $0x58] sm:$0xff]
        %v157 = vld [vmem:[%s142 + $0x60] sm:$0xff]
        %v158 = vld [vmem:[%s142 + $0x68] sm:$0xff]
        %v159 = vld [vmem:[%s142 + $0x70] sm:$0xff]
        %v160 = vld [vmem:[%s142 + $0x78] sm:$0xff]
        %v161 = vld [vmem:[%s1] sm:$0x1]
        %163 = vset.pattern.permute.xlu0 0
        %164 = vperm.xlu0 %163, %v145
        %v165 = vpop.permute.xlu0 %164
        %168 = vset.pattern.permute.xlu0 0
        %169 = vperm.xlu0 %168, %v146
        %v170 = vpop.permute.xlu0 %169
        %173 = vset.pattern.permute.xlu0 0
        %174 = vperm.xlu0 %173, %v147
        %v175 = vpop.permute.xlu0 %174
        %178 = vset.pattern.permute.xlu0 0
        %179 = vperm.xlu0 %178, %v148
        %v180 = vpop.permute.xlu0 %179
        %183 = vset.pattern.permute.xlu0 0
        %184 = vperm.xlu0 %183, %v149
        %v185 = vpop.permute.xlu0 %184
        %188 = vset.pattern.permute.xlu0 0
        %189 = vperm.xlu0 %188, %v150
        %v190 = vpop.permute.xlu0 %189
        %193 = vset.pattern.permute.xlu0 0
        %194 = vperm.xlu0 %193, %v151
        %v195 = vpop.permute.xlu0 %194
        %198 = vset.pattern.permute.xlu0 0
        %199 = vperm.xlu0 %198, %v152
        %v200 = vpop.permute.xlu0 %199
        %203 = vset.pattern.permute.xlu0 0
        %204 = vperm.xlu0 %203, %v153
        %v205 = vpop.permute.xlu0 %204
        %208 = vset.pattern.permute.xlu0 0
        %209 = vperm.xlu0 %208, %v154
        %v210 = vpop.permute.xlu0 %209
        %213 = vset.pattern.permute.xlu0 0
        %214 = vperm.xlu0 %213, %v155
        %v215 = vpop.permute.xlu0 %214
        %218 = vset.pattern.permute.xlu0 0
        %219 = vperm.xlu0 %218, %v156
        %v220 = vpop.permute.xlu0 %219
        %223 = vset.pattern.permute.xlu0 0
        %224 = vperm.xlu0 %223, %v157
        %v225 = vpop.permute.xlu0 %224
        %228 = vset.pattern.permute.xlu0 0
        %229 = vperm.xlu0 %228, %v158
        %v230 = vpop.permute.xlu0 %229
        %233 = vset.pattern.permute.xlu0 0
        %234 = vperm.xlu0 %233, %v159
        %v235 = vpop.permute.xlu0 %234
        %238 = vset.pattern.permute.xlu0 0
        %239 = vperm.xlu0 %238, %v160
        %v240 = vpop.permute.xlu0 %239
        %v243 = vlaneseq
        %v244 = vshrl.u32 %v243, 7
        %v245 = vsub.s32 0, %v244
        %v246 = vrot.slane %v161, %v245
        %v248 = vmul.f32 %v165, %v246
        %v249 = vmul.f32 %v170, %v246
        %v250 = vmul.f32 %v175, %v246
        %v251 = vmul.f32 %v180, %v246
        %v252 = vmul.f32 %v185, %v246
        %v253 = vmul.f32 %v190, %v246
        %v254 = vmul.f32 %v195, %v246
        %v255 = vmul.f32 %v200, %v246
        %v256 = vmul.f32 %v205, %v246
        %v257 = vmul.f32 %v210, %v246
        %v258 = vmul.f32 %v215, %v246
        %v259 = vmul.f32 %v220, %v246
        %v260 = vmul.f32 %v225, %v246
        %v261 = vmul.f32 %v230, %v246
        %v262 = vmul.f32 %v235, %v246
        %v263 = vmul.f32 %v240, %v246
        %v264 = vand.u32 2147483647, %v248
        %vm265 = vcmp.le.f32.partialorder %v264, 0.7853982
        %vm266 = vcmp.lt.s32.totalorder %v248, 0
        %v267 = vand.u32 %v248, 2139095040
        %v268 = vshrl.u32 %v267, 23
        %v269 = vsub.s32 %v268, 127
        %v270 = vand.u32 2147483647, %v248
        %v271 = vand.u32 %v270, 8388607
        %v272 = vor.u32 %v271, 8388608
        %v273 = vsub.s32 0, %v272
        %v274 = vadd.s32 %v269, 1
        %vm275 = vcmp.gt.s32.totalorder %v274, 0
        %v276 = vsel %vm275, %v274, 0
        %v277 = vshrl.u32 %v276, 5
        %v278 = vand.u32 %v276, 31
        %v279 = vsub.s32 32, %v278
        %v280 = vshrl.u32 683565275, %v279
        %v281 = vshll.u32 683565275, %v278
        %v282 = vshrl.u32 2475754826, %v279
        %v283 = vor.u32 %v281, %v282
        %v284 = vshll.u32 2475754826, %v278
        %v285 = vshrl.u32 2131351028, %v279
        %v286 = vor.u32 %v284, %v285
        %v287 = vshll.u32 2131351028, %v278
        %v288 = vshrl.u32 2102212464, %v279
        %v289 = vor.u32 %v287, %v288
        %v290 = vshll.u32 2102212464, %v278
        %v291 = vshrl.u32 920167782, %v279
        %v292 = vor.u32 %v290, %v291
        %v293 = vshll.u32 920167782, %v278
        %v294 = vshrl.u32 1326507024, %v279
        %v295 = vor.u32 %v293, %v294
        %vm296 = vcmp.lt.s32.totalorder %v277, 1
        %vm297 = vcmp.lt.s32.totalorder %v277, 2
        %vm298 = vcmp.lt.s32.totalorder %v277, 3
        %vm299 = vcmp.lt.s32.totalorder %v277, 4
        %v300 = vsel %vm296, %v280, %v283
        %v301 = vsel %vm299, %v289, 2102212464
        %v302 = vsel %vm298, %v286, %v301
        %v303 = vsel %vm297, %v300, %v302
        %v304 = vsel %vm296, %v283, %v286
        %v305 = vsel %vm299, %v292, 920167782
        %v306 = vsel %vm298, %v289, %v305
        %v307 = vsel %vm297, %v304, %v306
        %v308 = vsel %vm296, %v286, %v289
        %v309 = vsel %vm299, %v295, 1326507024
        %v310 = vsel %vm298, %v292, %v309
        %v311 = vsel %vm297, %v308, %v310
        %v312 = vshll.u32 %v272, 8
        %v313 = vmul.u32.u64.compose %v312, %v311
        %v314 = vextract.low.u32 %v313
        %v315 = vextract.high.u32 %v313
        %v316 = vmul.u32.u64.compose %v312, %v307
        %v317 = vextract.low.u32 %v316
        %v318 = vextract.high.u32 %v316
        %v319 = vmul.u32 %v312, %v303
        %v320 = vadd.s32 %v315, %v317
        %vm321 = vc.u32 %v315, %v317
        %v322 = vadd.s32 %v318, 1
        %v323 = vsel %vm321, %v322, %v318
        %v324 = vadd.s32 %v319, %v323
        %v325 = vadd.s32 %v324, 536870912
        %v326 = vshrl.u32 %v325, 30
        %v327 = vshll.u32 %v326, 30
        %v328 = vsub.s32 %v324, %v327
        %vm329 = vcmp.lt.s32.totalorder %v328, 0
        %v330 = vsub.s32 0, %v328
        %v331 = vsel %vm329, %v330, %v328
        %v332 = vclz %v331
        %v333 = vsub.s32 %v332, 2
        %vm334 = vcmp.gt.s32.totalorder 0, %v333
        %v335 = vsel %vm334, 0, %v333
        %v336 = vsub.s32 32, %v335
        %v337 = vshll.u32 %v328, %v335
        %v338 = vshrl.u32 %v320, %v336
        %v339 = vor.u32 %v337, %v338
        %v340 = vsub.s32 4294967266, %v335
        %v341 = vadd.s32 %v340, 127
        %v342 = vshll.u32 %v341, 23
        %v343 = vor.u32 4788187, %v342
        %v344 = vand.u32 2147483647, %v343
        %v346 = vcvt.s32.f32 %v339
        %v347 = vmul.f32 %v346, %v344
        %v348 = vxor.u32 %v347, 2147483648
        %v349 = vsel %vm266, %v348, %v347
        %v350 = vsub.s32 4, %v326
        %v351 = vsel %vm266, %v350, %v326
        %v352 = vsel %vm265, %v248, %v349
        %v353 = vsel %vm265, 0, %v351
        %v354 = vcosq.f32.pop %v352
        %v355 = vsinq.f32.pop %v352
        %vm356 = vweird.f32 %v248
        %v357 = vadd.s32 %v353, 3
        %v358 = vand.u32 %v357, 3
        %vm359 = vcmp.lt.s32.totalorder %v358, 2
        %vm360 = vcmp.eq.s32.totalorder %v358, 0
        %v361 = vxor.u32 %v355, 2147483648
        %v362 = vsel %vm360, %v354, %v361
        %vm363 = vcmp.eq.s32.totalorder %v358, 2
        %v364 = vxor.u32 %v354, 2147483648
        %v365 = vsel %vm363, %v364, %v355
        %v366 = vsel %vm359, %v362, %v365
        %v367 = vsel %vm356, nan, %v366
        %v368 = vand.u32 2147483647, %v249
        %vm369 = vcmp.le.f32.partialorder %v368, 0.7853982
        %vm370 = vcmp.lt.s32.totalorder %v249, 0
        %v371 = vand.u32 %v249, 2139095040
        %v372 = vshrl.u32 %v371, 23
        %v373 = vsub.s32 %v372, 127
        %v374 = vand.u32 2147483647, %v249
        %v375 = vand.u32 %v374, 8388607
        %v376 = vor.u32 %v375, 8388608
        %v377 = vsub.s32 0, %v376
        %v378 = vadd.s32 %v373, 1
        %vm379 = vcmp.gt.s32.totalorder %v378, 0
        %v380 = vsel %vm379, %v378, 0
        %v381 = vshrl.u32 %v380, 5
        %v382 = vand.u32 %v380, 31
        %v383 = vsub.s32 32, %v382
        %v384 = vshrl.u32 683565275, %v383
        %v385 = vshll.u32 683565275, %v382
        %v386 = vshrl.u32 2475754826, %v383
        %v387 = vor.u32 %v385, %v386
        %v388 = vshll.u32 2475754826, %v382
        %v389 = vshrl.u32 2131351028, %v383
        %v390 = vor.u32 %v388, %v389
        %v391 = vshll.u32 2131351028, %v382
        %v392 = vshrl.u32 2102212464, %v383
        %v393 = vor.u32 %v391, %v392
        %v394 = vshll.u32 2102212464, %v382
        %v395 = vshrl.u32 920167782, %v383
        %v396 = vor.u32 %v394, %v395
        %v397 = vshll.u32 920167782, %v382
        %v398 = vshrl.u32 1326507024, %v383
        %v399 = vor.u32 %v397, %v398
        %vm400 = vcmp.lt.s32.totalorder %v381, 1
        %vm401 = vcmp.lt.s32.totalorder %v381, 2
        %vm402 = vcmp.lt.s32.totalorder %v381, 3
        %vm403 = vcmp.lt.s32.totalorder %v381, 4
        %v404 = vsel %vm400, %v384, %v387
        %v405 = vsel %vm403, %v393, 2102212464
        %v406 = vsel %vm402, %v390, %v405
        %v407 = vsel %vm401, %v404, %v406
        %v408 = vsel %vm400, %v387, %v390
        %v409 = vsel %vm403, %v396, 920167782
        %v410 = vsel %vm402, %v393, %v409
        %v411 = vsel %vm401, %v408, %v410
        %v412 = vsel %vm400, %v390, %v393
        %v413 = vsel %vm403, %v399, 1326507024
        %v414 = vsel %vm402, %v396, %v413
        %v415 = vsel %vm401, %v412, %v414
        %v416 = vshll.u32 %v376, 8
        %v417 = vmul.u32.u64.compose %v416, %v415
        %v418 = vextract.low.u32 %v417
        %v419 = vextract.high.u32 %v417
        %v420 = vmul.u32.u64.compose %v416, %v411
        %v421 = vextract.low.u32 %v420
        %v422 = vextract.high.u32 %v420
        %v423 = vmul.u32 %v416, %v407
        %v424 = vadd.s32 %v419, %v421
        %vm425 = vc.u32 %v419, %v421
        %v426 = vadd.s32 %v422, 1
        %v427 = vsel %vm425, %v426, %v422
        %v428 = vadd.s32 %v423, %v427
        %v429 = vadd.s32 %v428, 536870912
        %v430 = vshrl.u32 %v429, 30
        %v431 = vshll.u32 %v430, 30
        %v432 = vsub.s32 %v428, %v431
        %vm433 = vcmp.lt.s32.totalorder %v432, 0
        %v434 = vsub.s32 0, %v432
        %v435 = vsel %vm433, %v434, %v432
        %v436 = vclz %v435
        %v437 = vsub.s32 %v436, 2
        %vm438 = vcmp.gt.s32.totalorder 0, %v437
        %v439 = vsel %vm438, 0, %v437
        %v440 = vsub.s32 32, %v439
        %v441 = vshll.u32 %v432, %v439
        %v442 = vshrl.u32 %v424, %v440
        %v443 = vor.u32 %v441, %v442
        %v444 = vsub.s32 4294967266, %v439
        %v445 = vadd.s32 %v444, 127
        %v446 = vshll.u32 %v445, 23
        %v447 = vor.u32 4788187, %v446
        %v448 = vand.u32 2147483647, %v447
        %v450 = vcvt.s32.f32 %v443
        %v451 = vmul.f32 %v450, %v448
        %v452 = vxor.u32 %v451, 2147483648
        %v453 = vsel %vm370, %v452, %v451
        %v454 = vsub.s32 4, %v430
        %v455 = vsel %vm370, %v454, %v430
        %v456 = vsel %vm369, %v249, %v453
        %v457 = vsel %vm369, 0, %v455
        %v458 = vcosq.f32.pop %v456
        %v459 = vsinq.f32.pop %v456
        %vm460 = vweird.f32 %v249
        %v461 = vadd.s32 %v457, 3
        %v462 = vand.u32 %v461, 3
        %vm463 = vcmp.lt.s32.totalorder %v462, 2
        %vm464 = vcmp.eq.s32.totalorder %v462, 0
        %v465 = vxor.u32 %v459, 2147483648
        %v466 = vsel %vm464, %v458, %v465
        %vm467 = vcmp.eq.s32.totalorder %v462, 2
        %v468 = vxor.u32 %v458, 2147483648
        %v469 = vsel %vm467, %v468, %v459
        %v470 = vsel %vm463, %v466, %v469
        %v471 = vsel %vm460, nan, %v470
        %v472 = vand.u32 2147483647, %v250
        %vm473 = vcmp.le.f32.partialorder %v472, 0.7853982
        %vm474 = vcmp.lt.s32.totalorder %v250, 0
        %v475 = vand.u32 %v250, 2139095040
        %v476 = vshrl.u32 %v475, 23
        %v477 = vsub.s32 %v476, 127
        %v478 = vand.u32 2147483647, %v250
        %v479 = vand.u32 %v478, 8388607
        %v480 = vor.u32 %v479, 8388608
        %v481 = vsub.s32 0, %v480
        %v482 = vadd.s32 %v477, 1
        %vm483 = vcmp.gt.s32.totalorder %v482, 0
        %v484 = vsel %vm483, %v482, 0
        %v485 = vshrl.u32 %v484, 5
        %v486 = vand.u32 %v484, 31
        %v487 = vsub.s32 32, %v486
        %v488 = vshrl.u32 683565275, %v487
        %v489 = vshll.u32 683565275, %v486
        %v490 = vshrl.u32 2475754826, %v487
        %v491 = vor.u32 %v489, %v490
        %v492 = vshll.u32 2475754826, %v486
        %v493 = vshrl.u32 2131351028, %v487
        %v494 = vor.u32 %v492, %v493
        %v495 = vshll.u32 2131351028, %v486
        %v496 = vshrl.u32 2102212464, %v487
        %v497 = vor.u32 %v495, %v496
        %v498 = vshll.u32 2102212464, %v486
        %v499 = vshrl.u32 920167782, %v487
        %v500 = vor.u32 %v498, %v499
        %v501 = vshll.u32 920167782, %v486
        %v502 = vshrl.u32 1326507024, %v487
        %v503 = vor.u32 %v501, %v502
        %vm504 = vcmp.lt.s32.totalorder %v485, 1
        %vm505 = vcmp.lt.s32.totalorder %v485, 2
        %vm506 = vcmp.lt.s32.totalorder %v485, 3
        %vm507 = vcmp.lt.s32.totalorder %v485, 4
        %v508 = vsel %vm504, %v488, %v491
        %v509 = vsel %vm507, %v497, 2102212464
        %v510 = vsel %vm506, %v494, %v509
        %v511 = vsel %vm505, %v508, %v510
        %v512 = vsel %vm504, %v491, %v494
        %v513 = vsel %vm507, %v500, 920167782
        %v514 = vsel %vm506, %v497, %v513
        %v515 = vsel %vm505, %v512, %v514
        %v516 = vsel %vm504, %v494, %v497
        %v517 = vsel %vm507, %v503, 1326507024
        %v518 = vsel %vm506, %v500, %v517
        %v519 = vsel %vm505, %v516, %v518
        %v520 = vshll.u32 %v480, 8
        %v521 = vmul.u32.u64.compose %v520, %v519
        %v522 = vextract.low.u32 %v521
        %v523 = vextract.high.u32 %v521
        %v524 = vmul.u32.u64.compose %v520, %v515
        %v525 = vextract.low.u32 %v524
        %v526 = vextract.high.u32 %v524
        %v527 = vmul.u32 %v520, %v511
        %v528 = vadd.s32 %v523, %v525
        %vm529 = vc.u32 %v523, %v525
        %v530 = vadd.s32 %v526, 1
        %v531 = vsel %vm529, %v530, %v526
        %v532 = vadd.s32 %v527, %v531
        %v533 = vadd.s32 %v532, 536870912
        %v534 = vshrl.u32 %v533, 30
        %v535 = vshll.u32 %v534, 30
        %v536 = vsub.s32 %v532, %v535
        %vm537 = vcmp.lt.s32.totalorder %v536, 0
        %v538 = vsub.s32 0, %v536
        %v539 = vsel %vm537, %v538, %v536
        %v540 = vclz %v539
        %v541 = vsub.s32 %v540, 2
        %vm542 = vcmp.gt.s32.totalorder 0, %v541
        %v543 = vsel %vm542, 0, %v541
        %v544 = vsub.s32 32, %v543
        %v545 = vshll.u32 %v536, %v543
        %v546 = vshrl.u32 %v528, %v544
        %v547 = vor.u32 %v545, %v546
        %v548 = vsub.s32 4294967266, %v543
        %v549 = vadd.s32 %v548, 127
        %v550 = vshll.u32 %v549, 23
        %v551 = vor.u32 4788187, %v550
        %v552 = vand.u32 2147483647, %v551
        %v554 = vcvt.s32.f32 %v547
        %v555 = vmul.f32 %v554, %v552
        %v556 = vxor.u32 %v555, 2147483648
        %v557 = vsel %vm474, %v556, %v555
        %v558 = vsub.s32 4, %v534
        %v559 = vsel %vm474, %v558, %v534
        %v560 = vsel %vm473, %v250, %v557
        %v561 = vsel %vm473, 0, %v559
        %v562 = vcosq.f32.pop %v560
        %v563 = vsinq.f32.pop %v560
        %vm564 = vweird.f32 %v250
        %v565 = vadd.s32 %v561, 3
        %v566 = vand.u32 %v565, 3
        %vm567 = vcmp.lt.s32.totalorder %v566, 2
        %vm568 = vcmp.eq.s32.totalorder %v566, 0
        %v569 = vxor.u32 %v563, 2147483648
        %v570 = vsel %vm568, %v562, %v569
        %vm571 = vcmp.eq.s32.totalorder %v566, 2
        %v572 = vxor.u32 %v562, 2147483648
        %v573 = vsel %vm571, %v572, %v563
        %v574 = vsel %vm567, %v570, %v573
        %v575 = vsel %vm564, nan, %v574
        %v576 = vand.u32 2147483647, %v251
        %vm577 = vcmp.le.f32.partialorder %v576, 0.7853982
        %vm578 = vcmp.lt.s32.totalorder %v251, 0
        %v579 = vand.u32 %v251, 2139095040
        %v580 = vshrl.u32 %v579, 23
        %v581 = vsub.s32 %v580, 127
        %v582 = vand.u32 2147483647, %v251
        %v583 = vand.u32 %v582, 8388607
        %v584 = vor.u32 %v583, 8388608
        %v585 = vsub.s32 0, %v584
        %v586 = vadd.s32 %v581, 1
        %vm587 = vcmp.gt.s32.totalorder %v586, 0
        %v588 = vsel %vm587, %v586, 0
        %v589 = vshrl.u32 %v588, 5
        %v590 = vand.u32 %v588, 31
        %v591 = vsub.s32 32, %v590
        %v592 = vshrl.u32 683565275, %v591
        %v593 = vshll.u32 683565275, %v590
        %v594 = vshrl.u32 2475754826, %v591
        %v595 = vor.u32 %v593, %v594
        %v596 = vshll.u32 2475754826, %v590
        %v597 = vshrl.u32 2131351028, %v591
        %v598 = vor.u32 %v596, %v597
        %v599 = vshll.u32 2131351028, %v590
        %v600 = vshrl.u32 2102212464, %v591
        %v601 = vor.u32 %v599, %v600
        %v602 = vshll.u32 2102212464, %v590
        %v603 = vshrl.u32 920167782, %v591
        %v604 = vor.u32 %v602, %v603
        %v605 = vshll.u32 920167782, %v590
        %v606 = vshrl.u32 1326507024, %v591
        %v607 = vor.u32 %v605, %v606
        %vm608 = vcmp.lt.s32.totalorder %v589, 1
        %vm609 = vcmp.lt.s32.totalorder %v589, 2
        %vm610 = vcmp.lt.s32.totalorder %v589, 3
        %vm611 = vcmp.lt.s32.totalorder %v589, 4
        %v612 = vsel %vm608, %v592, %v595
        %v613 = vsel %vm611, %v601, 2102212464
        %v614 = vsel %vm610, %v598, %v613
        %v615 = vsel %vm609, %v612, %v614
        %v616 = vsel %vm608, %v595, %v598
        %v617 = vsel %vm611, %v604, 920167782
        %v618 = vsel %vm610, %v601, %v617
        %v619 = vsel %vm609, %v616, %v618
        %v620 = vsel %vm608, %v598, %v601
        %v621 = vsel %vm611, %v607, 1326507024
        %v622 = vsel %vm610, %v604, %v621
        %v623 = vsel %vm609, %v620, %v622
        %v624 = vshll.u32 %v584, 8
        %v625 = vmul.u32.u64.compose %v624, %v623
        %v626 = vextract.low.u32 %v625
        %v627 = vextract.high.u32 %v625
        %v628 = vmul.u32.u64.compose %v624, %v619
        %v629 = vextract.low.u32 %v628
        %v630 = vextract.high.u32 %v628
        %v631 = vmul.u32 %v624, %v615
        %v632 = vadd.s32 %v627, %v629
        %vm633 = vc.u32 %v627, %v629
        %v634 = vadd.s32 %v630, 1
        %v635 = vsel %vm633, %v634, %v630
        %v636 = vadd.s32 %v631, %v635
        %v637 = vadd.s32 %v636, 536870912
        %v638 = vshrl.u32 %v637, 30
        %v639 = vshll.u32 %v638, 30
        %v640 = vsub.s32 %v636, %v639
        %vm641 = vcmp.lt.s32.totalorder %v640, 0
        %v642 = vsub.s32 0, %v640
        %v643 = vsel %vm641, %v642, %v640
        %v644 = vclz %v643
        %v645 = vsub.s32 %v644, 2
        %vm646 = vcmp.gt.s32.totalorder 0, %v645
        %v647 = vsel %vm646, 0, %v645
        %v648 = vsub.s32 32, %v647
        %v649 = vshll.u32 %v640, %v647
        %v650 = vshrl.u32 %v632, %v648
        %v651 = vor.u32 %v649, %v650
        %v652 = vsub.s32 4294967266, %v647
        %v653 = vadd.s32 %v652, 127
        %v654 = vshll.u32 %v653, 23
        %v655 = vor.u32 4788187, %v654
        %v656 = vand.u32 2147483647, %v655
        %v658 = vcvt.s32.f32 %v651
        %v659 = vmul.f32 %v658, %v656
        %v660 = vxor.u32 %v659, 2147483648
        %v661 = vsel %vm578, %v660, %v659
        %v662 = vsub.s32 4, %v638
        %v663 = vsel %vm578, %v662, %v638
        %v664 = vsel %vm577, %v251, %v661
        %v665 = vsel %vm577, 0, %v663
        %v666 = vcosq.f32.pop %v664
        %v667 = vsinq.f32.pop %v664
        %vm668 = vweird.f32 %v251
        %v669 = vadd.s32 %v665, 3
        %v670 = vand.u32 %v669, 3
        %vm671 = vcmp.lt.s32.totalorder %v670, 2
        %vm672 = vcmp.eq.s32.totalorder %v670, 0
        %v673 = vxor.u32 %v667, 2147483648
        %v674 = vsel %vm672, %v666, %v673
        %vm675 = vcmp.eq.s32.totalorder %v670, 2
        %v676 = vxor.u32 %v666, 2147483648
        %v677 = vsel %vm675, %v676, %v667
        %v678 = vsel %vm671, %v674, %v677
        %v679 = vsel %vm668, nan, %v678
        %v680 = vand.u32 2147483647, %v252
        %vm681 = vcmp.le.f32.partialorder %v680, 0.7853982
        %vm682 = vcmp.lt.s32.totalorder %v252, 0
        %v683 = vand.u32 %v252, 2139095040
        %v684 = vshrl.u32 %v683, 23
        %v685 = vsub.s32 %v684, 127
        %v686 = vand.u32 2147483647, %v252
        %v687 = vand.u32 %v686, 8388607
        %v688 = vor.u32 %v687, 8388608
        %v689 = vsub.s32 0, %v688
        %v690 = vadd.s32 %v685, 1
        %vm691 = vcmp.gt.s32.totalorder %v690, 0
        %v692 = vsel %vm691, %v690, 0
        %v693 = vshrl.u32 %v692, 5
        %v694 = vand.u32 %v692, 31
        %v695 = vsub.s32 32, %v694
        %v696 = vshrl.u32 683565275, %v695
        %v697 = vshll.u32 683565275, %v694
        %v698 = vshrl.u32 2475754826, %v695
        %v699 = vor.u32 %v697, %v698
        %v700 = vshll.u32 2475754826, %v694
        %v701 = vshrl.u32 2131351028, %v695
        %v702 = vor.u32 %v700, %v701
        %v703 = vshll.u32 2131351028, %v694
        %v704 = vshrl.u32 2102212464, %v695
        %v705 = vor.u32 %v703, %v704
        %v706 = vshll.u32 2102212464, %v694
        %v707 = vshrl.u32 920167782, %v695
        %v708 = vor.u32 %v706, %v707
        %v709 = vshll.u32 920167782, %v694
        %v710 = vshrl.u32 1326507024, %v695
        %v711 = vor.u32 %v709, %v710
        %vm712 = vcmp.lt.s32.totalorder %v693, 1
        %vm713 = vcmp.lt.s32.totalorder %v693, 2
        %vm714 = vcmp.lt.s32.totalorder %v693, 3
        %vm715 = vcmp.lt.s32.totalorder %v693, 4
        %v716 = vsel %vm712, %v696, %v699
        %v717 = vsel %vm715, %v705, 2102212464
        %v718 = vsel %vm714, %v702, %v717
        %v719 = vsel %vm713, %v716, %v718
        %v720 = vsel %vm712, %v699, %v702
        %v721 = vsel %vm715, %v708, 920167782
        %v722 = vsel %vm714, %v705, %v721
        %v723 = vsel %vm713, %v720, %v722
        %v724 = vsel %vm712, %v702, %v705
        %v725 = vsel %vm715, %v711, 1326507024
        %v726 = vsel %vm714, %v708, %v725
        %v727 = vsel %vm713, %v724, %v726
        %v728 = vshll.u32 %v688, 8
        %v729 = vmul.u32.u64.compose %v728, %v727
        %v730 = vextract.low.u32 %v729
        %v731 = vextract.high.u32 %v729
        %v732 = vmul.u32.u64.compose %v728, %v723
        %v733 = vextract.low.u32 %v732
        %v734 = vextract.high.u32 %v732
        %v735 = vmul.u32 %v728, %v719
        %v736 = vadd.s32 %v731, %v733
        %vm737 = vc.u32 %v731, %v733
        %v738 = vadd.s32 %v734, 1
        %v739 = vsel %vm737, %v738, %v734
        %v740 = vadd.s32 %v735, %v739
        %v741 = vadd.s32 %v740, 536870912
        %v742 = vshrl.u32 %v741, 30
        %v743 = vshll.u32 %v742, 30
        %v744 = vsub.s32 %v740, %v743
        %vm745 = vcmp.lt.s32.totalorder %v744, 0
        %v746 = vsub.s32 0, %v744
        %v747 = vsel %vm745, %v746, %v744
        %v748 = vclz %v747
        %v749 = vsub.s32 %v748, 2
        %vm750 = vcmp.gt.s32.totalorder 0, %v749
        %v751 = vsel %vm750, 0, %v749
        %v752 = vsub.s32 32, %v751
        %v753 = vshll.u32 %v744, %v751
        %v754 = vshrl.u32 %v736, %v752
        %v755 = vor.u32 %v753, %v754
        %v756 = vsub.s32 4294967266, %v751
        %v757 = vadd.s32 %v756, 127
        %v758 = vshll.u32 %v757, 23
        %v759 = vor.u32 4788187, %v758
        %v760 = vand.u32 2147483647, %v759
        %v762 = vcvt.s32.f32 %v755
        %v763 = vmul.f32 %v762, %v760
        %v764 = vxor.u32 %v763, 2147483648
        %v765 = vsel %vm682, %v764, %v763
        %v766 = vsub.s32 4, %v742
        %v767 = vsel %vm682, %v766, %v742
        %v768 = vsel %vm681, %v252, %v765
        %v769 = vsel %vm681, 0, %v767
        %v770 = vcosq.f32.pop %v768
        %v771 = vsinq.f32.pop %v768
        %vm772 = vweird.f32 %v252
        %v773 = vadd.s32 %v769, 3
        %v774 = vand.u32 %v773, 3
        %vm775 = vcmp.lt.s32.totalorder %v774, 2
        %vm776 = vcmp.eq.s32.totalorder %v774, 0
        %v777 = vxor.u32 %v771, 2147483648
        %v778 = vsel %vm776, %v770, %v777
        %vm779 = vcmp.eq.s32.totalorder %v774, 2
        %v780 = vxor.u32 %v770, 2147483648
        %v781 = vsel %vm779, %v780, %v771
        %v782 = vsel %vm775, %v778, %v781
        %v783 = vsel %vm772, nan, %v782
        %v784 = vand.u32 2147483647, %v253
        %vm785 = vcmp.le.f32.partialorder %v784, 0.7853982
        %vm786 = vcmp.lt.s32.totalorder %v253, 0
        %v787 = vand.u32 %v253, 2139095040
        %v788 = vshrl.u32 %v787, 23
        %v789 = vsub.s32 %v788, 127
        %v790 = vand.u32 2147483647, %v253
        %v791 = vand.u32 %v790, 8388607
        %v792 = vor.u32 %v791, 8388608
        %v793 = vsub.s32 0, %v792
        %v794 = vadd.s32 %v789, 1
        %vm795 = vcmp.gt.s32.totalorder %v794, 0
        %v796 = vsel %vm795, %v794, 0
        %v797 = vshrl.u32 %v796, 5
        %v798 = vand.u32 %v796, 31
        %v799 = vsub.s32 32, %v798
        %v800 = vshrl.u32 683565275, %v799
        %v801 = vshll.u32 683565275, %v798
        %v802 = vshrl.u32 2475754826, %v799
        %v803 = vor.u32 %v801, %v802
        %v804 = vshll.u32 2475754826, %v798
        %v805 = vshrl.u32 2131351028, %v799
        %v806 = vor.u32 %v804, %v805
        %v807 = vshll.u32 2131351028, %v798
        %v808 = vshrl.u32 2102212464, %v799
        %v809 = vor.u32 %v807, %v808
        %v810 = vshll.u32 2102212464, %v798
        %v811 = vshrl.u32 920167782, %v799
        %v812 = vor.u32 %v810, %v811
        %v813 = vshll.u32 920167782, %v798
        %v814 = vshrl.u32 1326507024, %v799
        %v815 = vor.u32 %v813, %v814
        %vm816 = vcmp.lt.s32.totalorder %v797, 1
        %vm817 = vcmp.lt.s32.totalorder %v797, 2
        %vm818 = vcmp.lt.s32.totalorder %v797, 3
        %vm819 = vcmp.lt.s32.totalorder %v797, 4
        %v820 = vsel %vm816, %v800, %v803
        %v821 = vsel %vm819, %v809, 2102212464
        %v822 = vsel %vm818, %v806, %v821
        %v823 = vsel %vm817, %v820, %v822
        %v824 = vsel %vm816, %v803, %v806
        %v825 = vsel %vm819, %v812, 920167782
        %v826 = vsel %vm818, %v809, %v825
        %v827 = vsel %vm817, %v824, %v826
        %v828 = vsel %vm816, %v806, %v809
        %v829 = vsel %vm819, %v815, 1326507024
        %v830 = vsel %vm818, %v812, %v829
        %v831 = vsel %vm817, %v828, %v830
        %v832 = vshll.u32 %v792, 8
        %v833 = vmul.u32.u64.compose %v832, %v831
        %v834 = vextract.low.u32 %v833
        %v835 = vextract.high.u32 %v833
        %v836 = vmul.u32.u64.compose %v832, %v827
        %v837 = vextract.low.u32 %v836
        %v838 = vextract.high.u32 %v836
        %v839 = vmul.u32 %v832, %v823
        %v840 = vadd.s32 %v835, %v837
        %vm841 = vc.u32 %v835, %v837
        %v842 = vadd.s32 %v838, 1
        %v843 = vsel %vm841, %v842, %v838
        %v844 = vadd.s32 %v839, %v843
        %v845 = vadd.s32 %v844, 536870912
        %v846 = vshrl.u32 %v845, 30
        %v847 = vshll.u32 %v846, 30
        %v848 = vsub.s32 %v844, %v847
        %vm849 = vcmp.lt.s32.totalorder %v848, 0
        %v850 = vsub.s32 0, %v848
        %v851 = vsel %vm849, %v850, %v848
        %v852 = vclz %v851
        %v853 = vsub.s32 %v852, 2
        %vm854 = vcmp.gt.s32.totalorder 0, %v853
        %v855 = vsel %vm854, 0, %v853
        %v856 = vsub.s32 32, %v855
        %v857 = vshll.u32 %v848, %v855
        %v858 = vshrl.u32 %v840, %v856
        %v859 = vor.u32 %v857, %v858
        %v860 = vsub.s32 4294967266, %v855
        %v861 = vadd.s32 %v860, 127
        %v862 = vshll.u32 %v861, 23
        %v863 = vor.u32 4788187, %v862
        %v864 = vand.u32 2147483647, %v863
        %v866 = vcvt.s32.f32 %v859
        %v867 = vmul.f32 %v866, %v864
        %v868 = vxor.u32 %v867, 2147483648
        %v869 = vsel %vm786, %v868, %v867
        %v870 = vsub.s32 4, %v846
        %v871 = vsel %vm786, %v870, %v846
        %v872 = vsel %vm785, %v253, %v869
        %v873 = vsel %vm785, 0, %v871
        %v874 = vcosq.f32.pop %v872
        %v875 = vsinq.f32.pop %v872
        %vm876 = vweird.f32 %v253
        %v877 = vadd.s32 %v873, 3
        %v878 = vand.u32 %v877, 3
        %vm879 = vcmp.lt.s32.totalorder %v878, 2
        %vm880 = vcmp.eq.s32.totalorder %v878, 0
        %v881 = vxor.u32 %v875, 2147483648
        %v882 = vsel %vm880, %v874, %v881
        %vm883 = vcmp.eq.s32.totalorder %v878, 2
        %v884 = vxor.u32 %v874, 2147483648
        %v885 = vsel %vm883, %v884, %v875
        %v886 = vsel %vm879, %v882, %v885
        %v887 = vsel %vm876, nan, %v886
        %v888 = vand.u32 2147483647, %v254
        %vm889 = vcmp.le.f32.partialorder %v888, 0.7853982
        %vm890 = vcmp.lt.s32.totalorder %v254, 0
        %v891 = vand.u32 %v254, 2139095040
        %v892 = vshrl.u32 %v891, 23
        %v893 = vsub.s32 %v892, 127
        %v894 = vand.u32 2147483647, %v254
        %v895 = vand.u32 %v894, 8388607
        %v896 = vor.u32 %v895, 8388608
        %v897 = vsub.s32 0, %v896
        %v898 = vadd.s32 %v893, 1
        %vm899 = vcmp.gt.s32.totalorder %v898, 0
        %v900 = vsel %vm899, %v898, 0
        %v901 = vshrl.u32 %v900, 5
        %v902 = vand.u32 %v900, 31
        %v903 = vsub.s32 32, %v902
        %v904 = vshrl.u32 683565275, %v903
        %v905 = vshll.u32 683565275, %v902
        %v906 = vshrl.u32 2475754826, %v903
        %v907 = vor.u32 %v905, %v906
        %v908 = vshll.u32 2475754826, %v902
        %v909 = vshrl.u32 2131351028, %v903
        %v910 = vor.u32 %v908, %v909
        %v911 = vshll.u32 2131351028, %v902
        %v912 = vshrl.u32 2102212464, %v903
        %v913 = vor.u32 %v911, %v912
        %v914 = vshll.u32 2102212464, %v902
        %v915 = vshrl.u32 920167782, %v903
        %v916 = vor.u32 %v914, %v915
        %v917 = vshll.u32 920167782, %v902
        %v918 = vshrl.u32 1326507024, %v903
        %v919 = vor.u32 %v917, %v918
        %vm920 = vcmp.lt.s32.totalorder %v901, 1
        %vm921 = vcmp.lt.s32.totalorder %v901, 2
        %vm922 = vcmp.lt.s32.totalorder %v901, 3
        %vm923 = vcmp.lt.s32.totalorder %v901, 4
        %v924 = vsel %vm920, %v904, %v907
        %v925 = vsel %vm923, %v913, 2102212464
        %v926 = vsel %vm922, %v910, %v925
        %v927 = vsel %vm921, %v924, %v926
        %v928 = vsel %vm920, %v907, %v910
        %v929 = vsel %vm923, %v916, 920167782
        %v930 = vsel %vm922, %v913, %v929
        %v931 = vsel %vm921, %v928, %v930
        %v932 = vsel %vm920, %v910, %v913
        %v933 = vsel %vm923, %v919, 1326507024
        %v934 = vsel %vm922, %v916, %v933
        %v935 = vsel %vm921, %v932, %v934
        %v936 = vshll.u32 %v896, 8
        %v937 = vmul.u32.u64.compose %v936, %v935
        %v938 = vextract.low.u32 %v937
        %v939 = vextract.high.u32 %v937
        %v940 = vmul.u32.u64.compose %v936, %v931
        %v941 = vextract.low.u32 %v940
        %v942 = vextract.high.u32 %v940
        %v943 = vmul.u32 %v936, %v927
        %v944 = vadd.s32 %v939, %v941
        %vm945 = vc.u32 %v939, %v941
        %v946 = vadd.s32 %v942, 1
        %v947 = vsel %vm945, %v946, %v942
        %v948 = vadd.s32 %v943, %v947
        %v949 = vadd.s32 %v948, 536870912
        %v950 = vshrl.u32 %v949, 30
        %v951 = vshll.u32 %v950, 30
        %v952 = vsub.s32 %v948, %v951
        %vm953 = vcmp.lt.s32.totalorder %v952, 0
        %v954 = vsub.s32 0, %v952
        %v955 = vsel %vm953, %v954, %v952
        %v956 = vclz %v955
        %v957 = vsub.s32 %v956, 2
        %vm958 = vcmp.gt.s32.totalorder 0, %v957
        %v959 = vsel %vm958, 0, %v957
        %v960 = vsub.s32 32, %v959
        %v961 = vshll.u32 %v952, %v959
        %v962 = vshrl.u32 %v944, %v960
        %v963 = vor.u32 %v961, %v962
        %v964 = vsub.s32 4294967266, %v959
        %v965 = vadd.s32 %v964, 127
        %v966 = vshll.u32 %v965, 23
        %v967 = vor.u32 4788187, %v966
        %v968 = vand.u32 2147483647, %v967
        %v970 = vcvt.s32.f32 %v963
        %v971 = vmul.f32 %v970, %v968
        %v972 = vxor.u32 %v971, 2147483648
        %v973 = vsel %vm890, %v972, %v971
        %v974 = vsub.s32 4, %v950
        %v975 = vsel %vm890, %v974, %v950
        %v976 = vsel %vm889, %v254, %v973
        %v977 = vsel %vm889, 0, %v975
        %v978 = vcosq.f32.pop %v976
        %v979 = vsinq.f32.pop %v976
        %vm980 = vweird.f32 %v254
        %v981 = vadd.s32 %v977, 3
        %v982 = vand.u32 %v981, 3
        %vm983 = vcmp.lt.s32.totalorder %v982, 2
        %vm984 = vcmp.eq.s32.totalorder %v982, 0
        %v985 = vxor.u32 %v979, 2147483648
        %v986 = vsel %vm984, %v978, %v985
        %vm987 = vcmp.eq.s32.totalorder %v982, 2
        %v988 = vxor.u32 %v978, 2147483648
        %v989 = vsel %vm987, %v988, %v979
        %v990 = vsel %vm983, %v986, %v989
        %v991 = vsel %vm980, nan, %v990
        %v992 = vand.u32 2147483647, %v255
        %vm993 = vcmp.le.f32.partialorder %v992, 0.7853982
        %vm994 = vcmp.lt.s32.totalorder %v255, 0
        %v995 = vand.u32 %v255, 2139095040
        %v996 = vshrl.u32 %v995, 23
        %v997 = vsub.s32 %v996, 127
        %v998 = vand.u32 2147483647, %v255
        %v999 = vand.u32 %v998, 8388607
        %v1000 = vor.u32 %v999, 8388608
        %v1001 = vsub.s32 0, %v1000
        %v1002 = vadd.s32 %v997, 1
        %vm1003 = vcmp.gt.s32.totalorder %v1002, 0
        %v1004 = vsel %vm1003, %v1002, 0
        %v1005 = vshrl.u32 %v1004, 5
        %v1006 = vand.u32 %v1004, 31
        %v1007 = vsub.s32 32, %v1006
        %v1008 = vshrl.u32 683565275, %v1007
        %v1009 = vshll.u32 683565275, %v1006
        %v1010 = vshrl.u32 2475754826, %v1007
        %v1011 = vor.u32 %v1009, %v1010
        %v1012 = vshll.u32 2475754826, %v1006
        %v1013 = vshrl.u32 2131351028, %v1007
        %v1014 = vor.u32 %v1012, %v1013
        %v1015 = vshll.u32 2131351028, %v1006
        %v1016 = vshrl.u32 2102212464, %v1007
        %v1017 = vor.u32 %v1015, %v1016
        %v1018 = vshll.u32 2102212464, %v1006
        %v1019 = vshrl.u32 920167782, %v1007
        %v1020 = vor.u32 %v1018, %v1019
        %v1021 = vshll.u32 920167782, %v1006
        %v1022 = vshrl.u32 1326507024, %v1007
        %v1023 = vor.u32 %v1021, %v1022
        %vm1024 = vcmp.lt.s32.totalorder %v1005, 1
        %vm1025 = vcmp.lt.s32.totalorder %v1005, 2
        %vm1026 = vcmp.lt.s32.totalorder %v1005, 3
        %vm1027 = vcmp.lt.s32.totalorder %v1005, 4
        %v1028 = vsel %vm1024, %v1008, %v1011
        %v1029 = vsel %vm1027, %v1017, 2102212464
        %v1030 = vsel %vm1026, %v1014, %v1029
        %v1031 = vsel %vm1025, %v1028, %v1030
        %v1032 = vsel %vm1024, %v1011, %v1014
        %v1033 = vsel %vm1027, %v1020, 920167782
        %v1034 = vsel %vm1026, %v1017, %v1033
        %v1035 = vsel %vm1025, %v1032, %v1034
        %v1036 = vsel %vm1024, %v1014, %v1017
        %v1037 = vsel %vm1027, %v1023, 1326507024
        %v1038 = vsel %vm1026, %v1020, %v1037
        %v1039 = vsel %vm1025, %v1036, %v1038
        %v1040 = vshll.u32 %v1000, 8
        %v1041 = vmul.u32.u64.compose %v1040, %v1039
        %v1042 = vextract.low.u32 %v1041
        %v1043 = vextract.high.u32 %v1041
        %v1044 = vmul.u32.u64.compose %v1040, %v1035
        %v1045 = vextract.low.u32 %v1044
        %v1046 = vextract.high.u32 %v1044
        %v1047 = vmul.u32 %v1040, %v1031
        %v1048 = vadd.s32 %v1043, %v1045
        %vm1049 = vc.u32 %v1043, %v1045
        %v1050 = vadd.s32 %v1046, 1
        %v1051 = vsel %vm1049, %v1050, %v1046
        %v1052 = vadd.s32 %v1047, %v1051
        %v1053 = vadd.s32 %v1052, 536870912
        %v1054 = vshrl.u32 %v1053, 30
        %v1055 = vshll.u32 %v1054, 30
        %v1056 = vsub.s32 %v1052, %v1055
        %vm1057 = vcmp.lt.s32.totalorder %v1056, 0
        %v1058 = vsub.s32 0, %v1056
        %v1059 = vsel %vm1057, %v1058, %v1056
        %v1060 = vclz %v1059
        %v1061 = vsub.s32 %v1060, 2
        %vm1062 = vcmp.gt.s32.totalorder 0, %v1061
        %v1063 = vsel %vm1062, 0, %v1061
        %v1064 = vsub.s32 32, %v1063
        %v1065 = vshll.u32 %v1056, %v1063
        %v1066 = vshrl.u32 %v1048, %v1064
        %v1067 = vor.u32 %v1065, %v1066
        %v1068 = vsub.s32 4294967266, %v1063
        %v1069 = vadd.s32 %v1068, 127
        %v1070 = vshll.u32 %v1069, 23
        %v1071 = vor.u32 4788187, %v1070
        %v1072 = vand.u32 2147483647, %v1071
        %v1074 = vcvt.s32.f32 %v1067
        %v1075 = vmul.f32 %v1074, %v1072
        %v1076 = vxor.u32 %v1075, 2147483648
        %v1077 = vsel %vm994, %v1076, %v1075
        %v1078 = vsub.s32 4, %v1054
        %v1079 = vsel %vm994, %v1078, %v1054
        %v1080 = vsel %vm993, %v255, %v1077
        %v1081 = vsel %vm993, 0, %v1079
        %v1082 = vcosq.f32.pop %v1080
        %v1083 = vsinq.f32.pop %v1080
        %vm1084 = vweird.f32 %v255
        %v1085 = vadd.s32 %v1081, 3
        %v1086 = vand.u32 %v1085, 3
        %vm1087 = vcmp.lt.s32.totalorder %v1086, 2
        %vm1088 = vcmp.eq.s32.totalorder %v1086, 0
        %v1089 = vxor.u32 %v1083, 2147483648
        %v1090 = vsel %vm1088, %v1082, %v1089
        %vm1091 = vcmp.eq.s32.totalorder %v1086, 2
        %v1092 = vxor.u32 %v1082, 2147483648
        %v1093 = vsel %vm1091, %v1092, %v1083
        %v1094 = vsel %vm1087, %v1090, %v1093
        %v1095 = vsel %vm1084, nan, %v1094
        %v1096 = vand.u32 2147483647, %v256
        %vm1097 = vcmp.le.f32.partialorder %v1096, 0.7853982
        %vm1098 = vcmp.lt.s32.totalorder %v256, 0
        %v1099 = vand.u32 %v256, 2139095040
        %v1100 = vshrl.u32 %v1099, 23
        %v1101 = vsub.s32 %v1100, 127
        %v1102 = vand.u32 2147483647, %v256
        %v1103 = vand.u32 %v1102, 8388607
        %v1104 = vor.u32 %v1103, 8388608
        %v1105 = vsub.s32 0, %v1104
        %v1106 = vadd.s32 %v1101, 1
        %vm1107 = vcmp.gt.s32.totalorder %v1106, 0
        %v1108 = vsel %vm1107, %v1106, 0
        %v1109 = vshrl.u32 %v1108, 5
        %v1110 = vand.u32 %v1108, 31
        %v1111 = vsub.s32 32, %v1110
        %v1112 = vshrl.u32 683565275, %v1111
        %v1113 = vshll.u32 683565275, %v1110
        %v1114 = vshrl.u32 2475754826, %v1111
        %v1115 = vor.u32 %v1113, %v1114
        %v1116 = vshll.u32 2475754826, %v1110
        %v1117 = vshrl.u32 2131351028, %v1111
        %v1118 = vor.u32 %v1116, %v1117
        %v1119 = vshll.u32 2131351028, %v1110
        %v1120 = vshrl.u32 2102212464, %v1111
        %v1121 = vor.u32 %v1119, %v1120
        %v1122 = vshll.u32 2102212464, %v1110
        %v1123 = vshrl.u32 920167782, %v1111
        %v1124 = vor.u32 %v1122, %v1123
        %v1125 = vshll.u32 920167782, %v1110
        %v1126 = vshrl.u32 1326507024, %v1111
        %v1127 = vor.u32 %v1125, %v1126
        %vm1128 = vcmp.lt.s32.totalorder %v1109, 1
        %vm1129 = vcmp.lt.s32.totalorder %v1109, 2
        %vm1130 = vcmp.lt.s32.totalorder %v1109, 3
        %vm1131 = vcmp.lt.s32.totalorder %v1109, 4
        %v1132 = vsel %vm1128, %v1112, %v1115
        %v1133 = vsel %vm1131, %v1121, 2102212464
        %v1134 = vsel %vm1130, %v1118, %v1133
        %v1135 = vsel %vm1129, %v1132, %v1134
        %v1136 = vsel %vm1128, %v1115, %v1118
        %v1137 = vsel %vm1131, %v1124, 920167782
        %v1138 = vsel %vm1130, %v1121, %v1137
        %v1139 = vsel %vm1129, %v1136, %v1138
        %v1140 = vsel %vm1128, %v1118, %v1121
        %v1141 = vsel %vm1131, %v1127, 1326507024
        %v1142 = vsel %vm1130, %v1124, %v1141
        %v1143 = vsel %vm1129, %v1140, %v1142
        %v1144 = vshll.u32 %v1104, 8
        %v1145 = vmul.u32.u64.compose %v1144, %v1143
        %v1146 = vextract.low.u32 %v1145
        %v1147 = vextract.high.u32 %v1145
        %v1148 = vmul.u32.u64.compose %v1144, %v1139
        %v1149 = vextract.low.u32 %v1148
        %v1150 = vextract.high.u32 %v1148
        %v1151 = vmul.u32 %v1144, %v1135
        %v1152 = vadd.s32 %v1147, %v1149
        %vm1153 = vc.u32 %v1147, %v1149
        %v1154 = vadd.s32 %v1150, 1
        %v1155 = vsel %vm1153, %v1154, %v1150
        %v1156 = vadd.s32 %v1151, %v1155
        %v1157 = vadd.s32 %v1156, 536870912
        %v1158 = vshrl.u32 %v1157, 30
        %v1159 = vshll.u32 %v1158, 30
        %v1160 = vsub.s32 %v1156, %v1159
        %vm1161 = vcmp.lt.s32.totalorder %v1160, 0
        %v1162 = vsub.s32 0, %v1160
        %v1163 = vsel %vm1161, %v1162, %v1160
        %v1164 = vclz %v1163
        %v1165 = vsub.s32 %v1164, 2
        %vm1166 = vcmp.gt.s32.totalorder 0, %v1165
        %v1167 = vsel %vm1166, 0, %v1165
        %v1168 = vsub.s32 32, %v1167
        %v1169 = vshll.u32 %v1160, %v1167
        %v1170 = vshrl.u32 %v1152, %v1168
        %v1171 = vor.u32 %v1169, %v1170
        %v1172 = vsub.s32 4294967266, %v1167
        %v1173 = vadd.s32 %v1172, 127
        %v1174 = vshll.u32 %v1173, 23
        %v1175 = vor.u32 4788187, %v1174
        %v1176 = vand.u32 2147483647, %v1175
        %v1178 = vcvt.s32.f32 %v1171
        %v1179 = vmul.f32 %v1178, %v1176
        %v1180 = vxor.u32 %v1179, 2147483648
        %v1181 = vsel %vm1098, %v1180, %v1179
        %v1182 = vsub.s32 4, %v1158
        %v1183 = vsel %vm1098, %v1182, %v1158
        %v1184 = vsel %vm1097, %v256, %v1181
        %v1185 = vsel %vm1097, 0, %v1183
        %v1186 = vcosq.f32.pop %v1184
        %v1187 = vsinq.f32.pop %v1184
        %vm1188 = vweird.f32 %v256
        %v1189 = vadd.s32 %v1185, 3
        %v1190 = vand.u32 %v1189, 3
        %vm1191 = vcmp.lt.s32.totalorder %v1190, 2
        %vm1192 = vcmp.eq.s32.totalorder %v1190, 0
        %v1193 = vxor.u32 %v1187, 2147483648
        %v1194 = vsel %vm1192, %v1186, %v1193
        %vm1195 = vcmp.eq.s32.totalorder %v1190, 2
        %v1196 = vxor.u32 %v1186, 2147483648
        %v1197 = vsel %vm1195, %v1196, %v1187
        %v1198 = vsel %vm1191, %v1194, %v1197
        %v1199 = vsel %vm1188, nan, %v1198
        %v1200 = vand.u32 2147483647, %v257
        %vm1201 = vcmp.le.f32.partialorder %v1200, 0.7853982
        %vm1202 = vcmp.lt.s32.totalorder %v257, 0
        %v1203 = vand.u32 %v257, 2139095040
        %v1204 = vshrl.u32 %v1203, 23
        %v1205 = vsub.s32 %v1204, 127
        %v1206 = vand.u32 2147483647, %v257
        %v1207 = vand.u32 %v1206, 8388607
        %v1208 = vor.u32 %v1207, 8388608
        %v1209 = vsub.s32 0, %v1208
        %v1210 = vadd.s32 %v1205, 1
        %vm1211 = vcmp.gt.s32.totalorder %v1210, 0
        %v1212 = vsel %vm1211, %v1210, 0
        %v1213 = vshrl.u32 %v1212, 5
        %v1214 = vand.u32 %v1212, 31
        %v1215 = vsub.s32 32, %v1214
        %v1216 = vshrl.u32 683565275, %v1215
        %v1217 = vshll.u32 683565275, %v1214
        %v1218 = vshrl.u32 2475754826, %v1215
        %v1219 = vor.u32 %v1217, %v1218
        %v1220 = vshll.u32 2475754826, %v1214
        %v1221 = vshrl.u32 2131351028, %v1215
        %v1222 = vor.u32 %v1220, %v1221
        %v1223 = vshll.u32 2131351028, %v1214
        %v1224 = vshrl.u32 2102212464, %v1215
        %v1225 = vor.u32 %v1223, %v1224
        %v1226 = vshll.u32 2102212464, %v1214
        %v1227 = vshrl.u32 920167782, %v1215
        %v1228 = vor.u32 %v1226, %v1227
        %v1229 = vshll.u32 920167782, %v1214
        %v1230 = vshrl.u32 1326507024, %v1215
        %v1231 = vor.u32 %v1229, %v1230
        %vm1232 = vcmp.lt.s32.totalorder %v1213, 1
        %vm1233 = vcmp.lt.s32.totalorder %v1213, 2
        %vm1234 = vcmp.lt.s32.totalorder %v1213, 3
        %vm1235 = vcmp.lt.s32.totalorder %v1213, 4
        %v1236 = vsel %vm1232, %v1216, %v1219
        %v1237 = vsel %vm1235, %v1225, 2102212464
        %v1238 = vsel %vm1234, %v1222, %v1237
        %v1239 = vsel %vm1233, %v1236, %v1238
        %v1240 = vsel %vm1232, %v1219, %v1222
        %v1241 = vsel %vm1235, %v1228, 920167782
        %v1242 = vsel %vm1234, %v1225, %v1241
        %v1243 = vsel %vm1233, %v1240, %v1242
        %v1244 = vsel %vm1232, %v1222, %v1225
        %v1245 = vsel %vm1235, %v1231, 1326507024
        %v1246 = vsel %vm1234, %v1228, %v1245
        %v1247 = vsel %vm1233, %v1244, %v1246
        %v1248 = vshll.u32 %v1208, 8
        %v1249 = vmul.u32.u64.compose %v1248, %v1247
        %v1250 = vextract.low.u32 %v1249
        %v1251 = vextract.high.u32 %v1249
        %v1252 = vmul.u32.u64.compose %v1248, %v1243
        %v1253 = vextract.low.u32 %v1252
        %v1254 = vextract.high.u32 %v1252
        %v1255 = vmul.u32 %v1248, %v1239
        %v1256 = vadd.s32 %v1251, %v1253
        %vm1257 = vc.u32 %v1251, %v1253
        %v1258 = vadd.s32 %v1254, 1
        %v1259 = vsel %vm1257, %v1258, %v1254
        %v1260 = vadd.s32 %v1255, %v1259
        %v1261 = vadd.s32 %v1260, 536870912
        %v1262 = vshrl.u32 %v1261, 30
        %v1263 = vshll.u32 %v1262, 30
        %v1264 = vsub.s32 %v1260, %v1263
        %vm1265 = vcmp.lt.s32.totalorder %v1264, 0
        %v1266 = vsub.s32 0, %v1264
        %v1267 = vsel %vm1265, %v1266, %v1264
        %v1268 = vclz %v1267
        %v1269 = vsub.s32 %v1268, 2
        %vm1270 = vcmp.gt.s32.totalorder 0, %v1269
        %v1271 = vsel %vm1270, 0, %v1269
        %v1272 = vsub.s32 32, %v1271
        %v1273 = vshll.u32 %v1264, %v1271
        %v1274 = vshrl.u32 %v1256, %v1272
        %v1275 = vor.u32 %v1273, %v1274
        %v1276 = vsub.s32 4294967266, %v1271
        %v1277 = vadd.s32 %v1276, 127
        %v1278 = vshll.u32 %v1277, 23
        %v1279 = vor.u32 4788187, %v1278
        %v1280 = vand.u32 2147483647, %v1279
        %v1282 = vcvt.s32.f32 %v1275
        %v1283 = vmul.f32 %v1282, %v1280
        %v1284 = vxor.u32 %v1283, 2147483648
        %v1285 = vsel %vm1202, %v1284, %v1283
        %v1286 = vsub.s32 4, %v1262
        %v1287 = vsel %vm1202, %v1286, %v1262
        %v1288 = vsel %vm1201, %v257, %v1285
        %v1289 = vsel %vm1201, 0, %v1287
        %v1290 = vcosq.f32.pop %v1288
        %v1291 = vsinq.f32.pop %v1288
        %vm1292 = vweird.f32 %v257
        %v1293 = vadd.s32 %v1289, 3
        %v1294 = vand.u32 %v1293, 3
        %vm1295 = vcmp.lt.s32.totalorder %v1294, 2
        %vm1296 = vcmp.eq.s32.totalorder %v1294, 0
        %v1297 = vxor.u32 %v1291, 2147483648
        %v1298 = vsel %vm1296, %v1290, %v1297
        %vm1299 = vcmp.eq.s32.totalorder %v1294, 2
        %v1300 = vxor.u32 %v1290, 2147483648
        %v1301 = vsel %vm1299, %v1300, %v1291
        %v1302 = vsel %vm1295, %v1298, %v1301
        %v1303 = vsel %vm1292, nan, %v1302
        %v1304 = vand.u32 2147483647, %v258
        %vm1305 = vcmp.le.f32.partialorder %v1304, 0.7853982
        %vm1306 = vcmp.lt.s32.totalorder %v258, 0
        %v1307 = vand.u32 %v258, 2139095040
        %v1308 = vshrl.u32 %v1307, 23
        %v1309 = vsub.s32 %v1308, 127
        %v1310 = vand.u32 2147483647, %v258
        %v1311 = vand.u32 %v1310, 8388607
        %v1312 = vor.u32 %v1311, 8388608
        %v1313 = vsub.s32 0, %v1312
        %v1314 = vadd.s32 %v1309, 1
        %vm1315 = vcmp.gt.s32.totalorder %v1314, 0
        %v1316 = vsel %vm1315, %v1314, 0
        %v1317 = vshrl.u32 %v1316, 5
        %v1318 = vand.u32 %v1316, 31
        %v1319 = vsub.s32 32, %v1318
        %v1320 = vshrl.u32 683565275, %v1319
        %v1321 = vshll.u32 683565275, %v1318
        %v1322 = vshrl.u32 2475754826, %v1319
        %v1323 = vor.u32 %v1321, %v1322
        %v1324 = vshll.u32 2475754826, %v1318
        %v1325 = vshrl.u32 2131351028, %v1319
        %v1326 = vor.u32 %v1324, %v1325
        %v1327 = vshll.u32 2131351028, %v1318
        %v1328 = vshrl.u32 2102212464, %v1319
        %v1329 = vor.u32 %v1327, %v1328
        %v1330 = vshll.u32 2102212464, %v1318
        %v1331 = vshrl.u32 920167782, %v1319
        %v1332 = vor.u32 %v1330, %v1331
        %v1333 = vshll.u32 920167782, %v1318
        %v1334 = vshrl.u32 1326507024, %v1319
        %v1335 = vor.u32 %v1333, %v1334
        %vm1336 = vcmp.lt.s32.totalorder %v1317, 1
        %vm1337 = vcmp.lt.s32.totalorder %v1317, 2
        %vm1338 = vcmp.lt.s32.totalorder %v1317, 3
        %vm1339 = vcmp.lt.s32.totalorder %v1317, 4
        %v1340 = vsel %vm1336, %v1320, %v1323
        %v1341 = vsel %vm1339, %v1329, 2102212464
        %v1342 = vsel %vm1338, %v1326, %v1341
        %v1343 = vsel %vm1337, %v1340, %v1342
        %v1344 = vsel %vm1336, %v1323, %v1326
        %v1345 = vsel %vm1339, %v1332, 920167782
        %v1346 = vsel %vm1338, %v1329, %v1345
        %v1347 = vsel %vm1337, %v1344, %v1346
        %v1348 = vsel %vm1336, %v1326, %v1329
        %v1349 = vsel %vm1339, %v1335, 1326507024
        %v1350 = vsel %vm1338, %v1332, %v1349
        %v1351 = vsel %vm1337, %v1348, %v1350
        %v1352 = vshll.u32 %v1312, 8
        %v1353 = vmul.u32.u64.compose %v1352, %v1351
        %v1354 = vextract.low.u32 %v1353
        %v1355 = vextract.high.u32 %v1353
        %v1356 = vmul.u32.u64.compose %v1352, %v1347
        %v1357 = vextract.low.u32 %v1356
        %v1358 = vextract.high.u32 %v1356
        %v1359 = vmul.u32 %v1352, %v1343
        %v1360 = vadd.s32 %v1355, %v1357
        %vm1361 = vc.u32 %v1355, %v1357
        %v1362 = vadd.s32 %v1358, 1
        %v1363 = vsel %vm1361, %v1362, %v1358
        %v1364 = vadd.s32 %v1359, %v1363
        %v1365 = vadd.s32 %v1364, 536870912
        %v1366 = vshrl.u32 %v1365, 30
        %v1367 = vshll.u32 %v1366, 30
        %v1368 = vsub.s32 %v1364, %v1367
        %vm1369 = vcmp.lt.s32.totalorder %v1368, 0
        %v1370 = vsub.s32 0, %v1368
        %v1371 = vsel %vm1369, %v1370, %v1368
        %v1372 = vclz %v1371
        %v1373 = vsub.s32 %v1372, 2
        %vm1374 = vcmp.gt.s32.totalorder 0, %v1373
        %v1375 = vsel %vm1374, 0, %v1373
        %v1376 = vsub.s32 32, %v1375
        %v1377 = vshll.u32 %v1368, %v1375
        %v1378 = vshrl.u32 %v1360, %v1376
        %v1379 = vor.u32 %v1377, %v1378
        %v1380 = vsub.s32 4294967266, %v1375
        %v1381 = vadd.s32 %v1380, 127
        %v1382 = vshll.u32 %v1381, 23
        %v1383 = vor.u32 4788187, %v1382
        %v1384 = vand.u32 2147483647, %v1383
        %v1386 = vcvt.s32.f32 %v1379
        %v1387 = vmul.f32 %v1386, %v1384
        %v1388 = vxor.u32 %v1387, 2147483648
        %v1389 = vsel %vm1306, %v1388, %v1387
        %v1390 = vsub.s32 4, %v1366
        %v1391 = vsel %vm1306, %v1390, %v1366
        %v1392 = vsel %vm1305, %v258, %v1389
        %v1393 = vsel %vm1305, 0, %v1391
        %v1394 = vcosq.f32.pop %v1392
        %v1395 = vsinq.f32.pop %v1392
        %vm1396 = vweird.f32 %v258
        %v1397 = vadd.s32 %v1393, 3
        %v1398 = vand.u32 %v1397, 3
        %vm1399 = vcmp.lt.s32.totalorder %v1398, 2
        %vm1400 = vcmp.eq.s32.totalorder %v1398, 0
        %v1401 = vxor.u32 %v1395, 2147483648
        %v1402 = vsel %vm1400, %v1394, %v1401
        %vm1403 = vcmp.eq.s32.totalorder %v1398, 2
        %v1404 = vxor.u32 %v1394, 2147483648
        %v1405 = vsel %vm1403, %v1404, %v1395
        %v1406 = vsel %vm1399, %v1402, %v1405
        %v1407 = vsel %vm1396, nan, %v1406
        %v1408 = vand.u32 2147483647, %v259
        %vm1409 = vcmp.le.f32.partialorder %v1408, 0.7853982
        %vm1410 = vcmp.lt.s32.totalorder %v259, 0
        %v1411 = vand.u32 %v259, 2139095040
        %v1412 = vshrl.u32 %v1411, 23
        %v1413 = vsub.s32 %v1412, 127
        %v1414 = vand.u32 2147483647, %v259
        %v1415 = vand.u32 %v1414, 8388607
        %v1416 = vor.u32 %v1415, 8388608
        %v1417 = vsub.s32 0, %v1416
        %v1418 = vadd.s32 %v1413, 1
        %vm1419 = vcmp.gt.s32.totalorder %v1418, 0
        %v1420 = vsel %vm1419, %v1418, 0
        %v1421 = vshrl.u32 %v1420, 5
        %v1422 = vand.u32 %v1420, 31
        %v1423 = vsub.s32 32, %v1422
        %v1424 = vshrl.u32 683565275, %v1423
        %v1425 = vshll.u32 683565275, %v1422
        %v1426 = vshrl.u32 2475754826, %v1423
        %v1427 = vor.u32 %v1425, %v1426
        %v1428 = vshll.u32 2475754826, %v1422
        %v1429 = vshrl.u32 2131351028, %v1423
        %v1430 = vor.u32 %v1428, %v1429
        %v1431 = vshll.u32 2131351028, %v1422
        %v1432 = vshrl.u32 2102212464, %v1423
        %v1433 = vor.u32 %v1431, %v1432
        %v1434 = vshll.u32 2102212464, %v1422
        %v1435 = vshrl.u32 920167782, %v1423
        %v1436 = vor.u32 %v1434, %v1435
        %v1437 = vshll.u32 920167782, %v1422
        %v1438 = vshrl.u32 1326507024, %v1423
        %v1439 = vor.u32 %v1437, %v1438
        %vm1440 = vcmp.lt.s32.totalorder %v1421, 1
        %vm1441 = vcmp.lt.s32.totalorder %v1421, 2
        %vm1442 = vcmp.lt.s32.totalorder %v1421, 3
        %vm1443 = vcmp.lt.s32.totalorder %v1421, 4
        %v1444 = vsel %vm1440, %v1424, %v1427
        %v1445 = vsel %vm1443, %v1433, 2102212464
        %v1446 = vsel %vm1442, %v1430, %v1445
        %v1447 = vsel %vm1441, %v1444, %v1446
        %v1448 = vsel %vm1440, %v1427, %v1430
        %v1449 = vsel %vm1443, %v1436, 920167782
        %v1450 = vsel %vm1442, %v1433, %v1449
        %v1451 = vsel %vm1441, %v1448, %v1450
        %v1452 = vsel %vm1440, %v1430, %v1433
        %v1453 = vsel %vm1443, %v1439, 1326507024
        %v1454 = vsel %vm1442, %v1436, %v1453
        %v1455 = vsel %vm1441, %v1452, %v1454
        %v1456 = vshll.u32 %v1416, 8
        %v1457 = vmul.u32.u64.compose %v1456, %v1455
        %v1458 = vextract.low.u32 %v1457
        %v1459 = vextract.high.u32 %v1457
        %v1460 = vmul.u32.u64.compose %v1456, %v1451
        %v1461 = vextract.low.u32 %v1460
        %v1462 = vextract.high.u32 %v1460
        %v1463 = vmul.u32 %v1456, %v1447
        %v1464 = vadd.s32 %v1459, %v1461
        %vm1465 = vc.u32 %v1459, %v1461
        %v1466 = vadd.s32 %v1462, 1
        %v1467 = vsel %vm1465, %v1466, %v1462
        %v1468 = vadd.s32 %v1463, %v1467
        %v1469 = vadd.s32 %v1468, 536870912
        %v1470 = vshrl.u32 %v1469, 30
        %v1471 = vshll.u32 %v1470, 30
        %v1472 = vsub.s32 %v1468, %v1471
        %vm1473 = vcmp.lt.s32.totalorder %v1472, 0
        %v1474 = vsub.s32 0, %v1472
        %v1475 = vsel %vm1473, %v1474, %v1472
        %v1476 = vclz %v1475
        %v1477 = vsub.s32 %v1476, 2
        %vm1478 = vcmp.gt.s32.totalorder 0, %v1477
        %v1479 = vsel %vm1478, 0, %v1477
        %v1480 = vsub.s32 32, %v1479
        %v1481 = vshll.u32 %v1472, %v1479
        %v1482 = vshrl.u32 %v1464, %v1480
        %v1483 = vor.u32 %v1481, %v1482
        %v1484 = vsub.s32 4294967266, %v1479
        %v1485 = vadd.s32 %v1484, 127
        %v1486 = vshll.u32 %v1485, 23
        %v1487 = vor.u32 4788187, %v1486
        %v1488 = vand.u32 2147483647, %v1487
        %v1490 = vcvt.s32.f32 %v1483
        %v1491 = vmul.f32 %v1490, %v1488
        %v1492 = vxor.u32 %v1491, 2147483648
        %v1493 = vsel %vm1410, %v1492, %v1491
        %v1494 = vsub.s32 4, %v1470
        %v1495 = vsel %vm1410, %v1494, %v1470
        %v1496 = vsel %vm1409, %v259, %v1493
        %v1497 = vsel %vm1409, 0, %v1495
        %v1498 = vcosq.f32.pop %v1496
        %v1499 = vsinq.f32.pop %v1496
        %vm1500 = vweird.f32 %v259
        %v1501 = vadd.s32 %v1497, 3
        %v1502 = vand.u32 %v1501, 3
        %vm1503 = vcmp.lt.s32.totalorder %v1502, 2
        %vm1504 = vcmp.eq.s32.totalorder %v1502, 0
        %v1505 = vxor.u32 %v1499, 2147483648
        %v1506 = vsel %vm1504, %v1498, %v1505
        %vm1507 = vcmp.eq.s32.totalorder %v1502, 2
        %v1508 = vxor.u32 %v1498, 2147483648
        %v1509 = vsel %vm1507, %v1508, %v1499
        %v1510 = vsel %vm1503, %v1506, %v1509
        %v1511 = vsel %vm1500, nan, %v1510
        %v1512 = vand.u32 2147483647, %v260
        %vm1513 = vcmp.le.f32.partialorder %v1512, 0.7853982
        %vm1514 = vcmp.lt.s32.totalorder %v260, 0
        %v1515 = vand.u32 %v260, 2139095040
        %v1516 = vshrl.u32 %v1515, 23
        %v1517 = vsub.s32 %v1516, 127
        %v1518 = vand.u32 2147483647, %v260
        %v1519 = vand.u32 %v1518, 8388607
        %v1520 = vor.u32 %v1519, 8388608
        %v1521 = vsub.s32 0, %v1520
        %v1522 = vadd.s32 %v1517, 1
        %vm1523 = vcmp.gt.s32.totalorder %v1522, 0
        %v1524 = vsel %vm1523, %v1522, 0
        %v1525 = vshrl.u32 %v1524, 5
        %v1526 = vand.u32 %v1524, 31
        %v1527 = vsub.s32 32, %v1526
        %v1528 = vshrl.u32 683565275, %v1527
        %v1529 = vshll.u32 683565275, %v1526
        %v1530 = vshrl.u32 2475754826, %v1527
        %v1531 = vor.u32 %v1529, %v1530
        %v1532 = vshll.u32 2475754826, %v1526
        %v1533 = vshrl.u32 2131351028, %v1527
        %v1534 = vor.u32 %v1532, %v1533
        %v1535 = vshll.u32 2131351028, %v1526
        %v1536 = vshrl.u32 2102212464, %v1527
        %v1537 = vor.u32 %v1535, %v1536
        %v1538 = vshll.u32 2102212464, %v1526
        %v1539 = vshrl.u32 920167782, %v1527
        %v1540 = vor.u32 %v1538, %v1539
        %v1541 = vshll.u32 920167782, %v1526
        %v1542 = vshrl.u32 1326507024, %v1527
        %v1543 = vor.u32 %v1541, %v1542
        %vm1544 = vcmp.lt.s32.totalorder %v1525, 1
        %vm1545 = vcmp.lt.s32.totalorder %v1525, 2
        %vm1546 = vcmp.lt.s32.totalorder %v1525, 3
        %vm1547 = vcmp.lt.s32.totalorder %v1525, 4
        %v1548 = vsel %vm1544, %v1528, %v1531
        %v1549 = vsel %vm1547, %v1537, 2102212464
        %v1550 = vsel %vm1546, %v1534, %v1549
        %v1551 = vsel %vm1545, %v1548, %v1550
        %v1552 = vsel %vm1544, %v1531, %v1534
        %v1553 = vsel %vm1547, %v1540, 920167782
        %v1554 = vsel %vm1546, %v1537, %v1553
        %v1555 = vsel %vm1545, %v1552, %v1554
        %v1556 = vsel %vm1544, %v1534, %v1537
        %v1557 = vsel %vm1547, %v1543, 1326507024
        %v1558 = vsel %vm1546, %v1540, %v1557
        %v1559 = vsel %vm1545, %v1556, %v1558
        %v1560 = vshll.u32 %v1520, 8
        %v1561 = vmul.u32.u64.compose %v1560, %v1559
        %v1562 = vextract.low.u32 %v1561
        %v1563 = vextract.high.u32 %v1561
        %v1564 = vmul.u32.u64.compose %v1560, %v1555
        %v1565 = vextract.low.u32 %v1564
        %v1566 = vextract.high.u32 %v1564
        %v1567 = vmul.u32 %v1560, %v1551
        %v1568 = vadd.s32 %v1563, %v1565
        %vm1569 = vc.u32 %v1563, %v1565
        %v1570 = vadd.s32 %v1566, 1
        %v1571 = vsel %vm1569, %v1570, %v1566
        %v1572 = vadd.s32 %v1567, %v1571
        %v1573 = vadd.s32 %v1572, 536870912
        %v1574 = vshrl.u32 %v1573, 30
        %v1575 = vshll.u32 %v1574, 30
        %v1576 = vsub.s32 %v1572, %v1575
        %vm1577 = vcmp.lt.s32.totalorder %v1576, 0
        %v1578 = vsub.s32 0, %v1576
        %v1579 = vsel %vm1577, %v1578, %v1576
        %v1580 = vclz %v1579
        %v1581 = vsub.s32 %v1580, 2
        %vm1582 = vcmp.gt.s32.totalorder 0, %v1581
        %v1583 = vsel %vm1582, 0, %v1581
        %v1584 = vsub.s32 32, %v1583
        %v1585 = vshll.u32 %v1576, %v1583
        %v1586 = vshrl.u32 %v1568, %v1584
        %v1587 = vor.u32 %v1585, %v1586
        %v1588 = vsub.s32 4294967266, %v1583
        %v1589 = vadd.s32 %v1588, 127
        %v1590 = vshll.u32 %v1589, 23
        %v1591 = vor.u32 4788187, %v1590
        %v1592 = vand.u32 2147483647, %v1591
        %v1594 = vcvt.s32.f32 %v1587
        %v1595 = vmul.f32 %v1594, %v1592
        %v1596 = vxor.u32 %v1595, 2147483648
        %v1597 = vsel %vm1514, %v1596, %v1595
        %v1598 = vsub.s32 4, %v1574
        %v1599 = vsel %vm1514, %v1598, %v1574
        %v1600 = vsel %vm1513, %v260, %v1597
        %v1601 = vsel %vm1513, 0, %v1599
        %v1602 = vcosq.f32.pop %v1600
        %v1603 = vsinq.f32.pop %v1600
        %vm1604 = vweird.f32 %v260
        %v1605 = vadd.s32 %v1601, 3
        %v1606 = vand.u32 %v1605, 3
        %vm1607 = vcmp.lt.s32.totalorder %v1606, 2
        %vm1608 = vcmp.eq.s32.totalorder %v1606, 0
        %v1609 = vxor.u32 %v1603, 2147483648
        %v1610 = vsel %vm1608, %v1602, %v1609
        %vm1611 = vcmp.eq.s32.totalorder %v1606, 2
        %v1612 = vxor.u32 %v1602, 2147483648
        %v1613 = vsel %vm1611, %v1612, %v1603
        %v1614 = vsel %vm1607, %v1610, %v1613
        %v1615 = vsel %vm1604, nan, %v1614
        %v1616 = vand.u32 2147483647, %v261
        %vm1617 = vcmp.le.f32.partialorder %v1616, 0.7853982
        %vm1618 = vcmp.lt.s32.totalorder %v261, 0
        %v1619 = vand.u32 %v261, 2139095040
        %v1620 = vshrl.u32 %v1619, 23
        %v1621 = vsub.s32 %v1620, 127
        %v1622 = vand.u32 2147483647, %v261
        %v1623 = vand.u32 %v1622, 8388607
        %v1624 = vor.u32 %v1623, 8388608
        %v1625 = vsub.s32 0, %v1624
        %v1626 = vadd.s32 %v1621, 1
        %vm1627 = vcmp.gt.s32.totalorder %v1626, 0
        %v1628 = vsel %vm1627, %v1626, 0
        %v1629 = vshrl.u32 %v1628, 5
        %v1630 = vand.u32 %v1628, 31
        %v1631 = vsub.s32 32, %v1630
        %v1632 = vshrl.u32 683565275, %v1631
        %v1633 = vshll.u32 683565275, %v1630
        %v1634 = vshrl.u32 2475754826, %v1631
        %v1635 = vor.u32 %v1633, %v1634
        %v1636 = vshll.u32 2475754826, %v1630
        %v1637 = vshrl.u32 2131351028, %v1631
        %v1638 = vor.u32 %v1636, %v1637
        %v1639 = vshll.u32 2131351028, %v1630
        %v1640 = vshrl.u32 2102212464, %v1631
        %v1641 = vor.u32 %v1639, %v1640
        %v1642 = vshll.u32 2102212464, %v1630
        %v1643 = vshrl.u32 920167782, %v1631
        %v1644 = vor.u32 %v1642, %v1643
        %v1645 = vshll.u32 920167782, %v1630
        %v1646 = vshrl.u32 1326507024, %v1631
        %v1647 = vor.u32 %v1645, %v1646
        %vm1648 = vcmp.lt.s32.totalorder %v1629, 1
        %vm1649 = vcmp.lt.s32.totalorder %v1629, 2
        %vm1650 = vcmp.lt.s32.totalorder %v1629, 3
        %vm1651 = vcmp.lt.s32.totalorder %v1629, 4
        %v1652 = vsel %vm1648, %v1632, %v1635
        %v1653 = vsel %vm1651, %v1641, 2102212464
        %v1654 = vsel %vm1650, %v1638, %v1653
        %v1655 = vsel %vm1649, %v1652, %v1654
        %v1656 = vsel %vm1648, %v1635, %v1638
        %v1657 = vsel %vm1651, %v1644, 920167782
        %v1658 = vsel %vm1650, %v1641, %v1657
        %v1659 = vsel %vm1649, %v1656, %v1658
        %v1660 = vsel %vm1648, %v1638, %v1641
        %v1661 = vsel %vm1651, %v1647, 1326507024
        %v1662 = vsel %vm1650, %v1644, %v1661
        %v1663 = vsel %vm1649, %v1660, %v1662
        %v1664 = vshll.u32 %v1624, 8
        %v1665 = vmul.u32.u64.compose %v1664, %v1663
        %v1666 = vextract.low.u32 %v1665
        %v1667 = vextract.high.u32 %v1665
        %v1668 = vmul.u32.u64.compose %v1664, %v1659
        %v1669 = vextract.low.u32 %v1668
        %v1670 = vextract.high.u32 %v1668
        %v1671 = vmul.u32 %v1664, %v1655
        %v1672 = vadd.s32 %v1667, %v1669
        %vm1673 = vc.u32 %v1667, %v1669
        %v1674 = vadd.s32 %v1670, 1
        %v1675 = vsel %vm1673, %v1674, %v1670
        %v1676 = vadd.s32 %v1671, %v1675
        %v1677 = vadd.s32 %v1676, 536870912
        %v1678 = vshrl.u32 %v1677, 30
        %v1679 = vshll.u32 %v1678, 30
        %v1680 = vsub.s32 %v1676, %v1679
        %vm1681 = vcmp.lt.s32.totalorder %v1680, 0
        %v1682 = vsub.s32 0, %v1680
        %v1683 = vsel %vm1681, %v1682, %v1680
        %v1684 = vclz %v1683
        %v1685 = vsub.s32 %v1684, 2
        %vm1686 = vcmp.gt.s32.totalorder 0, %v1685
        %v1687 = vsel %vm1686, 0, %v1685
        %v1688 = vsub.s32 32, %v1687
        %v1689 = vshll.u32 %v1680, %v1687
        %v1690 = vshrl.u32 %v1672, %v1688
        %v1691 = vor.u32 %v1689, %v1690
        %v1692 = vsub.s32 4294967266, %v1687
        %v1693 = vadd.s32 %v1692, 127
        %v1694 = vshll.u32 %v1693, 23
        %v1695 = vor.u32 4788187, %v1694
        %v1696 = vand.u32 2147483647, %v1695
        %v1698 = vcvt.s32.f32 %v1691
        %v1699 = vmul.f32 %v1698, %v1696
        %v1700 = vxor.u32 %v1699, 2147483648
        %v1701 = vsel %vm1618, %v1700, %v1699
        %v1702 = vsub.s32 4, %v1678
        %v1703 = vsel %vm1618, %v1702, %v1678
        %v1704 = vsel %vm1617, %v261, %v1701
        %v1705 = vsel %vm1617, 0, %v1703
        %v1706 = vcosq.f32.pop %v1704
        %v1707 = vsinq.f32.pop %v1704
        %vm1708 = vweird.f32 %v261
        %v1709 = vadd.s32 %v1705, 3
        %v1710 = vand.u32 %v1709, 3
        %vm1711 = vcmp.lt.s32.totalorder %v1710, 2
        %vm1712 = vcmp.eq.s32.totalorder %v1710, 0
        %v1713 = vxor.u32 %v1707, 2147483648
        %v1714 = vsel %vm1712, %v1706, %v1713
        %vm1715 = vcmp.eq.s32.totalorder %v1710, 2
        %v1716 = vxor.u32 %v1706, 2147483648
        %v1717 = vsel %vm1715, %v1716, %v1707
        %v1718 = vsel %vm1711, %v1714, %v1717
        %v1719 = vsel %vm1708, nan, %v1718
        %v1720 = vand.u32 2147483647, %v262
        %vm1721 = vcmp.le.f32.partialorder %v1720, 0.7853982
        %vm1722 = vcmp.lt.s32.totalorder %v262, 0
        %v1723 = vand.u32 %v262, 2139095040
        %v1724 = vshrl.u32 %v1723, 23
        %v1725 = vsub.s32 %v1724, 127
        %v1726 = vand.u32 2147483647, %v262
        %v1727 = vand.u32 %v1726, 8388607
        %v1728 = vor.u32 %v1727, 8388608
        %v1729 = vsub.s32 0, %v1728
        %v1730 = vadd.s32 %v1725, 1
        %vm1731 = vcmp.gt.s32.totalorder %v1730, 0
        %v1732 = vsel %vm1731, %v1730, 0
        %v1733 = vshrl.u32 %v1732, 5
        %v1734 = vand.u32 %v1732, 31
        %v1735 = vsub.s32 32, %v1734
        %v1736 = vshrl.u32 683565275, %v1735
        %v1737 = vshll.u32 683565275, %v1734
        %v1738 = vshrl.u32 2475754826, %v1735
        %v1739 = vor.u32 %v1737, %v1738
        %v1740 = vshll.u32 2475754826, %v1734
        %v1741 = vshrl.u32 2131351028, %v1735
        %v1742 = vor.u32 %v1740, %v1741
        %v1743 = vshll.u32 2131351028, %v1734
        %v1744 = vshrl.u32 2102212464, %v1735
        %v1745 = vor.u32 %v1743, %v1744
        %v1746 = vshll.u32 2102212464, %v1734
        %v1747 = vshrl.u32 920167782, %v1735
        %v1748 = vor.u32 %v1746, %v1747
        %v1749 = vshll.u32 920167782, %v1734
        %v1750 = vshrl.u32 1326507024, %v1735
        %v1751 = vor.u32 %v1749, %v1750
        %vm1752 = vcmp.lt.s32.totalorder %v1733, 1
        %vm1753 = vcmp.lt.s32.totalorder %v1733, 2
        %vm1754 = vcmp.lt.s32.totalorder %v1733, 3
        %vm1755 = vcmp.lt.s32.totalorder %v1733, 4
        %v1756 = vsel %vm1752, %v1736, %v1739
        %v1757 = vsel %vm1755, %v1745, 2102212464
        %v1758 = vsel %vm1754, %v1742, %v1757
        %v1759 = vsel %vm1753, %v1756, %v1758
        %v1760 = vsel %vm1752, %v1739, %v1742
        %v1761 = vsel %vm1755, %v1748, 920167782
        %v1762 = vsel %vm1754, %v1745, %v1761
        %v1763 = vsel %vm1753, %v1760, %v1762
        %v1764 = vsel %vm1752, %v1742, %v1745
        %v1765 = vsel %vm1755, %v1751, 1326507024
        %v1766 = vsel %vm1754, %v1748, %v1765
        %v1767 = vsel %vm1753, %v1764, %v1766
        %v1768 = vshll.u32 %v1728, 8
        %v1769 = vmul.u32.u64.compose %v1768, %v1767
        %v1770 = vextract.low.u32 %v1769
        %v1771 = vextract.high.u32 %v1769
        %v1772 = vmul.u32.u64.compose %v1768, %v1763
        %v1773 = vextract.low.u32 %v1772
        %v1774 = vextract.high.u32 %v1772
        %v1775 = vmul.u32 %v1768, %v1759
        %v1776 = vadd.s32 %v1771, %v1773
        %vm1777 = vc.u32 %v1771, %v1773
        %v1778 = vadd.s32 %v1774, 1
        %v1779 = vsel %vm1777, %v1778, %v1774
        %v1780 = vadd.s32 %v1775, %v1779
        %v1781 = vadd.s32 %v1780, 536870912
        %v1782 = vshrl.u32 %v1781, 30
        %v1783 = vshll.u32 %v1782, 30
        %v1784 = vsub.s32 %v1780, %v1783
        %vm1785 = vcmp.lt.s32.totalorder %v1784, 0
        %v1786 = vsub.s32 0, %v1784
        %v1787 = vsel %vm1785, %v1786, %v1784
        %v1788 = vclz %v1787
        %v1789 = vsub.s32 %v1788, 2
        %vm1790 = vcmp.gt.s32.totalorder 0, %v1789
        %v1791 = vsel %vm1790, 0, %v1789
        %v1792 = vsub.s32 32, %v1791
        %v1793 = vshll.u32 %v1784, %v1791
        %v1794 = vshrl.u32 %v1776, %v1792
        %v1795 = vor.u32 %v1793, %v1794
        %v1796 = vsub.s32 4294967266, %v1791
        %v1797 = vadd.s32 %v1796, 127
        %v1798 = vshll.u32 %v1797, 23
        %v1799 = vor.u32 4788187, %v1798
        %v1800 = vand.u32 2147483647, %v1799
        %v1802 = vcvt.s32.f32 %v1795
        %v1803 = vmul.f32 %v1802, %v1800
        %v1804 = vxor.u32 %v1803, 2147483648
        %v1805 = vsel %vm1722, %v1804, %v1803
        %v1806 = vsub.s32 4, %v1782
        %v1807 = vsel %vm1722, %v1806, %v1782
        %v1808 = vsel %vm1721, %v262, %v1805
        %v1809 = vsel %vm1721, 0, %v1807
        %v1810 = vcosq.f32.pop %v1808
        %v1811 = vsinq.f32.pop %v1808
        %vm1812 = vweird.f32 %v262
        %v1813 = vadd.s32 %v1809, 3
        %v1814 = vand.u32 %v1813, 3
        %vm1815 = vcmp.lt.s32.totalorder %v1814, 2
        %vm1816 = vcmp.eq.s32.totalorder %v1814, 0
        %v1817 = vxor.u32 %v1811, 2147483648
        %v1818 = vsel %vm1816, %v1810, %v1817
        %vm1819 = vcmp.eq.s32.totalorder %v1814, 2
        %v1820 = vxor.u32 %v1810, 2147483648
        %v1821 = vsel %vm1819, %v1820, %v1811
        %v1822 = vsel %vm1815, %v1818, %v1821
        %v1823 = vsel %vm1812, nan, %v1822
        %v1824 = vand.u32 2147483647, %v263
        %vm1825 = vcmp.le.f32.partialorder %v1824, 0.7853982
        %vm1826 = vcmp.lt.s32.totalorder %v263, 0
        %v1827 = vand.u32 %v263, 2139095040
        %v1828 = vshrl.u32 %v1827, 23
        %v1829 = vsub.s32 %v1828, 127
        %v1830 = vand.u32 2147483647, %v263
        %v1831 = vand.u32 %v1830, 8388607
        %v1832 = vor.u32 %v1831, 8388608
        %v1833 = vsub.s32 0, %v1832
        %v1834 = vadd.s32 %v1829, 1
        %vm1835 = vcmp.gt.s32.totalorder %v1834, 0
        %v1836 = vsel %vm1835, %v1834, 0
        %v1837 = vshrl.u32 %v1836, 5
        %v1838 = vand.u32 %v1836, 31
        %v1839 = vsub.s32 32, %v1838
        %v1840 = vshrl.u32 683565275, %v1839
        %v1841 = vshll.u32 683565275, %v1838
        %v1842 = vshrl.u32 2475754826, %v1839
        %v1843 = vor.u32 %v1841, %v1842
        %v1844 = vshll.u32 2475754826, %v1838
        %v1845 = vshrl.u32 2131351028, %v1839
        %v1846 = vor.u32 %v1844, %v1845
        %v1847 = vshll.u32 2131351028, %v1838
        %v1848 = vshrl.u32 2102212464, %v1839
        %v1849 = vor.u32 %v1847, %v1848
        %v1850 = vshll.u32 2102212464, %v1838
        %v1851 = vshrl.u32 920167782, %v1839
        %v1852 = vor.u32 %v1850, %v1851
        %v1853 = vshll.u32 920167782, %v1838
        %v1854 = vshrl.u32 1326507024, %v1839
        %v1855 = vor.u32 %v1853, %v1854
        %vm1856 = vcmp.lt.s32.totalorder %v1837, 1
        %vm1857 = vcmp.lt.s32.totalorder %v1837, 2
        %vm1858 = vcmp.lt.s32.totalorder %v1837, 3
        %vm1859 = vcmp.lt.s32.totalorder %v1837, 4
        %v1860 = vsel %vm1856, %v1840, %v1843
        %v1861 = vsel %vm1859, %v1849, 2102212464
        %v1862 = vsel %vm1858, %v1846, %v1861
        %v1863 = vsel %vm1857, %v1860, %v1862
        %v1864 = vsel %vm1856, %v1843, %v1846
        %v1865 = vsel %vm1859, %v1852, 920167782
        %v1866 = vsel %vm1858, %v1849, %v1865
        %v1867 = vsel %vm1857, %v1864, %v1866
        %v1868 = vsel %vm1856, %v1846, %v1849
        %v1869 = vsel %vm1859, %v1855, 1326507024
        %v1870 = vsel %vm1858, %v1852, %v1869
        %v1871 = vsel %vm1857, %v1868, %v1870
        %v1872 = vshll.u32 %v1832, 8
        %v1873 = vmul.u32.u64.compose %v1872, %v1871
        %v1874 = vextract.low.u32 %v1873
        %v1875 = vextract.high.u32 %v1873
        %v1876 = vmul.u32.u64.compose %v1872, %v1867
        %v1877 = vextract.low.u32 %v1876
        %v1878 = vextract.high.u32 %v1876
        %v1879 = vmul.u32 %v1872, %v1863
        %v1880 = vadd.s32 %v1875, %v1877
        %vm1881 = vc.u32 %v1875, %v1877
        %v1882 = vadd.s32 %v1878, 1
        %v1883 = vsel %vm1881, %v1882, %v1878
        %v1884 = vadd.s32 %v1879, %v1883
        %v1885 = vadd.s32 %v1884, 536870912
        %v1886 = vshrl.u32 %v1885, 30
        %v1887 = vshll.u32 %v1886, 30
        %v1888 = vsub.s32 %v1884, %v1887
        %vm1889 = vcmp.lt.s32.totalorder %v1888, 0
        %v1890 = vsub.s32 0, %v1888
        %v1891 = vsel %vm1889, %v1890, %v1888
        %v1892 = vclz %v1891
        %v1893 = vsub.s32 %v1892, 2
        %vm1894 = vcmp.gt.s32.totalorder 0, %v1893
        %v1895 = vsel %vm1894, 0, %v1893
        %v1896 = vsub.s32 32, %v1895
        %v1897 = vshll.u32 %v1888, %v1895
        %v1898 = vshrl.u32 %v1880, %v1896
        %v1899 = vor.u32 %v1897, %v1898
        %v1900 = vsub.s32 4294967266, %v1895
        %v1901 = vadd.s32 %v1900, 127
        %v1902 = vshll.u32 %v1901, 23
        %v1903 = vor.u32 4788187, %v1902
        %v1904 = vand.u32 2147483647, %v1903
        %v1906 = vcvt.s32.f32 %v1899
        %v1907 = vmul.f32 %v1906, %v1904
        %v1908 = vxor.u32 %v1907, 2147483648
        %v1909 = vsel %vm1826, %v1908, %v1907
        %v1910 = vsub.s32 4, %v1886
        %v1911 = vsel %vm1826, %v1910, %v1886
        %v1912 = vsel %vm1825, %v263, %v1909
        %v1913 = vsel %vm1825, 0, %v1911
        %v1914 = vcosq.f32.pop %v1912
        %v1915 = vsinq.f32.pop %v1912
        %vm1916 = vweird.f32 %v263
        %v1917 = vadd.s32 %v1913, 3
        %v1918 = vand.u32 %v1917, 3
        %vm1919 = vcmp.lt.s32.totalorder %v1918, 2
        %vm1920 = vcmp.eq.s32.totalorder %v1918, 0
        %v1921 = vxor.u32 %v1915, 2147483648
        %v1922 = vsel %vm1920, %v1914, %v1921
        %vm1923 = vcmp.eq.s32.totalorder %v1918, 2
        %v1924 = vxor.u32 %v1914, 2147483648
        %v1925 = vsel %vm1923, %v1924, %v1915
        %v1926 = vsel %vm1919, %v1922, %v1925
        %v1927 = vsel %vm1916, nan, %v1926
        %1928 = vst [vmem:[%s137] sm:$0xff] %v367
        %1929 = vst [vmem:[%s137 + $0x10] sm:$0xff] %v471
        %1930 = vst [vmem:[%s137 + $0x20] sm:$0xff] %v575
        %1931 = vst [vmem:[%s137 + $0x30] sm:$0xff] %v679
        %1932 = vst [vmem:[%s137 + $0x40] sm:$0xff] %v783
        %1933 = vst [vmem:[%s137 + $0x50] sm:$0xff] %v887
        %1934 = vst [vmem:[%s137 + $0x60] sm:$0xff] %v991
        %1935 = vst [vmem:[%s137 + $0x70] sm:$0xff] %v1095
        %1936 = vst [vmem:[%s137 + $0x80] sm:$0xff] %v1199
        %1937 = vst [vmem:[%s137 + $0x90] sm:$0xff] %v1303
        %1938 = vst [vmem:[%s137 + $0xa0] sm:$0xff] %v1407
        %1939 = vst [vmem:[%s137 + $0xb0] sm:$0xff] %v1511
        %1940 = vst [vmem:[%s137 + $0xc0] sm:$0xff] %v1615
        %1941 = vst [vmem:[%s137 + $0xd0] sm:$0xff] %v1719
        %1942 = vst [vmem:[%s137 + $0xe0] sm:$0xff] %v1823
        %1943 = vst [vmem:[%s137 + $0xf0] sm:$0xff] %v1927
        %v1944 = vand.u32 2147483647, %v248
        %vm1945 = vcmp.le.f32.partialorder %v1944, 0.7853982
        %vm1946 = vcmp.lt.s32.totalorder %v248, 0
        %v1947 = vand.u32 %v248, 2139095040
        %v1948 = vshrl.u32 %v1947, 23
        %v1949 = vsub.s32 %v1948, 127
        %v1950 = vand.u32 2147483647, %v248
        %v1951 = vand.u32 %v1950, 8388607
        %v1952 = vor.u32 %v1951, 8388608
        %v1953 = vsub.s32 0, %v1952
        %v1954 = vadd.s32 %v1949, 1
        %vm1955 = vcmp.gt.s32.totalorder %v1954, 0
        %v1956 = vsel %vm1955, %v1954, 0
        %v1957 = vshrl.u32 %v1956, 5
        %v1958 = vand.u32 %v1956, 31
        %v1959 = vsub.s32 32, %v1958
        %v1960 = vshrl.u32 683565275, %v1959
        %v1961 = vshll.u32 683565275, %v1958
        %v1962 = vshrl.u32 2475754826, %v1959
        %v1963 = vor.u32 %v1961, %v1962
        %v1964 = vshll.u32 2475754826, %v1958
        %v1965 = vshrl.u32 2131351028, %v1959
        %v1966 = vor.u32 %v1964, %v1965
        %v1967 = vshll.u32 2131351028, %v1958
        %v1968 = vshrl.u32 2102212464, %v1959
        %v1969 = vor.u32 %v1967, %v1968
        %v1970 = vshll.u32 2102212464, %v1958
        %v1971 = vshrl.u32 920167782, %v1959
        %v1972 = vor.u32 %v1970, %v1971
        %v1973 = vshll.u32 920167782, %v1958
        %v1974 = vshrl.u32 1326507024, %v1959
        %v1975 = vor.u32 %v1973, %v1974
        %vm1976 = vcmp.lt.s32.totalorder %v1957, 1
        %vm1977 = vcmp.lt.s32.totalorder %v1957, 2
        %vm1978 = vcmp.lt.s32.totalorder %v1957, 3
        %vm1979 = vcmp.lt.s32.totalorder %v1957, 4
        %v1980 = vsel %vm1976, %v1960, %v1963
        %v1981 = vsel %vm1979, %v1969, 2102212464
        %v1982 = vsel %vm1978, %v1966, %v1981
        %v1983 = vsel %vm1977, %v1980, %v1982
        %v1984 = vsel %vm1976, %v1963, %v1966
        %v1985 = vsel %vm1979, %v1972, 920167782
        %v1986 = vsel %vm1978, %v1969, %v1985
        %v1987 = vsel %vm1977, %v1984, %v1986
        %v1988 = vsel %vm1976, %v1966, %v1969
        %v1989 = vsel %vm1979, %v1975, 1326507024
        %v1990 = vsel %vm1978, %v1972, %v1989
        %v1991 = vsel %vm1977, %v1988, %v1990
        %v1992 = vshll.u32 %v1952, 8
        %v1993 = vmul.u32.u64.compose %v1992, %v1991
        %v1994 = vextract.low.u32 %v1993
        %v1995 = vextract.high.u32 %v1993
        %v1996 = vmul.u32.u64.compose %v1992, %v1987
        %v1997 = vextract.low.u32 %v1996
        %v1998 = vextract.high.u32 %v1996
        %v1999 = vmul.u32 %v1992, %v1983
        %v2000 = vadd.s32 %v1995, %v1997
        %vm2001 = vc.u32 %v1995, %v1997
        %v2002 = vadd.s32 %v1998, 1
        %v2003 = vsel %vm2001, %v2002, %v1998
        %v2004 = vadd.s32 %v1999, %v2003
        %v2005 = vadd.s32 %v2004, 536870912
        %v2006 = vshrl.u32 %v2005, 30
        %v2007 = vshll.u32 %v2006, 30
        %v2008 = vsub.s32 %v2004, %v2007
        %vm2009 = vcmp.lt.s32.totalorder %v2008, 0
        %v2010 = vsub.s32 0, %v2008
        %v2011 = vsel %vm2009, %v2010, %v2008
        %v2012 = vclz %v2011
        %v2013 = vsub.s32 %v2012, 2
        %vm2014 = vcmp.gt.s32.totalorder 0, %v2013
        %v2015 = vsel %vm2014, 0, %v2013
        %v2016 = vsub.s32 32, %v2015
        %v2017 = vshll.u32 %v2008, %v2015
        %v2018 = vshrl.u32 %v2000, %v2016
        %v2019 = vor.u32 %v2017, %v2018
        %v2020 = vsub.s32 4294967266, %v2015
        %v2021 = vadd.s32 %v2020, 127
        %v2022 = vshll.u32 %v2021, 23
        %v2023 = vor.u32 4788187, %v2022
        %v2024 = vand.u32 2147483647, %v2023
        %v2026 = vcvt.s32.f32 %v2019
        %v2027 = vmul.f32 %v2026, %v2024
        %v2028 = vxor.u32 %v2027, 2147483648
        %v2029 = vsel %vm1946, %v2028, %v2027
        %v2030 = vsub.s32 4, %v2006
        %v2031 = vsel %vm1946, %v2030, %v2006
        %v2032 = vsel %vm1945, %v248, %v2029
        %v2033 = vsel %vm1945, 0, %v2031
        %v2034 = vcosq.f32.pop %v2032
        %v2035 = vsinq.f32.pop %v2032
        %vm2036 = vweird.f32 %v248
        %v2037 = vand.u32 %v2033, 3
        %vm2038 = vcmp.lt.s32.totalorder %v2037, 2
        %vm2039 = vcmp.eq.s32.totalorder %v2037, 0
        %v2040 = vxor.u32 %v2035, 2147483648
        %v2041 = vsel %vm2039, %v2034, %v2040
        %vm2042 = vcmp.eq.s32.totalorder %v2037, 2
        %v2043 = vxor.u32 %v2034, 2147483648
        %v2044 = vsel %vm2042, %v2043, %v2035
        %v2045 = vsel %vm2038, %v2041, %v2044
        %v2046 = vsel %vm2036, nan, %v2045
        %v2047 = vand.u32 2147483647, %v249
        %vm2048 = vcmp.le.f32.partialorder %v2047, 0.7853982
        %vm2049 = vcmp.lt.s32.totalorder %v249, 0
        %v2050 = vand.u32 %v249, 2139095040
        %v2051 = vshrl.u32 %v2050, 23
        %v2052 = vsub.s32 %v2051, 127
        %v2053 = vand.u32 2147483647, %v249
        %v2054 = vand.u32 %v2053, 8388607
        %v2055 = vor.u32 %v2054, 8388608
        %v2056 = vsub.s32 0, %v2055
        %v2057 = vadd.s32 %v2052, 1
        %vm2058 = vcmp.gt.s32.totalorder %v2057, 0
        %v2059 = vsel %vm2058, %v2057, 0
        %v2060 = vshrl.u32 %v2059, 5
        %v2061 = vand.u32 %v2059, 31
        %v2062 = vsub.s32 32, %v2061
        %v2063 = vshrl.u32 683565275, %v2062
        %v2064 = vshll.u32 683565275, %v2061
        %v2065 = vshrl.u32 2475754826, %v2062
        %v2066 = vor.u32 %v2064, %v2065
        %v2067 = vshll.u32 2475754826, %v2061
        %v2068 = vshrl.u32 2131351028, %v2062
        %v2069 = vor.u32 %v2067, %v2068
        %v2070 = vshll.u32 2131351028, %v2061
        %v2071 = vshrl.u32 2102212464, %v2062
        %v2072 = vor.u32 %v2070, %v2071
        %v2073 = vshll.u32 2102212464, %v2061
        %v2074 = vshrl.u32 920167782, %v2062
        %v2075 = vor.u32 %v2073, %v2074
        %v2076 = vshll.u32 920167782, %v2061
        %v2077 = vshrl.u32 1326507024, %v2062
        %v2078 = vor.u32 %v2076, %v2077
        %vm2079 = vcmp.lt.s32.totalorder %v2060, 1
        %vm2080 = vcmp.lt.s32.totalorder %v2060, 2
        %vm2081 = vcmp.lt.s32.totalorder %v2060, 3
        %vm2082 = vcmp.lt.s32.totalorder %v2060, 4
        %v2083 = vsel %vm2079, %v2063, %v2066
        %v2084 = vsel %vm2082, %v2072, 2102212464
        %v2085 = vsel %vm2081, %v2069, %v2084
        %v2086 = vsel %vm2080, %v2083, %v2085
        %v2087 = vsel %vm2079, %v2066, %v2069
        %v2088 = vsel %vm2082, %v2075, 920167782
        %v2089 = vsel %vm2081, %v2072, %v2088
        %v2090 = vsel %vm2080, %v2087, %v2089
        %v2091 = vsel %vm2079, %v2069, %v2072
        %v2092 = vsel %vm2082, %v2078, 1326507024
        %v2093 = vsel %vm2081, %v2075, %v2092
        %v2094 = vsel %vm2080, %v2091, %v2093
        %v2095 = vshll.u32 %v2055, 8
        %v2096 = vmul.u32.u64.compose %v2095, %v2094
        %v2097 = vextract.low.u32 %v2096
        %v2098 = vextract.high.u32 %v2096
        %v2099 = vmul.u32.u64.compose %v2095, %v2090
        %v2100 = vextract.low.u32 %v2099
        %v2101 = vextract.high.u32 %v2099
        %v2102 = vmul.u32 %v2095, %v2086
        %v2103 = vadd.s32 %v2098, %v2100
        %vm2104 = vc.u32 %v2098, %v2100
        %v2105 = vadd.s32 %v2101, 1
        %v2106 = vsel %vm2104, %v2105, %v2101
        %v2107 = vadd.s32 %v2102, %v2106
        %v2108 = vadd.s32 %v2107, 536870912
        %v2109 = vshrl.u32 %v2108, 30
        %v2110 = vshll.u32 %v2109, 30
        %v2111 = vsub.s32 %v2107, %v2110
        %vm2112 = vcmp.lt.s32.totalorder %v2111, 0
        %v2113 = vsub.s32 0, %v2111
        %v2114 = vsel %vm2112, %v2113, %v2111
        %v2115 = vclz %v2114
        %v2116 = vsub.s32 %v2115, 2
        %vm2117 = vcmp.gt.s32.totalorder 0, %v2116
        %v2118 = vsel %vm2117, 0, %v2116
        %v2119 = vsub.s32 32, %v2118
        %v2120 = vshll.u32 %v2111, %v2118
        %v2121 = vshrl.u32 %v2103, %v2119
        %v2122 = vor.u32 %v2120, %v2121
        %v2123 = vsub.s32 4294967266, %v2118
        %v2124 = vadd.s32 %v2123, 127
        %v2125 = vshll.u32 %v2124, 23
        %v2126 = vor.u32 4788187, %v2125
        %v2127 = vand.u32 2147483647, %v2126
        %v2129 = vcvt.s32.f32 %v2122
        %v2130 = vmul.f32 %v2129, %v2127
        %v2131 = vxor.u32 %v2130, 2147483648
        %v2132 = vsel %vm2049, %v2131, %v2130
        %v2133 = vsub.s32 4, %v2109
        %v2134 = vsel %vm2049, %v2133, %v2109
        %v2135 = vsel %vm2048, %v249, %v2132
        %v2136 = vsel %vm2048, 0, %v2134
        %v2137 = vcosq.f32.pop %v2135
        %v2138 = vsinq.f32.pop %v2135
        %vm2139 = vweird.f32 %v249
        %v2140 = vand.u32 %v2136, 3
        %vm2141 = vcmp.lt.s32.totalorder %v2140, 2
        %vm2142 = vcmp.eq.s32.totalorder %v2140, 0
        %v2143 = vxor.u32 %v2138, 2147483648
        %v2144 = vsel %vm2142, %v2137, %v2143
        %vm2145 = vcmp.eq.s32.totalorder %v2140, 2
        %v2146 = vxor.u32 %v2137, 2147483648
        %v2147 = vsel %vm2145, %v2146, %v2138
        %v2148 = vsel %vm2141, %v2144, %v2147
        %v2149 = vsel %vm2139, nan, %v2148
        %v2150 = vand.u32 2147483647, %v250
        %vm2151 = vcmp.le.f32.partialorder %v2150, 0.7853982
        %vm2152 = vcmp.lt.s32.totalorder %v250, 0
        %v2153 = vand.u32 %v250, 2139095040
        %v2154 = vshrl.u32 %v2153, 23
        %v2155 = vsub.s32 %v2154, 127
        %v2156 = vand.u32 2147483647, %v250
        %v2157 = vand.u32 %v2156, 8388607
        %v2158 = vor.u32 %v2157, 8388608
        %v2159 = vsub.s32 0, %v2158
        %v2160 = vadd.s32 %v2155, 1
        %vm2161 = vcmp.gt.s32.totalorder %v2160, 0
        %v2162 = vsel %vm2161, %v2160, 0
        %v2163 = vshrl.u32 %v2162, 5
        %v2164 = vand.u32 %v2162, 31
        %v2165 = vsub.s32 32, %v2164
        %v2166 = vshrl.u32 683565275, %v2165
        %v2167 = vshll.u32 683565275, %v2164
        %v2168 = vshrl.u32 2475754826, %v2165
        %v2169 = vor.u32 %v2167, %v2168
        %v2170 = vshll.u32 2475754826, %v2164
        %v2171 = vshrl.u32 2131351028, %v2165
        %v2172 = vor.u32 %v2170, %v2171
        %v2173 = vshll.u32 2131351028, %v2164
        %v2174 = vshrl.u32 2102212464, %v2165
        %v2175 = vor.u32 %v2173, %v2174
        %v2176 = vshll.u32 2102212464, %v2164
        %v2177 = vshrl.u32 920167782, %v2165
        %v2178 = vor.u32 %v2176, %v2177
        %v2179 = vshll.u32 920167782, %v2164
        %v2180 = vshrl.u32 1326507024, %v2165
        %v2181 = vor.u32 %v2179, %v2180
        %vm2182 = vcmp.lt.s32.totalorder %v2163, 1
        %vm2183 = vcmp.lt.s32.totalorder %v2163, 2
        %vm2184 = vcmp.lt.s32.totalorder %v2163, 3
        %vm2185 = vcmp.lt.s32.totalorder %v2163, 4
        %v2186 = vsel %vm2182, %v2166, %v2169
        %v2187 = vsel %vm2185, %v2175, 2102212464
        %v2188 = vsel %vm2184, %v2172, %v2187
        %v2189 = vsel %vm2183, %v2186, %v2188
        %v2190 = vsel %vm2182, %v2169, %v2172
        %v2191 = vsel %vm2185, %v2178, 920167782
        %v2192 = vsel %vm2184, %v2175, %v2191
        %v2193 = vsel %vm2183, %v2190, %v2192
        %v2194 = vsel %vm2182, %v2172, %v2175
        %v2195 = vsel %vm2185, %v2181, 1326507024
        %v2196 = vsel %vm2184, %v2178, %v2195
        %v2197 = vsel %vm2183, %v2194, %v2196
        %v2198 = vshll.u32 %v2158, 8
        %v2199 = vmul.u32.u64.compose %v2198, %v2197
        %v2200 = vextract.low.u32 %v2199
        %v2201 = vextract.high.u32 %v2199
        %v2202 = vmul.u32.u64.compose %v2198, %v2193
        %v2203 = vextract.low.u32 %v2202
        %v2204 = vextract.high.u32 %v2202
        %v2205 = vmul.u32 %v2198, %v2189
        %v2206 = vadd.s32 %v2201, %v2203
        %vm2207 = vc.u32 %v2201, %v2203
        %v2208 = vadd.s32 %v2204, 1
        %v2209 = vsel %vm2207, %v2208, %v2204
        %v2210 = vadd.s32 %v2205, %v2209
        %v2211 = vadd.s32 %v2210, 536870912
        %v2212 = vshrl.u32 %v2211, 30
        %v2213 = vshll.u32 %v2212, 30
        %v2214 = vsub.s32 %v2210, %v2213
        %vm2215 = vcmp.lt.s32.totalorder %v2214, 0
        %v2216 = vsub.s32 0, %v2214
        %v2217 = vsel %vm2215, %v2216, %v2214
        %v2218 = vclz %v2217
        %v2219 = vsub.s32 %v2218, 2
        %vm2220 = vcmp.gt.s32.totalorder 0, %v2219
        %v2221 = vsel %vm2220, 0, %v2219
        %v2222 = vsub.s32 32, %v2221
        %v2223 = vshll.u32 %v2214, %v2221
        %v2224 = vshrl.u32 %v2206, %v2222
        %v2225 = vor.u32 %v2223, %v2224
        %v2226 = vsub.s32 4294967266, %v2221
        %v2227 = vadd.s32 %v2226, 127
        %v2228 = vshll.u32 %v2227, 23
        %v2229 = vor.u32 4788187, %v2228
        %v2230 = vand.u32 2147483647, %v2229
        %v2232 = vcvt.s32.f32 %v2225
        %v2233 = vmul.f32 %v2232, %v2230
        %v2234 = vxor.u32 %v2233, 2147483648
        %v2235 = vsel %vm2152, %v2234, %v2233
        %v2236 = vsub.s32 4, %v2212
        %v2237 = vsel %vm2152, %v2236, %v2212
        %v2238 = vsel %vm2151, %v250, %v2235
        %v2239 = vsel %vm2151, 0, %v2237
        %v2240 = vcosq.f32.pop %v2238
        %v2241 = vsinq.f32.pop %v2238
        %vm2242 = vweird.f32 %v250
        %v2243 = vand.u32 %v2239, 3
        %vm2244 = vcmp.lt.s32.totalorder %v2243, 2
        %vm2245 = vcmp.eq.s32.totalorder %v2243, 0
        %v2246 = vxor.u32 %v2241, 2147483648
        %v2247 = vsel %vm2245, %v2240, %v2246
        %vm2248 = vcmp.eq.s32.totalorder %v2243, 2
        %v2249 = vxor.u32 %v2240, 2147483648
        %v2250 = vsel %vm2248, %v2249, %v2241
        %v2251 = vsel %vm2244, %v2247, %v2250
        %v2252 = vsel %vm2242, nan, %v2251
        %v2253 = vand.u32 2147483647, %v251
        %vm2254 = vcmp.le.f32.partialorder %v2253, 0.7853982
        %vm2255 = vcmp.lt.s32.totalorder %v251, 0
        %v2256 = vand.u32 %v251, 2139095040
        %v2257 = vshrl.u32 %v2256, 23
        %v2258 = vsub.s32 %v2257, 127
        %v2259 = vand.u32 2147483647, %v251
        %v2260 = vand.u32 %v2259, 8388607
        %v2261 = vor.u32 %v2260, 8388608
        %v2262 = vsub.s32 0, %v2261
        %v2263 = vadd.s32 %v2258, 1
        %vm2264 = vcmp.gt.s32.totalorder %v2263, 0
        %v2265 = vsel %vm2264, %v2263, 0
        %v2266 = vshrl.u32 %v2265, 5
        %v2267 = vand.u32 %v2265, 31
        %v2268 = vsub.s32 32, %v2267
        %v2269 = vshrl.u32 683565275, %v2268
        %v2270 = vshll.u32 683565275, %v2267
        %v2271 = vshrl.u32 2475754826, %v2268
        %v2272 = vor.u32 %v2270, %v2271
        %v2273 = vshll.u32 2475754826, %v2267
        %v2274 = vshrl.u32 2131351028, %v2268
        %v2275 = vor.u32 %v2273, %v2274
        %v2276 = vshll.u32 2131351028, %v2267
        %v2277 = vshrl.u32 2102212464, %v2268
        %v2278 = vor.u32 %v2276, %v2277
        %v2279 = vshll.u32 2102212464, %v2267
        %v2280 = vshrl.u32 920167782, %v2268
        %v2281 = vor.u32 %v2279, %v2280
        %v2282 = vshll.u32 920167782, %v2267
        %v2283 = vshrl.u32 1326507024, %v2268
        %v2284 = vor.u32 %v2282, %v2283
        %vm2285 = vcmp.lt.s32.totalorder %v2266, 1
        %vm2286 = vcmp.lt.s32.totalorder %v2266, 2
        %vm2287 = vcmp.lt.s32.totalorder %v2266, 3
        %vm2288 = vcmp.lt.s32.totalorder %v2266, 4
        %v2289 = vsel %vm2285, %v2269, %v2272
        %v2290 = vsel %vm2288, %v2278, 2102212464
        %v2291 = vsel %vm2287, %v2275, %v2290
        %v2292 = vsel %vm2286, %v2289, %v2291
        %v2293 = vsel %vm2285, %v2272, %v2275
        %v2294 = vsel %vm2288, %v2281, 920167782
        %v2295 = vsel %vm2287, %v2278, %v2294
        %v2296 = vsel %vm2286, %v2293, %v2295
        %v2297 = vsel %vm2285, %v2275, %v2278
        %v2298 = vsel %vm2288, %v2284, 1326507024
        %v2299 = vsel %vm2287, %v2281, %v2298
        %v2300 = vsel %vm2286, %v2297, %v2299
        %v2301 = vshll.u32 %v2261, 8
        %v2302 = vmul.u32.u64.compose %v2301, %v2300
        %v2303 = vextract.low.u32 %v2302
        %v2304 = vextract.high.u32 %v2302
        %v2305 = vmul.u32.u64.compose %v2301, %v2296
        %v2306 = vextract.low.u32 %v2305
        %v2307 = vextract.high.u32 %v2305
        %v2308 = vmul.u32 %v2301, %v2292
        %v2309 = vadd.s32 %v2304, %v2306
        %vm2310 = vc.u32 %v2304, %v2306
        %v2311 = vadd.s32 %v2307, 1
        %v2312 = vsel %vm2310, %v2311, %v2307
        %v2313 = vadd.s32 %v2308, %v2312
        %v2314 = vadd.s32 %v2313, 536870912
        %v2315 = vshrl.u32 %v2314, 30
        %v2316 = vshll.u32 %v2315, 30
        %v2317 = vsub.s32 %v2313, %v2316
        %vm2318 = vcmp.lt.s32.totalorder %v2317, 0
        %v2319 = vsub.s32 0, %v2317
        %v2320 = vsel %vm2318, %v2319, %v2317
        %v2321 = vclz %v2320
        %v2322 = vsub.s32 %v2321, 2
        %vm2323 = vcmp.gt.s32.totalorder 0, %v2322
        %v2324 = vsel %vm2323, 0, %v2322
        %v2325 = vsub.s32 32, %v2324
        %v2326 = vshll.u32 %v2317, %v2324
        %v2327 = vshrl.u32 %v2309, %v2325
        %v2328 = vor.u32 %v2326, %v2327
        %v2329 = vsub.s32 4294967266, %v2324
        %v2330 = vadd.s32 %v2329, 127
        %v2331 = vshll.u32 %v2330, 23
        %v2332 = vor.u32 4788187, %v2331
        %v2333 = vand.u32 2147483647, %v2332
        %v2335 = vcvt.s32.f32 %v2328
        %v2336 = vmul.f32 %v2335, %v2333
        %v2337 = vxor.u32 %v2336, 2147483648
        %v2338 = vsel %vm2255, %v2337, %v2336
        %v2339 = vsub.s32 4, %v2315
        %v2340 = vsel %vm2255, %v2339, %v2315
        %v2341 = vsel %vm2254, %v251, %v2338
        %v2342 = vsel %vm2254, 0, %v2340
        %v2343 = vcosq.f32.pop %v2341
        %v2344 = vsinq.f32.pop %v2341
        %vm2345 = vweird.f32 %v251
        %v2346 = vand.u32 %v2342, 3
        %vm2347 = vcmp.lt.s32.totalorder %v2346, 2
        %vm2348 = vcmp.eq.s32.totalorder %v2346, 0
        %v2349 = vxor.u32 %v2344, 2147483648
        %v2350 = vsel %vm2348, %v2343, %v2349
        %vm2351 = vcmp.eq.s32.totalorder %v2346, 2
        %v2352 = vxor.u32 %v2343, 2147483648
        %v2353 = vsel %vm2351, %v2352, %v2344
        %v2354 = vsel %vm2347, %v2350, %v2353
        %v2355 = vsel %vm2345, nan, %v2354
        %v2356 = vand.u32 2147483647, %v252
        %vm2357 = vcmp.le.f32.partialorder %v2356, 0.7853982
        %vm2358 = vcmp.lt.s32.totalorder %v252, 0
        %v2359 = vand.u32 %v252, 2139095040
        %v2360 = vshrl.u32 %v2359, 23
        %v2361 = vsub.s32 %v2360, 127
        %v2362 = vand.u32 2147483647, %v252
        %v2363 = vand.u32 %v2362, 8388607
        %v2364 = vor.u32 %v2363, 8388608
        %v2365 = vsub.s32 0, %v2364
        %v2366 = vadd.s32 %v2361, 1
        %vm2367 = vcmp.gt.s32.totalorder %v2366, 0
        %v2368 = vsel %vm2367, %v2366, 0
        %v2369 = vshrl.u32 %v2368, 5
        %v2370 = vand.u32 %v2368, 31
        %v2371 = vsub.s32 32, %v2370
        %v2372 = vshrl.u32 683565275, %v2371
        %v2373 = vshll.u32 683565275, %v2370
        %v2374 = vshrl.u32 2475754826, %v2371
        %v2375 = vor.u32 %v2373, %v2374
        %v2376 = vshll.u32 2475754826, %v2370
        %v2377 = vshrl.u32 2131351028, %v2371
        %v2378 = vor.u32 %v2376, %v2377
        %v2379 = vshll.u32 2131351028, %v2370
        %v2380 = vshrl.u32 2102212464, %v2371
        %v2381 = vor.u32 %v2379, %v2380
        %v2382 = vshll.u32 2102212464, %v2370
        %v2383 = vshrl.u32 920167782, %v2371
        %v2384 = vor.u32 %v2382, %v2383
        %v2385 = vshll.u32 920167782, %v2370
        %v2386 = vshrl.u32 1326507024, %v2371
        %v2387 = vor.u32 %v2385, %v2386
        %vm2388 = vcmp.lt.s32.totalorder %v2369, 1
        %vm2389 = vcmp.lt.s32.totalorder %v2369, 2
        %vm2390 = vcmp.lt.s32.totalorder %v2369, 3
        %vm2391 = vcmp.lt.s32.totalorder %v2369, 4
        %v2392 = vsel %vm2388, %v2372, %v2375
        %v2393 = vsel %vm2391, %v2381, 2102212464
        %v2394 = vsel %vm2390, %v2378, %v2393
        %v2395 = vsel %vm2389, %v2392, %v2394
        %v2396 = vsel %vm2388, %v2375, %v2378
        %v2397 = vsel %vm2391, %v2384, 920167782
        %v2398 = vsel %vm2390, %v2381, %v2397
        %v2399 = vsel %vm2389, %v2396, %v2398
        %v2400 = vsel %vm2388, %v2378, %v2381
        %v2401 = vsel %vm2391, %v2387, 1326507024
        %v2402 = vsel %vm2390, %v2384, %v2401
        %v2403 = vsel %vm2389, %v2400, %v2402
        %v2404 = vshll.u32 %v2364, 8
        %v2405 = vmul.u32.u64.compose %v2404, %v2403
        %v2406 = vextract.low.u32 %v2405
        %v2407 = vextract.high.u32 %v2405
        %v2408 = vmul.u32.u64.compose %v2404, %v2399
        %v2409 = vextract.low.u32 %v2408
        %v2410 = vextract.high.u32 %v2408
        %v2411 = vmul.u32 %v2404, %v2395
        %v2412 = vadd.s32 %v2407, %v2409
        %vm2413 = vc.u32 %v2407, %v2409
        %v2414 = vadd.s32 %v2410, 1
        %v2415 = vsel %vm2413, %v2414, %v2410
        %v2416 = vadd.s32 %v2411, %v2415
        %v2417 = vadd.s32 %v2416, 536870912
        %v2418 = vshrl.u32 %v2417, 30
        %v2419 = vshll.u32 %v2418, 30
        %v2420 = vsub.s32 %v2416, %v2419
        %vm2421 = vcmp.lt.s32.totalorder %v2420, 0
        %v2422 = vsub.s32 0, %v2420
        %v2423 = vsel %vm2421, %v2422, %v2420
        %v2424 = vclz %v2423
        %v2425 = vsub.s32 %v2424, 2
        %vm2426 = vcmp.gt.s32.totalorder 0, %v2425
        %v2427 = vsel %vm2426, 0, %v2425
        %v2428 = vsub.s32 32, %v2427
        %v2429 = vshll.u32 %v2420, %v2427
        %v2430 = vshrl.u32 %v2412, %v2428
        %v2431 = vor.u32 %v2429, %v2430
        %v2432 = vsub.s32 4294967266, %v2427
        %v2433 = vadd.s32 %v2432, 127
        %v2434 = vshll.u32 %v2433, 23
        %v2435 = vor.u32 4788187, %v2434
        %v2436 = vand.u32 2147483647, %v2435
        %v2438 = vcvt.s32.f32 %v2431
        %v2439 = vmul.f32 %v2438, %v2436
        %v2440 = vxor.u32 %v2439, 2147483648
        %v2441 = vsel %vm2358, %v2440, %v2439
        %v2442 = vsub.s32 4, %v2418
        %v2443 = vsel %vm2358, %v2442, %v2418
        %v2444 = vsel %vm2357, %v252, %v2441
        %v2445 = vsel %vm2357, 0, %v2443
        %v2446 = vcosq.f32.pop %v2444
        %v2447 = vsinq.f32.pop %v2444
        %vm2448 = vweird.f32 %v252
        %v2449 = vand.u32 %v2445, 3
        %vm2450 = vcmp.lt.s32.totalorder %v2449, 2
        %vm2451 = vcmp.eq.s32.totalorder %v2449, 0
        %v2452 = vxor.u32 %v2447, 2147483648
        %v2453 = vsel %vm2451, %v2446, %v2452
        %vm2454 = vcmp.eq.s32.totalorder %v2449, 2
        %v2455 = vxor.u32 %v2446, 2147483648
        %v2456 = vsel %vm2454, %v2455, %v2447
        %v2457 = vsel %vm2450, %v2453, %v2456
        %v2458 = vsel %vm2448, nan, %v2457
        %v2459 = vand.u32 2147483647, %v253
        %vm2460 = vcmp.le.f32.partialorder %v2459, 0.7853982
        %vm2461 = vcmp.lt.s32.totalorder %v253, 0
        %v2462 = vand.u32 %v253, 2139095040
        %v2463 = vshrl.u32 %v2462, 23
        %v2464 = vsub.s32 %v2463, 127
        %v2465 = vand.u32 2147483647, %v253
        %v2466 = vand.u32 %v2465, 8388607
        %v2467 = vor.u32 %v2466, 8388608
        %v2468 = vsub.s32 0, %v2467
        %v2469 = vadd.s32 %v2464, 1
        %vm2470 = vcmp.gt.s32.totalorder %v2469, 0
        %v2471 = vsel %vm2470, %v2469, 0
        %v2472 = vshrl.u32 %v2471, 5
        %v2473 = vand.u32 %v2471, 31
        %v2474 = vsub.s32 32, %v2473
        %v2475 = vshrl.u32 683565275, %v2474
        %v2476 = vshll.u32 683565275, %v2473
        %v2477 = vshrl.u32 2475754826, %v2474
        %v2478 = vor.u32 %v2476, %v2477
        %v2479 = vshll.u32 2475754826, %v2473
        %v2480 = vshrl.u32 2131351028, %v2474
        %v2481 = vor.u32 %v2479, %v2480
        %v2482 = vshll.u32 2131351028, %v2473
        %v2483 = vshrl.u32 2102212464, %v2474
        %v2484 = vor.u32 %v2482, %v2483
        %v2485 = vshll.u32 2102212464, %v2473
        %v2486 = vshrl.u32 920167782, %v2474
        %v2487 = vor.u32 %v2485, %v2486
        %v2488 = vshll.u32 920167782, %v2473
        %v2489 = vshrl.u32 1326507024, %v2474
        %v2490 = vor.u32 %v2488, %v2489
        %vm2491 = vcmp.lt.s32.totalorder %v2472, 1
        %vm2492 = vcmp.lt.s32.totalorder %v2472, 2
        %vm2493 = vcmp.lt.s32.totalorder %v2472, 3
        %vm2494 = vcmp.lt.s32.totalorder %v2472, 4
        %v2495 = vsel %vm2491, %v2475, %v2478
        %v2496 = vsel %vm2494, %v2484, 2102212464
        %v2497 = vsel %vm2493, %v2481, %v2496
        %v2498 = vsel %vm2492, %v2495, %v2497
        %v2499 = vsel %vm2491, %v2478, %v2481
        %v2500 = vsel %vm2494, %v2487, 920167782
        %v2501 = vsel %vm2493, %v2484, %v2500
        %v2502 = vsel %vm2492, %v2499, %v2501
        %v2503 = vsel %vm2491, %v2481, %v2484
        %v2504 = vsel %vm2494, %v2490, 1326507024
        %v2505 = vsel %vm2493, %v2487, %v2504
        %v2506 = vsel %vm2492, %v2503, %v2505
        %v2507 = vshll.u32 %v2467, 8
        %v2508 = vmul.u32.u64.compose %v2507, %v2506
        %v2509 = vextract.low.u32 %v2508
        %v2510 = vextract.high.u32 %v2508
        %v2511 = vmul.u32.u64.compose %v2507, %v2502
        %v2512 = vextract.low.u32 %v2511
        %v2513 = vextract.high.u32 %v2511
        %v2514 = vmul.u32 %v2507, %v2498
        %v2515 = vadd.s32 %v2510, %v2512
        %vm2516 = vc.u32 %v2510, %v2512
        %v2517 = vadd.s32 %v2513, 1
        %v2518 = vsel %vm2516, %v2517, %v2513
        %v2519 = vadd.s32 %v2514, %v2518
        %v2520 = vadd.s32 %v2519, 536870912
        %v2521 = vshrl.u32 %v2520, 30
        %v2522 = vshll.u32 %v2521, 30
        %v2523 = vsub.s32 %v2519, %v2522
        %vm2524 = vcmp.lt.s32.totalorder %v2523, 0
        %v2525 = vsub.s32 0, %v2523
        %v2526 = vsel %vm2524, %v2525, %v2523
        %v2527 = vclz %v2526
        %v2528 = vsub.s32 %v2527, 2
        %vm2529 = vcmp.gt.s32.totalorder 0, %v2528
        %v2530 = vsel %vm2529, 0, %v2528
        %v2531 = vsub.s32 32, %v2530
        %v2532 = vshll.u32 %v2523, %v2530
        %v2533 = vshrl.u32 %v2515, %v2531
        %v2534 = vor.u32 %v2532, %v2533
        %v2535 = vsub.s32 4294967266, %v2530
        %v2536 = vadd.s32 %v2535, 127
        %v2537 = vshll.u32 %v2536, 23
        %v2538 = vor.u32 4788187, %v2537
        %v2539 = vand.u32 2147483647, %v2538
        %v2541 = vcvt.s32.f32 %v2534
        %v2542 = vmul.f32 %v2541, %v2539
        %v2543 = vxor.u32 %v2542, 2147483648
        %v2544 = vsel %vm2461, %v2543, %v2542
        %v2545 = vsub.s32 4, %v2521
        %v2546 = vsel %vm2461, %v2545, %v2521
        %v2547 = vsel %vm2460, %v253, %v2544
        %v2548 = vsel %vm2460, 0, %v2546
        %v2549 = vcosq.f32.pop %v2547
        %v2550 = vsinq.f32.pop %v2547
        %vm2551 = vweird.f32 %v253
        %v2552 = vand.u32 %v2548, 3
        %vm2553 = vcmp.lt.s32.totalorder %v2552, 2
        %vm2554 = vcmp.eq.s32.totalorder %v2552, 0
        %v2555 = vxor.u32 %v2550, 2147483648
        %v2556 = vsel %vm2554, %v2549, %v2555
        %vm2557 = vcmp.eq.s32.totalorder %v2552, 2
        %v2558 = vxor.u32 %v2549, 2147483648
        %v2559 = vsel %vm2557, %v2558, %v2550
        %v2560 = vsel %vm2553, %v2556, %v2559
        %v2561 = vsel %vm2551, nan, %v2560
        %v2562 = vand.u32 2147483647, %v254
        %vm2563 = vcmp.le.f32.partialorder %v2562, 0.7853982
        %vm2564 = vcmp.lt.s32.totalorder %v254, 0
        %v2565 = vand.u32 %v254, 2139095040
        %v2566 = vshrl.u32 %v2565, 23
        %v2567 = vsub.s32 %v2566, 127
        %v2568 = vand.u32 2147483647, %v254
        %v2569 = vand.u32 %v2568, 8388607
        %v2570 = vor.u32 %v2569, 8388608
        %v2571 = vsub.s32 0, %v2570
        %v2572 = vadd.s32 %v2567, 1
        %vm2573 = vcmp.gt.s32.totalorder %v2572, 0
        %v2574 = vsel %vm2573, %v2572, 0
        %v2575 = vshrl.u32 %v2574, 5
        %v2576 = vand.u32 %v2574, 31
        %v2577 = vsub.s32 32, %v2576
        %v2578 = vshrl.u32 683565275, %v2577
        %v2579 = vshll.u32 683565275, %v2576
        %v2580 = vshrl.u32 2475754826, %v2577
        %v2581 = vor.u32 %v2579, %v2580
        %v2582 = vshll.u32 2475754826, %v2576
        %v2583 = vshrl.u32 2131351028, %v2577
        %v2584 = vor.u32 %v2582, %v2583
        %v2585 = vshll.u32 2131351028, %v2576
        %v2586 = vshrl.u32 2102212464, %v2577
        %v2587 = vor.u32 %v2585, %v2586
        %v2588 = vshll.u32 2102212464, %v2576
        %v2589 = vshrl.u32 920167782, %v2577
        %v2590 = vor.u32 %v2588, %v2589
        %v2591 = vshll.u32 920167782, %v2576
        %v2592 = vshrl.u32 1326507024, %v2577
        %v2593 = vor.u32 %v2591, %v2592
        %vm2594 = vcmp.lt.s32.totalorder %v2575, 1
        %vm2595 = vcmp.lt.s32.totalorder %v2575, 2
        %vm2596 = vcmp.lt.s32.totalorder %v2575, 3
        %vm2597 = vcmp.lt.s32.totalorder %v2575, 4
        %v2598 = vsel %vm2594, %v2578, %v2581
        %v2599 = vsel %vm2597, %v2587, 2102212464
        %v2600 = vsel %vm2596, %v2584, %v2599
        %v2601 = vsel %vm2595, %v2598, %v2600
        %v2602 = vsel %vm2594, %v2581, %v2584
        %v2603 = vsel %vm2597, %v2590, 920167782
        %v2604 = vsel %vm2596, %v2587, %v2603
        %v2605 = vsel %vm2595, %v2602, %v2604
        %v2606 = vsel %vm2594, %v2584, %v2587
        %v2607 = vsel %vm2597, %v2593, 1326507024
        %v2608 = vsel %vm2596, %v2590, %v2607
        %v2609 = vsel %vm2595, %v2606, %v2608
        %v2610 = vshll.u32 %v2570, 8
        %v2611 = vmul.u32.u64.compose %v2610, %v2609
        %v2612 = vextract.low.u32 %v2611
        %v2613 = vextract.high.u32 %v2611
        %v2614 = vmul.u32.u64.compose %v2610, %v2605
        %v2615 = vextract.low.u32 %v2614
        %v2616 = vextract.high.u32 %v2614
        %v2617 = vmul.u32 %v2610, %v2601
        %v2618 = vadd.s32 %v2613, %v2615
        %vm2619 = vc.u32 %v2613, %v2615
        %v2620 = vadd.s32 %v2616, 1
        %v2621 = vsel %vm2619, %v2620, %v2616
        %v2622 = vadd.s32 %v2617, %v2621
        %v2623 = vadd.s32 %v2622, 536870912
        %v2624 = vshrl.u32 %v2623, 30
        %v2625 = vshll.u32 %v2624, 30
        %v2626 = vsub.s32 %v2622, %v2625
        %vm2627 = vcmp.lt.s32.totalorder %v2626, 0
        %v2628 = vsub.s32 0, %v2626
        %v2629 = vsel %vm2627, %v2628, %v2626
        %v2630 = vclz %v2629
        %v2631 = vsub.s32 %v2630, 2
        %vm2632 = vcmp.gt.s32.totalorder 0, %v2631
        %v2633 = vsel %vm2632, 0, %v2631
        %v2634 = vsub.s32 32, %v2633
        %v2635 = vshll.u32 %v2626, %v2633
        %v2636 = vshrl.u32 %v2618, %v2634
        %v2637 = vor.u32 %v2635, %v2636
        %v2638 = vsub.s32 4294967266, %v2633
        %v2639 = vadd.s32 %v2638, 127
        %v2640 = vshll.u32 %v2639, 23
        %v2641 = vor.u32 4788187, %v2640
        %v2642 = vand.u32 2147483647, %v2641
        %v2644 = vcvt.s32.f32 %v2637
        %v2645 = vmul.f32 %v2644, %v2642
        %v2646 = vxor.u32 %v2645, 2147483648
        %v2647 = vsel %vm2564, %v2646, %v2645
        %v2648 = vsub.s32 4, %v2624
        %v2649 = vsel %vm2564, %v2648, %v2624
        %v2650 = vsel %vm2563, %v254, %v2647
        %v2651 = vsel %vm2563, 0, %v2649
        %v2652 = vcosq.f32.pop %v2650
        %v2653 = vsinq.f32.pop %v2650
        %vm2654 = vweird.f32 %v254
        %v2655 = vand.u32 %v2651, 3
        %vm2656 = vcmp.lt.s32.totalorder %v2655, 2
        %vm2657 = vcmp.eq.s32.totalorder %v2655, 0
        %v2658 = vxor.u32 %v2653, 2147483648
        %v2659 = vsel %vm2657, %v2652, %v2658
        %vm2660 = vcmp.eq.s32.totalorder %v2655, 2
        %v2661 = vxor.u32 %v2652, 2147483648
        %v2662 = vsel %vm2660, %v2661, %v2653
        %v2663 = vsel %vm2656, %v2659, %v2662
        %v2664 = vsel %vm2654, nan, %v2663
        %v2665 = vand.u32 2147483647, %v255
        %vm2666 = vcmp.le.f32.partialorder %v2665, 0.7853982
        %vm2667 = vcmp.lt.s32.totalorder %v255, 0
        %v2668 = vand.u32 %v255, 2139095040
        %v2669 = vshrl.u32 %v2668, 23
        %v2670 = vsub.s32 %v2669, 127
        %v2671 = vand.u32 2147483647, %v255
        %v2672 = vand.u32 %v2671, 8388607
        %v2673 = vor.u32 %v2672, 8388608
        %v2674 = vsub.s32 0, %v2673
        %v2675 = vadd.s32 %v2670, 1
        %vm2676 = vcmp.gt.s32.totalorder %v2675, 0
        %v2677 = vsel %vm2676, %v2675, 0
        %v2678 = vshrl.u32 %v2677, 5
        %v2679 = vand.u32 %v2677, 31
        %v2680 = vsub.s32 32, %v2679
        %v2681 = vshrl.u32 683565275, %v2680
        %v2682 = vshll.u32 683565275, %v2679
        %v2683 = vshrl.u32 2475754826, %v2680
        %v2684 = vor.u32 %v2682, %v2683
        %v2685 = vshll.u32 2475754826, %v2679
        %v2686 = vshrl.u32 2131351028, %v2680
        %v2687 = vor.u32 %v2685, %v2686
        %v2688 = vshll.u32 2131351028, %v2679
        %v2689 = vshrl.u32 2102212464, %v2680
        %v2690 = vor.u32 %v2688, %v2689
        %v2691 = vshll.u32 2102212464, %v2679
        %v2692 = vshrl.u32 920167782, %v2680
        %v2693 = vor.u32 %v2691, %v2692
        %v2694 = vshll.u32 920167782, %v2679
        %v2695 = vshrl.u32 1326507024, %v2680
        %v2696 = vor.u32 %v2694, %v2695
        %vm2697 = vcmp.lt.s32.totalorder %v2678, 1
        %vm2698 = vcmp.lt.s32.totalorder %v2678, 2
        %vm2699 = vcmp.lt.s32.totalorder %v2678, 3
        %vm2700 = vcmp.lt.s32.totalorder %v2678, 4
        %v2701 = vsel %vm2697, %v2681, %v2684
        %v2702 = vsel %vm2700, %v2690, 2102212464
        %v2703 = vsel %vm2699, %v2687, %v2702
        %v2704 = vsel %vm2698, %v2701, %v2703
        %v2705 = vsel %vm2697, %v2684, %v2687
        %v2706 = vsel %vm2700, %v2693, 920167782
        %v2707 = vsel %vm2699, %v2690, %v2706
        %v2708 = vsel %vm2698, %v2705, %v2707
        %v2709 = vsel %vm2697, %v2687, %v2690
        %v2710 = vsel %vm2700, %v2696, 1326507024
        %v2711 = vsel %vm2699, %v2693, %v2710
        %v2712 = vsel %vm2698, %v2709, %v2711
        %v2713 = vshll.u32 %v2673, 8
        %v2714 = vmul.u32.u64.compose %v2713, %v2712
        %v2715 = vextract.low.u32 %v2714
        %v2716 = vextract.high.u32 %v2714
        %v2717 = vmul.u32.u64.compose %v2713, %v2708
        %v2718 = vextract.low.u32 %v2717
        %v2719 = vextract.high.u32 %v2717
        %v2720 = vmul.u32 %v2713, %v2704
        %v2721 = vadd.s32 %v2716, %v2718
        %vm2722 = vc.u32 %v2716, %v2718
        %v2723 = vadd.s32 %v2719, 1
        %v2724 = vsel %vm2722, %v2723, %v2719
        %v2725 = vadd.s32 %v2720, %v2724
        %v2726 = vadd.s32 %v2725, 536870912
        %v2727 = vshrl.u32 %v2726, 30
        %v2728 = vshll.u32 %v2727, 30
        %v2729 = vsub.s32 %v2725, %v2728
        %vm2730 = vcmp.lt.s32.totalorder %v2729, 0
        %v2731 = vsub.s32 0, %v2729
        %v2732 = vsel %vm2730, %v2731, %v2729
        %v2733 = vclz %v2732
        %v2734 = vsub.s32 %v2733, 2
        %vm2735 = vcmp.gt.s32.totalorder 0, %v2734
        %v2736 = vsel %vm2735, 0, %v2734
        %v2737 = vsub.s32 32, %v2736
        %v2738 = vshll.u32 %v2729, %v2736
        %v2739 = vshrl.u32 %v2721, %v2737
        %v2740 = vor.u32 %v2738, %v2739
        %v2741 = vsub.s32 4294967266, %v2736
        %v2742 = vadd.s32 %v2741, 127
        %v2743 = vshll.u32 %v2742, 23
        %v2744 = vor.u32 4788187, %v2743
        %v2745 = vand.u32 2147483647, %v2744
        %v2747 = vcvt.s32.f32 %v2740
        %v2748 = vmul.f32 %v2747, %v2745
        %v2749 = vxor.u32 %v2748, 2147483648
        %v2750 = vsel %vm2667, %v2749, %v2748
        %v2751 = vsub.s32 4, %v2727
        %v2752 = vsel %vm2667, %v2751, %v2727
        %v2753 = vsel %vm2666, %v255, %v2750
        %v2754 = vsel %vm2666, 0, %v2752
        %v2755 = vcosq.f32.pop %v2753
        %v2756 = vsinq.f32.pop %v2753
        %vm2757 = vweird.f32 %v255
        %v2758 = vand.u32 %v2754, 3
        %vm2759 = vcmp.lt.s32.totalorder %v2758, 2
        %vm2760 = vcmp.eq.s32.totalorder %v2758, 0
        %v2761 = vxor.u32 %v2756, 2147483648
        %v2762 = vsel %vm2760, %v2755, %v2761
        %vm2763 = vcmp.eq.s32.totalorder %v2758, 2
        %v2764 = vxor.u32 %v2755, 2147483648
        %v2765 = vsel %vm2763, %v2764, %v2756
        %v2766 = vsel %vm2759, %v2762, %v2765
        %v2767 = vsel %vm2757, nan, %v2766
        %v2768 = vand.u32 2147483647, %v256
        %vm2769 = vcmp.le.f32.partialorder %v2768, 0.7853982
        %vm2770 = vcmp.lt.s32.totalorder %v256, 0
        %v2771 = vand.u32 %v256, 2139095040
        %v2772 = vshrl.u32 %v2771, 23
        %v2773 = vsub.s32 %v2772, 127
        %v2774 = vand.u32 2147483647, %v256
        %v2775 = vand.u32 %v2774, 8388607
        %v2776 = vor.u32 %v2775, 8388608
        %v2777 = vsub.s32 0, %v2776
        %v2778 = vadd.s32 %v2773, 1
        %vm2779 = vcmp.gt.s32.totalorder %v2778, 0
        %v2780 = vsel %vm2779, %v2778, 0
        %v2781 = vshrl.u32 %v2780, 5
        %v2782 = vand.u32 %v2780, 31
        %v2783 = vsub.s32 32, %v2782
        %v2784 = vshrl.u32 683565275, %v2783
        %v2785 = vshll.u32 683565275, %v2782
        %v2786 = vshrl.u32 2475754826, %v2783
        %v2787 = vor.u32 %v2785, %v2786
        %v2788 = vshll.u32 2475754826, %v2782
        %v2789 = vshrl.u32 2131351028, %v2783
        %v2790 = vor.u32 %v2788, %v2789
        %v2791 = vshll.u32 2131351028, %v2782
        %v2792 = vshrl.u32 2102212464, %v2783
        %v2793 = vor.u32 %v2791, %v2792
        %v2794 = vshll.u32 2102212464, %v2782
        %v2795 = vshrl.u32 920167782, %v2783
        %v2796 = vor.u32 %v2794, %v2795
        %v2797 = vshll.u32 920167782, %v2782
        %v2798 = vshrl.u32 1326507024, %v2783
        %v2799 = vor.u32 %v2797, %v2798
        %vm2800 = vcmp.lt.s32.totalorder %v2781, 1
        %vm2801 = vcmp.lt.s32.totalorder %v2781, 2
        %vm2802 = vcmp.lt.s32.totalorder %v2781, 3
        %vm2803 = vcmp.lt.s32.totalorder %v2781, 4
        %v2804 = vsel %vm2800, %v2784, %v2787
        %v2805 = vsel %vm2803, %v2793, 2102212464
        %v2806 = vsel %vm2802, %v2790, %v2805
        %v2807 = vsel %vm2801, %v2804, %v2806
        %v2808 = vsel %vm2800, %v2787, %v2790
        %v2809 = vsel %vm2803, %v2796, 920167782
        %v2810 = vsel %vm2802, %v2793, %v2809
        %v2811 = vsel %vm2801, %v2808, %v2810
        %v2812 = vsel %vm2800, %v2790, %v2793
        %v2813 = vsel %vm2803, %v2799, 1326507024
        %v2814 = vsel %vm2802, %v2796, %v2813
        %v2815 = vsel %vm2801, %v2812, %v2814
        %v2816 = vshll.u32 %v2776, 8
        %v2817 = vmul.u32.u64.compose %v2816, %v2815
        %v2818 = vextract.low.u32 %v2817
        %v2819 = vextract.high.u32 %v2817
        %v2820 = vmul.u32.u64.compose %v2816, %v2811
        %v2821 = vextract.low.u32 %v2820
        %v2822 = vextract.high.u32 %v2820
        %v2823 = vmul.u32 %v2816, %v2807
        %v2824 = vadd.s32 %v2819, %v2821
        %vm2825 = vc.u32 %v2819, %v2821
        %v2826 = vadd.s32 %v2822, 1
        %v2827 = vsel %vm2825, %v2826, %v2822
        %v2828 = vadd.s32 %v2823, %v2827
        %v2829 = vadd.s32 %v2828, 536870912
        %v2830 = vshrl.u32 %v2829, 30
        %v2831 = vshll.u32 %v2830, 30
        %v2832 = vsub.s32 %v2828, %v2831
        %vm2833 = vcmp.lt.s32.totalorder %v2832, 0
        %v2834 = vsub.s32 0, %v2832
        %v2835 = vsel %vm2833, %v2834, %v2832
        %v2836 = vclz %v2835
        %v2837 = vsub.s32 %v2836, 2
        %vm2838 = vcmp.gt.s32.totalorder 0, %v2837
        %v2839 = vsel %vm2838, 0, %v2837
        %v2840 = vsub.s32 32, %v2839
        %v2841 = vshll.u32 %v2832, %v2839
        %v2842 = vshrl.u32 %v2824, %v2840
        %v2843 = vor.u32 %v2841, %v2842
        %v2844 = vsub.s32 4294967266, %v2839
        %v2845 = vadd.s32 %v2844, 127
        %v2846 = vshll.u32 %v2845, 23
        %v2847 = vor.u32 4788187, %v2846
        %v2848 = vand.u32 2147483647, %v2847
        %v2850 = vcvt.s32.f32 %v2843
        %v2851 = vmul.f32 %v2850, %v2848
        %v2852 = vxor.u32 %v2851, 2147483648
        %v2853 = vsel %vm2770, %v2852, %v2851
        %v2854 = vsub.s32 4, %v2830
        %v2855 = vsel %vm2770, %v2854, %v2830
        %v2856 = vsel %vm2769, %v256, %v2853
        %v2857 = vsel %vm2769, 0, %v2855
        %v2858 = vcosq.f32.pop %v2856
        %v2859 = vsinq.f32.pop %v2856
        %vm2860 = vweird.f32 %v256
        %v2861 = vand.u32 %v2857, 3
        %vm2862 = vcmp.lt.s32.totalorder %v2861, 2
        %vm2863 = vcmp.eq.s32.totalorder %v2861, 0
        %v2864 = vxor.u32 %v2859, 2147483648
        %v2865 = vsel %vm2863, %v2858, %v2864
        %vm2866 = vcmp.eq.s32.totalorder %v2861, 2
        %v2867 = vxor.u32 %v2858, 2147483648
        %v2868 = vsel %vm2866, %v2867, %v2859
        %v2869 = vsel %vm2862, %v2865, %v2868
        %v2870 = vsel %vm2860, nan, %v2869
        %v2871 = vand.u32 2147483647, %v257
        %vm2872 = vcmp.le.f32.partialorder %v2871, 0.7853982
        %vm2873 = vcmp.lt.s32.totalorder %v257, 0
        %v2874 = vand.u32 %v257, 2139095040
        %v2875 = vshrl.u32 %v2874, 23
        %v2876 = vsub.s32 %v2875, 127
        %v2877 = vand.u32 2147483647, %v257
        %v2878 = vand.u32 %v2877, 8388607
        %v2879 = vor.u32 %v2878, 8388608
        %v2880 = vsub.s32 0, %v2879
        %v2881 = vadd.s32 %v2876, 1
        %vm2882 = vcmp.gt.s32.totalorder %v2881, 0
        %v2883 = vsel %vm2882, %v2881, 0
        %v2884 = vshrl.u32 %v2883, 5
        %v2885 = vand.u32 %v2883, 31
        %v2886 = vsub.s32 32, %v2885
        %v2887 = vshrl.u32 683565275, %v2886
        %v2888 = vshll.u32 683565275, %v2885
        %v2889 = vshrl.u32 2475754826, %v2886
        %v2890 = vor.u32 %v2888, %v2889
        %v2891 = vshll.u32 2475754826, %v2885
        %v2892 = vshrl.u32 2131351028, %v2886
        %v2893 = vor.u32 %v2891, %v2892
        %v2894 = vshll.u32 2131351028, %v2885
        %v2895 = vshrl.u32 2102212464, %v2886
        %v2896 = vor.u32 %v2894, %v2895
        %v2897 = vshll.u32 2102212464, %v2885
        %v2898 = vshrl.u32 920167782, %v2886
        %v2899 = vor.u32 %v2897, %v2898
        %v2900 = vshll.u32 920167782, %v2885
        %v2901 = vshrl.u32 1326507024, %v2886
        %v2902 = vor.u32 %v2900, %v2901
        %vm2903 = vcmp.lt.s32.totalorder %v2884, 1
        %vm2904 = vcmp.lt.s32.totalorder %v2884, 2
        %vm2905 = vcmp.lt.s32.totalorder %v2884, 3
        %vm2906 = vcmp.lt.s32.totalorder %v2884, 4
        %v2907 = vsel %vm2903, %v2887, %v2890
        %v2908 = vsel %vm2906, %v2896, 2102212464
        %v2909 = vsel %vm2905, %v2893, %v2908
        %v2910 = vsel %vm2904, %v2907, %v2909
        %v2911 = vsel %vm2903, %v2890, %v2893
        %v2912 = vsel %vm2906, %v2899, 920167782
        %v2913 = vsel %vm2905, %v2896, %v2912
        %v2914 = vsel %vm2904, %v2911, %v2913
        %v2915 = vsel %vm2903, %v2893, %v2896
        %v2916 = vsel %vm2906, %v2902, 1326507024
        %v2917 = vsel %vm2905, %v2899, %v2916
        %v2918 = vsel %vm2904, %v2915, %v2917
        %v2919 = vshll.u32 %v2879, 8
        %v2920 = vmul.u32.u64.compose %v2919, %v2918
        %v2921 = vextract.low.u32 %v2920
        %v2922 = vextract.high.u32 %v2920
        %v2923 = vmul.u32.u64.compose %v2919, %v2914
        %v2924 = vextract.low.u32 %v2923
        %v2925 = vextract.high.u32 %v2923
        %v2926 = vmul.u32 %v2919, %v2910
        %v2927 = vadd.s32 %v2922, %v2924
        %vm2928 = vc.u32 %v2922, %v2924
        %v2929 = vadd.s32 %v2925, 1
        %v2930 = vsel %vm2928, %v2929, %v2925
        %v2931 = vadd.s32 %v2926, %v2930
        %v2932 = vadd.s32 %v2931, 536870912
        %v2933 = vshrl.u32 %v2932, 30
        %v2934 = vshll.u32 %v2933, 30
        %v2935 = vsub.s32 %v2931, %v2934
        %vm2936 = vcmp.lt.s32.totalorder %v2935, 0
        %v2937 = vsub.s32 0, %v2935
        %v2938 = vsel %vm2936, %v2937, %v2935
        %v2939 = vclz %v2938
        %v2940 = vsub.s32 %v2939, 2
        %vm2941 = vcmp.gt.s32.totalorder 0, %v2940
        %v2942 = vsel %vm2941, 0, %v2940
        %v2943 = vsub.s32 32, %v2942
        %v2944 = vshll.u32 %v2935, %v2942
        %v2945 = vshrl.u32 %v2927, %v2943
        %v2946 = vor.u32 %v2944, %v2945
        %v2947 = vsub.s32 4294967266, %v2942
        %v2948 = vadd.s32 %v2947, 127
        %v2949 = vshll.u32 %v2948, 23
        %v2950 = vor.u32 4788187, %v2949
        %v2951 = vand.u32 2147483647, %v2950
        %v2953 = vcvt.s32.f32 %v2946
        %v2954 = vmul.f32 %v2953, %v2951
        %v2955 = vxor.u32 %v2954, 2147483648
        %v2956 = vsel %vm2873, %v2955, %v2954
        %v2957 = vsub.s32 4, %v2933
        %v2958 = vsel %vm2873, %v2957, %v2933
        %v2959 = vsel %vm2872, %v257, %v2956
        %v2960 = vsel %vm2872, 0, %v2958
        %v2961 = vcosq.f32.pop %v2959
        %v2962 = vsinq.f32.pop %v2959
        %vm2963 = vweird.f32 %v257
        %v2964 = vand.u32 %v2960, 3
        %vm2965 = vcmp.lt.s32.totalorder %v2964, 2
        %vm2966 = vcmp.eq.s32.totalorder %v2964, 0
        %v2967 = vxor.u32 %v2962, 2147483648
        %v2968 = vsel %vm2966, %v2961, %v2967
        %vm2969 = vcmp.eq.s32.totalorder %v2964, 2
        %v2970 = vxor.u32 %v2961, 2147483648
        %v2971 = vsel %vm2969, %v2970, %v2962
        %v2972 = vsel %vm2965, %v2968, %v2971
        %v2973 = vsel %vm2963, nan, %v2972
        %v2974 = vand.u32 2147483647, %v258
        %vm2975 = vcmp.le.f32.partialorder %v2974, 0.7853982
        %vm2976 = vcmp.lt.s32.totalorder %v258, 0
        %v2977 = vand.u32 %v258, 2139095040
        %v2978 = vshrl.u32 %v2977, 23
        %v2979 = vsub.s32 %v2978, 127
        %v2980 = vand.u32 2147483647, %v258
        %v2981 = vand.u32 %v2980, 8388607
        %v2982 = vor.u32 %v2981, 8388608
        %v2983 = vsub.s32 0, %v2982
        %v2984 = vadd.s32 %v2979, 1
        %vm2985 = vcmp.gt.s32.totalorder %v2984, 0
        %v2986 = vsel %vm2985, %v2984, 0
        %v2987 = vshrl.u32 %v2986, 5
        %v2988 = vand.u32 %v2986, 31
        %v2989 = vsub.s32 32, %v2988
        %v2990 = vshrl.u32 683565275, %v2989
        %v2991 = vshll.u32 683565275, %v2988
        %v2992 = vshrl.u32 2475754826, %v2989
        %v2993 = vor.u32 %v2991, %v2992
        %v2994 = vshll.u32 2475754826, %v2988
        %v2995 = vshrl.u32 2131351028, %v2989
        %v2996 = vor.u32 %v2994, %v2995
        %v2997 = vshll.u32 2131351028, %v2988
        %v2998 = vshrl.u32 2102212464, %v2989
        %v2999 = vor.u32 %v2997, %v2998
        %v3000 = vshll.u32 2102212464, %v2988
        %v3001 = vshrl.u32 920167782, %v2989
        %v3002 = vor.u32 %v3000, %v3001
        %v3003 = vshll.u32 920167782, %v2988
        %v3004 = vshrl.u32 1326507024, %v2989
        %v3005 = vor.u32 %v3003, %v3004
        %vm3006 = vcmp.lt.s32.totalorder %v2987, 1
        %vm3007 = vcmp.lt.s32.totalorder %v2987, 2
        %vm3008 = vcmp.lt.s32.totalorder %v2987, 3
        %vm3009 = vcmp.lt.s32.totalorder %v2987, 4
        %v3010 = vsel %vm3006, %v2990, %v2993
        %v3011 = vsel %vm3009, %v2999, 2102212464
        %v3012 = vsel %vm3008, %v2996, %v3011
        %v3013 = vsel %vm3007, %v3010, %v3012
        %v3014 = vsel %vm3006, %v2993, %v2996
        %v3015 = vsel %vm3009, %v3002, 920167782
        %v3016 = vsel %vm3008, %v2999, %v3015
        %v3017 = vsel %vm3007, %v3014, %v3016
        %v3018 = vsel %vm3006, %v2996, %v2999
        %v3019 = vsel %vm3009, %v3005, 1326507024
        %v3020 = vsel %vm3008, %v3002, %v3019
        %v3021 = vsel %vm3007, %v3018, %v3020
        %v3022 = vshll.u32 %v2982, 8
        %v3023 = vmul.u32.u64.compose %v3022, %v3021
        %v3024 = vextract.low.u32 %v3023
        %v3025 = vextract.high.u32 %v3023
        %v3026 = vmul.u32.u64.compose %v3022, %v3017
        %v3027 = vextract.low.u32 %v3026
        %v3028 = vextract.high.u32 %v3026
        %v3029 = vmul.u32 %v3022, %v3013
        %v3030 = vadd.s32 %v3025, %v3027
        %vm3031 = vc.u32 %v3025, %v3027
        %v3032 = vadd.s32 %v3028, 1
        %v3033 = vsel %vm3031, %v3032, %v3028
        %v3034 = vadd.s32 %v3029, %v3033
        %v3035 = vadd.s32 %v3034, 536870912
        %v3036 = vshrl.u32 %v3035, 30
        %v3037 = vshll.u32 %v3036, 30
        %v3038 = vsub.s32 %v3034, %v3037
        %vm3039 = vcmp.lt.s32.totalorder %v3038, 0
        %v3040 = vsub.s32 0, %v3038
        %v3041 = vsel %vm3039, %v3040, %v3038
        %v3042 = vclz %v3041
        %v3043 = vsub.s32 %v3042, 2
        %vm3044 = vcmp.gt.s32.totalorder 0, %v3043
        %v3045 = vsel %vm3044, 0, %v3043
        %v3046 = vsub.s32 32, %v3045
        %v3047 = vshll.u32 %v3038, %v3045
        %v3048 = vshrl.u32 %v3030, %v3046
        %v3049 = vor.u32 %v3047, %v3048
        %v3050 = vsub.s32 4294967266, %v3045
        %v3051 = vadd.s32 %v3050, 127
        %v3052 = vshll.u32 %v3051, 23
        %v3053 = vor.u32 4788187, %v3052
        %v3054 = vand.u32 2147483647, %v3053
        %v3056 = vcvt.s32.f32 %v3049
        %v3057 = vmul.f32 %v3056, %v3054
        %v3058 = vxor.u32 %v3057, 2147483648
        %v3059 = vsel %vm2976, %v3058, %v3057
        %v3060 = vsub.s32 4, %v3036
        %v3061 = vsel %vm2976, %v3060, %v3036
        %v3062 = vsel %vm2975, %v258, %v3059
        %v3063 = vsel %vm2975, 0, %v3061
        %v3064 = vcosq.f32.pop %v3062
        %v3065 = vsinq.f32.pop %v3062
        %vm3066 = vweird.f32 %v258
        %v3067 = vand.u32 %v3063, 3
        %vm3068 = vcmp.lt.s32.totalorder %v3067, 2
        %vm3069 = vcmp.eq.s32.totalorder %v3067, 0
        %v3070 = vxor.u32 %v3065, 2147483648
        %v3071 = vsel %vm3069, %v3064, %v3070
        %vm3072 = vcmp.eq.s32.totalorder %v3067, 2
        %v3073 = vxor.u32 %v3064, 2147483648
        %v3074 = vsel %vm3072, %v3073, %v3065
        %v3075 = vsel %vm3068, %v3071, %v3074
        %v3076 = vsel %vm3066, nan, %v3075
        %v3077 = vand.u32 2147483647, %v259
        %vm3078 = vcmp.le.f32.partialorder %v3077, 0.7853982
        %vm3079 = vcmp.lt.s32.totalorder %v259, 0
        %v3080 = vand.u32 %v259, 2139095040
        %v3081 = vshrl.u32 %v3080, 23
        %v3082 = vsub.s32 %v3081, 127
        %v3083 = vand.u32 2147483647, %v259
        %v3084 = vand.u32 %v3083, 8388607
        %v3085 = vor.u32 %v3084, 8388608
        %v3086 = vsub.s32 0, %v3085
        %v3087 = vadd.s32 %v3082, 1
        %vm3088 = vcmp.gt.s32.totalorder %v3087, 0
        %v3089 = vsel %vm3088, %v3087, 0
        %v3090 = vshrl.u32 %v3089, 5
        %v3091 = vand.u32 %v3089, 31
        %v3092 = vsub.s32 32, %v3091
        %v3093 = vshrl.u32 683565275, %v3092
        %v3094 = vshll.u32 683565275, %v3091
        %v3095 = vshrl.u32 2475754826, %v3092
        %v3096 = vor.u32 %v3094, %v3095
        %v3097 = vshll.u32 2475754826, %v3091
        %v3098 = vshrl.u32 2131351028, %v3092
        %v3099 = vor.u32 %v3097, %v3098
        %v3100 = vshll.u32 2131351028, %v3091
        %v3101 = vshrl.u32 2102212464, %v3092
        %v3102 = vor.u32 %v3100, %v3101
        %v3103 = vshll.u32 2102212464, %v3091
        %v3104 = vshrl.u32 920167782, %v3092
        %v3105 = vor.u32 %v3103, %v3104
        %v3106 = vshll.u32 920167782, %v3091
        %v3107 = vshrl.u32 1326507024, %v3092
        %v3108 = vor.u32 %v3106, %v3107
        %vm3109 = vcmp.lt.s32.totalorder %v3090, 1
        %vm3110 = vcmp.lt.s32.totalorder %v3090, 2
        %vm3111 = vcmp.lt.s32.totalorder %v3090, 3
        %vm3112 = vcmp.lt.s32.totalorder %v3090, 4
        %v3113 = vsel %vm3109, %v3093, %v3096
        %v3114 = vsel %vm3112, %v3102, 2102212464
        %v3115 = vsel %vm3111, %v3099, %v3114
        %v3116 = vsel %vm3110, %v3113, %v3115
        %v3117 = vsel %vm3109, %v3096, %v3099
        %v3118 = vsel %vm3112, %v3105, 920167782
        %v3119 = vsel %vm3111, %v3102, %v3118
        %v3120 = vsel %vm3110, %v3117, %v3119
        %v3121 = vsel %vm3109, %v3099, %v3102
        %v3122 = vsel %vm3112, %v3108, 1326507024
        %v3123 = vsel %vm3111, %v3105, %v3122
        %v3124 = vsel %vm3110, %v3121, %v3123
        %v3125 = vshll.u32 %v3085, 8
        %v3126 = vmul.u32.u64.compose %v3125, %v3124
        %v3127 = vextract.low.u32 %v3126
        %v3128 = vextract.high.u32 %v3126
        %v3129 = vmul.u32.u64.compose %v3125, %v3120
        %v3130 = vextract.low.u32 %v3129
        %v3131 = vextract.high.u32 %v3129
        %v3132 = vmul.u32 %v3125, %v3116
        %v3133 = vadd.s32 %v3128, %v3130
        %vm3134 = vc.u32 %v3128, %v3130
        %v3135 = vadd.s32 %v3131, 1
        %v3136 = vsel %vm3134, %v3135, %v3131
        %v3137 = vadd.s32 %v3132, %v3136
        %v3138 = vadd.s32 %v3137, 536870912
        %v3139 = vshrl.u32 %v3138, 30
        %v3140 = vshll.u32 %v3139, 30
        %v3141 = vsub.s32 %v3137, %v3140
        %vm3142 = vcmp.lt.s32.totalorder %v3141, 0
        %v3143 = vsub.s32 0, %v3141
        %v3144 = vsel %vm3142, %v3143, %v3141
        %v3145 = vclz %v3144
        %v3146 = vsub.s32 %v3145, 2
        %vm3147 = vcmp.gt.s32.totalorder 0, %v3146
        %v3148 = vsel %vm3147, 0, %v3146
        %v3149 = vsub.s32 32, %v3148
        %v3150 = vshll.u32 %v3141, %v3148
        %v3151 = vshrl.u32 %v3133, %v3149
        %v3152 = vor.u32 %v3150, %v3151
        %v3153 = vsub.s32 4294967266, %v3148
        %v3154 = vadd.s32 %v3153, 127
        %v3155 = vshll.u32 %v3154, 23
        %v3156 = vor.u32 4788187, %v3155
        %v3157 = vand.u32 2147483647, %v3156
        %v3159 = vcvt.s32.f32 %v3152
        %v3160 = vmul.f32 %v3159, %v3157
        %v3161 = vxor.u32 %v3160, 2147483648
        %v3162 = vsel %vm3079, %v3161, %v3160
        %v3163 = vsub.s32 4, %v3139
        %v3164 = vsel %vm3079, %v3163, %v3139
        %v3165 = vsel %vm3078, %v259, %v3162
        %v3166 = vsel %vm3078, 0, %v3164
        %v3167 = vcosq.f32.pop %v3165
        %v3168 = vsinq.f32.pop %v3165
        %vm3169 = vweird.f32 %v259
        %v3170 = vand.u32 %v3166, 3
        %vm3171 = vcmp.lt.s32.totalorder %v3170, 2
        %vm3172 = vcmp.eq.s32.totalorder %v3170, 0
        %v3173 = vxor.u32 %v3168, 2147483648
        %v3174 = vsel %vm3172, %v3167, %v3173
        %vm3175 = vcmp.eq.s32.totalorder %v3170, 2
        %v3176 = vxor.u32 %v3167, 2147483648
        %v3177 = vsel %vm3175, %v3176, %v3168
        %v3178 = vsel %vm3171, %v3174, %v3177
        %v3179 = vsel %vm3169, nan, %v3178
        %v3180 = vand.u32 2147483647, %v260
        %vm3181 = vcmp.le.f32.partialorder %v3180, 0.7853982
        %vm3182 = vcmp.lt.s32.totalorder %v260, 0
        %v3183 = vand.u32 %v260, 2139095040
        %v3184 = vshrl.u32 %v3183, 23
        %v3185 = vsub.s32 %v3184, 127
        %v3186 = vand.u32 2147483647, %v260
        %v3187 = vand.u32 %v3186, 8388607
        %v3188 = vor.u32 %v3187, 8388608
        %v3189 = vsub.s32 0, %v3188
        %v3190 = vadd.s32 %v3185, 1
        %vm3191 = vcmp.gt.s32.totalorder %v3190, 0
        %v3192 = vsel %vm3191, %v3190, 0
        %v3193 = vshrl.u32 %v3192, 5
        %v3194 = vand.u32 %v3192, 31
        %v3195 = vsub.s32 32, %v3194
        %v3196 = vshrl.u32 683565275, %v3195
        %v3197 = vshll.u32 683565275, %v3194
        %v3198 = vshrl.u32 2475754826, %v3195
        %v3199 = vor.u32 %v3197, %v3198
        %v3200 = vshll.u32 2475754826, %v3194
        %v3201 = vshrl.u32 2131351028, %v3195
        %v3202 = vor.u32 %v3200, %v3201
        %v3203 = vshll.u32 2131351028, %v3194
        %v3204 = vshrl.u32 2102212464, %v3195
        %v3205 = vor.u32 %v3203, %v3204
        %v3206 = vshll.u32 2102212464, %v3194
        %v3207 = vshrl.u32 920167782, %v3195
        %v3208 = vor.u32 %v3206, %v3207
        %v3209 = vshll.u32 920167782, %v3194
        %v3210 = vshrl.u32 1326507024, %v3195
        %v3211 = vor.u32 %v3209, %v3210
        %vm3212 = vcmp.lt.s32.totalorder %v3193, 1
        %vm3213 = vcmp.lt.s32.totalorder %v3193, 2
        %vm3214 = vcmp.lt.s32.totalorder %v3193, 3
        %vm3215 = vcmp.lt.s32.totalorder %v3193, 4
        %v3216 = vsel %vm3212, %v3196, %v3199
        %v3217 = vsel %vm3215, %v3205, 2102212464
        %v3218 = vsel %vm3214, %v3202, %v3217
        %v3219 = vsel %vm3213, %v3216, %v3218
        %v3220 = vsel %vm3212, %v3199, %v3202
        %v3221 = vsel %vm3215, %v3208, 920167782
        %v3222 = vsel %vm3214, %v3205, %v3221
        %v3223 = vsel %vm3213, %v3220, %v3222
        %v3224 = vsel %vm3212, %v3202, %v3205
        %v3225 = vsel %vm3215, %v3211, 1326507024
        %v3226 = vsel %vm3214, %v3208, %v3225
        %v3227 = vsel %vm3213, %v3224, %v3226
        %v3228 = vshll.u32 %v3188, 8
        %v3229 = vmul.u32.u64.compose %v3228, %v3227
        %v3230 = vextract.low.u32 %v3229
        %v3231 = vextract.high.u32 %v3229
        %v3232 = vmul.u32.u64.compose %v3228, %v3223
        %v3233 = vextract.low.u32 %v3232
        %v3234 = vextract.high.u32 %v3232
        %v3235 = vmul.u32 %v3228, %v3219
        %v3236 = vadd.s32 %v3231, %v3233
        %vm3237 = vc.u32 %v3231, %v3233
        %v3238 = vadd.s32 %v3234, 1
        %v3239 = vsel %vm3237, %v3238, %v3234
        %v3240 = vadd.s32 %v3235, %v3239
        %v3241 = vadd.s32 %v3240, 536870912
        %v3242 = vshrl.u32 %v3241, 30
        %v3243 = vshll.u32 %v3242, 30
        %v3244 = vsub.s32 %v3240, %v3243
        %vm3245 = vcmp.lt.s32.totalorder %v3244, 0
        %v3246 = vsub.s32 0, %v3244
        %v3247 = vsel %vm3245, %v3246, %v3244
        %v3248 = vclz %v3247
        %v3249 = vsub.s32 %v3248, 2
        %vm3250 = vcmp.gt.s32.totalorder 0, %v3249
        %v3251 = vsel %vm3250, 0, %v3249
        %v3252 = vsub.s32 32, %v3251
        %v3253 = vshll.u32 %v3244, %v3251
        %v3254 = vshrl.u32 %v3236, %v3252
        %v3255 = vor.u32 %v3253, %v3254
        %v3256 = vsub.s32 4294967266, %v3251
        %v3257 = vadd.s32 %v3256, 127
        %v3258 = vshll.u32 %v3257, 23
        %v3259 = vor.u32 4788187, %v3258
        %v3260 = vand.u32 2147483647, %v3259
        %v3262 = vcvt.s32.f32 %v3255
        %v3263 = vmul.f32 %v3262, %v3260
        %v3264 = vxor.u32 %v3263, 2147483648
        %v3265 = vsel %vm3182, %v3264, %v3263
        %v3266 = vsub.s32 4, %v3242
        %v3267 = vsel %vm3182, %v3266, %v3242
        %v3268 = vsel %vm3181, %v260, %v3265
        %v3269 = vsel %vm3181, 0, %v3267
        %v3270 = vcosq.f32.pop %v3268
        %v3271 = vsinq.f32.pop %v3268
        %vm3272 = vweird.f32 %v260
        %v3273 = vand.u32 %v3269, 3
        %vm3274 = vcmp.lt.s32.totalorder %v3273, 2
        %vm3275 = vcmp.eq.s32.totalorder %v3273, 0
        %v3276 = vxor.u32 %v3271, 2147483648
        %v3277 = vsel %vm3275, %v3270, %v3276
        %vm3278 = vcmp.eq.s32.totalorder %v3273, 2
        %v3279 = vxor.u32 %v3270, 2147483648
        %v3280 = vsel %vm3278, %v3279, %v3271
        %v3281 = vsel %vm3274, %v3277, %v3280
        %v3282 = vsel %vm3272, nan, %v3281
        %v3283 = vand.u32 2147483647, %v261
        %vm3284 = vcmp.le.f32.partialorder %v3283, 0.7853982
        %vm3285 = vcmp.lt.s32.totalorder %v261, 0
        %v3286 = vand.u32 %v261, 2139095040
        %v3287 = vshrl.u32 %v3286, 23
        %v3288 = vsub.s32 %v3287, 127
        %v3289 = vand.u32 2147483647, %v261
        %v3290 = vand.u32 %v3289, 8388607
        %v3291 = vor.u32 %v3290, 8388608
        %v3292 = vsub.s32 0, %v3291
        %v3293 = vadd.s32 %v3288, 1
        %vm3294 = vcmp.gt.s32.totalorder %v3293, 0
        %v3295 = vsel %vm3294, %v3293, 0
        %v3296 = vshrl.u32 %v3295, 5
        %v3297 = vand.u32 %v3295, 31
        %v3298 = vsub.s32 32, %v3297
        %v3299 = vshrl.u32 683565275, %v3298
        %v3300 = vshll.u32 683565275, %v3297
        %v3301 = vshrl.u32 2475754826, %v3298
        %v3302 = vor.u32 %v3300, %v3301
        %v3303 = vshll.u32 2475754826, %v3297
        %v3304 = vshrl.u32 2131351028, %v3298
        %v3305 = vor.u32 %v3303, %v3304
        %v3306 = vshll.u32 2131351028, %v3297
        %v3307 = vshrl.u32 2102212464, %v3298
        %v3308 = vor.u32 %v3306, %v3307
        %v3309 = vshll.u32 2102212464, %v3297
        %v3310 = vshrl.u32 920167782, %v3298
        %v3311 = vor.u32 %v3309, %v3310
        %v3312 = vshll.u32 920167782, %v3297
        %v3313 = vshrl.u32 1326507024, %v3298
        %v3314 = vor.u32 %v3312, %v3313
        %vm3315 = vcmp.lt.s32.totalorder %v3296, 1
        %vm3316 = vcmp.lt.s32.totalorder %v3296, 2
        %vm3317 = vcmp.lt.s32.totalorder %v3296, 3
        %vm3318 = vcmp.lt.s32.totalorder %v3296, 4
        %v3319 = vsel %vm3315, %v3299, %v3302
        %v3320 = vsel %vm3318, %v3308, 2102212464
        %v3321 = vsel %vm3317, %v3305, %v3320
        %v3322 = vsel %vm3316, %v3319, %v3321
        %v3323 = vsel %vm3315, %v3302, %v3305
        %v3324 = vsel %vm3318, %v3311, 920167782
        %v3325 = vsel %vm3317, %v3308, %v3324
        %v3326 = vsel %vm3316, %v3323, %v3325
        %v3327 = vsel %vm3315, %v3305, %v3308
        %v3328 = vsel %vm3318, %v3314, 1326507024
        %v3329 = vsel %vm3317, %v3311, %v3328
        %v3330 = vsel %vm3316, %v3327, %v3329
        %v3331 = vshll.u32 %v3291, 8
        %v3332 = vmul.u32.u64.compose %v3331, %v3330
        %v3333 = vextract.low.u32 %v3332
        %v3334 = vextract.high.u32 %v3332
        %v3335 = vmul.u32.u64.compose %v3331, %v3326
        %v3336 = vextract.low.u32 %v3335
        %v3337 = vextract.high.u32 %v3335
        %v3338 = vmul.u32 %v3331, %v3322
        %v3339 = vadd.s32 %v3334, %v3336
        %vm3340 = vc.u32 %v3334, %v3336
        %v3341 = vadd.s32 %v3337, 1
        %v3342 = vsel %vm3340, %v3341, %v3337
        %v3343 = vadd.s32 %v3338, %v3342
        %v3344 = vadd.s32 %v3343, 536870912
        %v3345 = vshrl.u32 %v3344, 30
        %v3346 = vshll.u32 %v3345, 30
        %v3347 = vsub.s32 %v3343, %v3346
        %vm3348 = vcmp.lt.s32.totalorder %v3347, 0
        %v3349 = vsub.s32 0, %v3347
        %v3350 = vsel %vm3348, %v3349, %v3347
        %v3351 = vclz %v3350
        %v3352 = vsub.s32 %v3351, 2
        %vm3353 = vcmp.gt.s32.totalorder 0, %v3352
        %v3354 = vsel %vm3353, 0, %v3352
        %v3355 = vsub.s32 32, %v3354
        %v3356 = vshll.u32 %v3347, %v3354
        %v3357 = vshrl.u32 %v3339, %v3355
        %v3358 = vor.u32 %v3356, %v3357
        %v3359 = vsub.s32 4294967266, %v3354
        %v3360 = vadd.s32 %v3359, 127
        %v3361 = vshll.u32 %v3360, 23
        %v3362 = vor.u32 4788187, %v3361
        %v3363 = vand.u32 2147483647, %v3362
        %v3365 = vcvt.s32.f32 %v3358
        %v3366 = vmul.f32 %v3365, %v3363
        %v3367 = vxor.u32 %v3366, 2147483648
        %v3368 = vsel %vm3285, %v3367, %v3366
        %v3369 = vsub.s32 4, %v3345
        %v3370 = vsel %vm3285, %v3369, %v3345
        %v3371 = vsel %vm3284, %v261, %v3368
        %v3372 = vsel %vm3284, 0, %v3370
        %v3373 = vcosq.f32.pop %v3371
        %v3374 = vsinq.f32.pop %v3371
        %vm3375 = vweird.f32 %v261
        %v3376 = vand.u32 %v3372, 3
        %vm3377 = vcmp.lt.s32.totalorder %v3376, 2
        %vm3378 = vcmp.eq.s32.totalorder %v3376, 0
        %v3379 = vxor.u32 %v3374, 2147483648
        %v3380 = vsel %vm3378, %v3373, %v3379
        %vm3381 = vcmp.eq.s32.totalorder %v3376, 2
        %v3382 = vxor.u32 %v3373, 2147483648
        %v3383 = vsel %vm3381, %v3382, %v3374
        %v3384 = vsel %vm3377, %v3380, %v3383
        %v3385 = vsel %vm3375, nan, %v3384
        %v3386 = vand.u32 2147483647, %v262
        %vm3387 = vcmp.le.f32.partialorder %v3386, 0.7853982
        %vm3388 = vcmp.lt.s32.totalorder %v262, 0
        %v3389 = vand.u32 %v262, 2139095040
        %v3390 = vshrl.u32 %v3389, 23
        %v3391 = vsub.s32 %v3390, 127
        %v3392 = vand.u32 2147483647, %v262
        %v3393 = vand.u32 %v3392, 8388607
        %v3394 = vor.u32 %v3393, 8388608
        %v3395 = vsub.s32 0, %v3394
        %v3396 = vadd.s32 %v3391, 1
        %vm3397 = vcmp.gt.s32.totalorder %v3396, 0
        %v3398 = vsel %vm3397, %v3396, 0
        %v3399 = vshrl.u32 %v3398, 5
        %v3400 = vand.u32 %v3398, 31
        %v3401 = vsub.s32 32, %v3400
        %v3402 = vshrl.u32 683565275, %v3401
        %v3403 = vshll.u32 683565275, %v3400
        %v3404 = vshrl.u32 2475754826, %v3401
        %v3405 = vor.u32 %v3403, %v3404
        %v3406 = vshll.u32 2475754826, %v3400
        %v3407 = vshrl.u32 2131351028, %v3401
        %v3408 = vor.u32 %v3406, %v3407
        %v3409 = vshll.u32 2131351028, %v3400
        %v3410 = vshrl.u32 2102212464, %v3401
        %v3411 = vor.u32 %v3409, %v3410
        %v3412 = vshll.u32 2102212464, %v3400
        %v3413 = vshrl.u32 920167782, %v3401
        %v3414 = vor.u32 %v3412, %v3413
        %v3415 = vshll.u32 920167782, %v3400
        %v3416 = vshrl.u32 1326507024, %v3401
        %v3417 = vor.u32 %v3415, %v3416
        %vm3418 = vcmp.lt.s32.totalorder %v3399, 1
        %vm3419 = vcmp.lt.s32.totalorder %v3399, 2
        %vm3420 = vcmp.lt.s32.totalorder %v3399, 3
        %vm3421 = vcmp.lt.s32.totalorder %v3399, 4
        %v3422 = vsel %vm3418, %v3402, %v3405
        %v3423 = vsel %vm3421, %v3411, 2102212464
        %v3424 = vsel %vm3420, %v3408, %v3423
        %v3425 = vsel %vm3419, %v3422, %v3424
        %v3426 = vsel %vm3418, %v3405, %v3408
        %v3427 = vsel %vm3421, %v3414, 920167782
        %v3428 = vsel %vm3420, %v3411, %v3427
        %v3429 = vsel %vm3419, %v3426, %v3428
        %v3430 = vsel %vm3418, %v3408, %v3411
        %v3431 = vsel %vm3421, %v3417, 1326507024
        %v3432 = vsel %vm3420, %v3414, %v3431
        %v3433 = vsel %vm3419, %v3430, %v3432
        %v3434 = vshll.u32 %v3394, 8
        %v3435 = vmul.u32.u64.compose %v3434, %v3433
        %v3436 = vextract.low.u32 %v3435
        %v3437 = vextract.high.u32 %v3435
        %v3438 = vmul.u32.u64.compose %v3434, %v3429
        %v3439 = vextract.low.u32 %v3438
        %v3440 = vextract.high.u32 %v3438
        %v3441 = vmul.u32 %v3434, %v3425
        %v3442 = vadd.s32 %v3437, %v3439
        %vm3443 = vc.u32 %v3437, %v3439
        %v3444 = vadd.s32 %v3440, 1
        %v3445 = vsel %vm3443, %v3444, %v3440
        %v3446 = vadd.s32 %v3441, %v3445
        %v3447 = vadd.s32 %v3446, 536870912
        %v3448 = vshrl.u32 %v3447, 30
        %v3449 = vshll.u32 %v3448, 30
        %v3450 = vsub.s32 %v3446, %v3449
        %vm3451 = vcmp.lt.s32.totalorder %v3450, 0
        %v3452 = vsub.s32 0, %v3450
        %v3453 = vsel %vm3451, %v3452, %v3450
        %v3454 = vclz %v3453
        %v3455 = vsub.s32 %v3454, 2
        %vm3456 = vcmp.gt.s32.totalorder 0, %v3455
        %v3457 = vsel %vm3456, 0, %v3455
        %v3458 = vsub.s32 32, %v3457
        %v3459 = vshll.u32 %v3450, %v3457
        %v3460 = vshrl.u32 %v3442, %v3458
        %v3461 = vor.u32 %v3459, %v3460
        %v3462 = vsub.s32 4294967266, %v3457
        %v3463 = vadd.s32 %v3462, 127
        %v3464 = vshll.u32 %v3463, 23
        %v3465 = vor.u32 4788187, %v3464
        %v3466 = vand.u32 2147483647, %v3465
        %v3468 = vcvt.s32.f32 %v3461
        %v3469 = vmul.f32 %v3468, %v3466
        %v3470 = vxor.u32 %v3469, 2147483648
        %v3471 = vsel %vm3388, %v3470, %v3469
        %v3472 = vsub.s32 4, %v3448
        %v3473 = vsel %vm3388, %v3472, %v3448
        %v3474 = vsel %vm3387, %v262, %v3471
        %v3475 = vsel %vm3387, 0, %v3473
        %v3476 = vcosq.f32.pop %v3474
        %v3477 = vsinq.f32.pop %v3474
        %vm3478 = vweird.f32 %v262
        %v3479 = vand.u32 %v3475, 3
        %vm3480 = vcmp.lt.s32.totalorder %v3479, 2
        %vm3481 = vcmp.eq.s32.totalorder %v3479, 0
        %v3482 = vxor.u32 %v3477, 2147483648
        %v3483 = vsel %vm3481, %v3476, %v3482
        %vm3484 = vcmp.eq.s32.totalorder %v3479, 2
        %v3485 = vxor.u32 %v3476, 2147483648
        %v3486 = vsel %vm3484, %v3485, %v3477
        %v3487 = vsel %vm3480, %v3483, %v3486
        %v3488 = vsel %vm3478, nan, %v3487
        %v3489 = vand.u32 2147483647, %v263
        %vm3490 = vcmp.le.f32.partialorder %v3489, 0.7853982
        %vm3491 = vcmp.lt.s32.totalorder %v263, 0
        %v3492 = vand.u32 %v263, 2139095040
        %v3493 = vshrl.u32 %v3492, 23
        %v3494 = vsub.s32 %v3493, 127
        %v3495 = vand.u32 2147483647, %v263
        %v3496 = vand.u32 %v3495, 8388607
        %v3497 = vor.u32 %v3496, 8388608
        %v3498 = vsub.s32 0, %v3497
        %v3499 = vadd.s32 %v3494, 1
        %vm3500 = vcmp.gt.s32.totalorder %v3499, 0
        %v3501 = vsel %vm3500, %v3499, 0
        %v3502 = vshrl.u32 %v3501, 5
        %v3503 = vand.u32 %v3501, 31
        %v3504 = vsub.s32 32, %v3503
        %v3505 = vshrl.u32 683565275, %v3504
        %v3506 = vshll.u32 683565275, %v3503
        %v3507 = vshrl.u32 2475754826, %v3504
        %v3508 = vor.u32 %v3506, %v3507
        %v3509 = vshll.u32 2475754826, %v3503
        %v3510 = vshrl.u32 2131351028, %v3504
        %v3511 = vor.u32 %v3509, %v3510
        %v3512 = vshll.u32 2131351028, %v3503
        %v3513 = vshrl.u32 2102212464, %v3504
        %v3514 = vor.u32 %v3512, %v3513
        %v3515 = vshll.u32 2102212464, %v3503
        %v3516 = vshrl.u32 920167782, %v3504
        %v3517 = vor.u32 %v3515, %v3516
        %v3518 = vshll.u32 920167782, %v3503
        %v3519 = vshrl.u32 1326507024, %v3504
        %v3520 = vor.u32 %v3518, %v3519
        %vm3521 = vcmp.lt.s32.totalorder %v3502, 1
        %vm3522 = vcmp.lt.s32.totalorder %v3502, 2
        %vm3523 = vcmp.lt.s32.totalorder %v3502, 3
        %vm3524 = vcmp.lt.s32.totalorder %v3502, 4
        %v3525 = vsel %vm3521, %v3505, %v3508
        %v3526 = vsel %vm3524, %v3514, 2102212464
        %v3527 = vsel %vm3523, %v3511, %v3526
        %v3528 = vsel %vm3522, %v3525, %v3527
        %v3529 = vsel %vm3521, %v3508, %v3511
        %v3530 = vsel %vm3524, %v3517, 920167782
        %v3531 = vsel %vm3523, %v3514, %v3530
        %v3532 = vsel %vm3522, %v3529, %v3531
        %v3533 = vsel %vm3521, %v3511, %v3514
        %v3534 = vsel %vm3524, %v3520, 1326507024
        %v3535 = vsel %vm3523, %v3517, %v3534
        %v3536 = vsel %vm3522, %v3533, %v3535
        %v3537 = vshll.u32 %v3497, 8
        %v3538 = vmul.u32.u64.compose %v3537, %v3536
        %v3539 = vextract.low.u32 %v3538
        %v3540 = vextract.high.u32 %v3538
        %v3541 = vmul.u32.u64.compose %v3537, %v3532
        %v3542 = vextract.low.u32 %v3541
        %v3543 = vextract.high.u32 %v3541
        %v3544 = vmul.u32 %v3537, %v3528
        %v3545 = vadd.s32 %v3540, %v3542
        %vm3546 = vc.u32 %v3540, %v3542
        %v3547 = vadd.s32 %v3543, 1
        %v3548 = vsel %vm3546, %v3547, %v3543
        %v3549 = vadd.s32 %v3544, %v3548
        %v3550 = vadd.s32 %v3549, 536870912
        %v3551 = vshrl.u32 %v3550, 30
        %v3552 = vshll.u32 %v3551, 30
        %v3553 = vsub.s32 %v3549, %v3552
        %vm3554 = vcmp.lt.s32.totalorder %v3553, 0
        %v3555 = vsub.s32 0, %v3553
        %v3556 = vsel %vm3554, %v3555, %v3553
        %v3557 = vclz %v3556
        %v3558 = vsub.s32 %v3557, 2
        %vm3559 = vcmp.gt.s32.totalorder 0, %v3558
        %v3560 = vsel %vm3559, 0, %v3558
        %v3561 = vsub.s32 32, %v3560
        %v3562 = vshll.u32 %v3553, %v3560
        %v3563 = vshrl.u32 %v3545, %v3561
        %v3564 = vor.u32 %v3562, %v3563
        %v3565 = vsub.s32 4294967266, %v3560
        %v3566 = vadd.s32 %v3565, 127
        %v3567 = vshll.u32 %v3566, 23
        %v3568 = vor.u32 4788187, %v3567
        %v3569 = vand.u32 2147483647, %v3568
        %v3571 = vcvt.s32.f32 %v3564
        %v3572 = vmul.f32 %v3571, %v3569
        %v3573 = vxor.u32 %v3572, 2147483648
        %v3574 = vsel %vm3491, %v3573, %v3572
        %v3575 = vsub.s32 4, %v3551
        %v3576 = vsel %vm3491, %v3575, %v3551
        %v3577 = vsel %vm3490, %v263, %v3574
        %v3578 = vsel %vm3490, 0, %v3576
        %v3579 = vcosq.f32.pop %v3577
        %v3580 = vsinq.f32.pop %v3577
        %vm3581 = vweird.f32 %v263
        %v3582 = vand.u32 %v3578, 3
        %vm3583 = vcmp.lt.s32.totalorder %v3582, 2
        %vm3584 = vcmp.eq.s32.totalorder %v3582, 0
        %v3585 = vxor.u32 %v3580, 2147483648
        %v3586 = vsel %vm3584, %v3579, %v3585
        %vm3587 = vcmp.eq.s32.totalorder %v3582, 2
        %v3588 = vxor.u32 %v3579, 2147483648
        %v3589 = vsel %vm3587, %v3588, %v3580
        %v3590 = vsel %vm3583, %v3586, %v3589
        %v3591 = vsel %vm3581, nan, %v3590
        %3592 = vst [vmem:[%s137 + $0x8] sm:$0xff] %v2046
        %3593 = vst [vmem:[%s137 + $0x18] sm:$0xff] %v2149
        %3594 = vst [vmem:[%s137 + $0x28] sm:$0xff] %v2252
        %3595 = vst [vmem:[%s137 + $0x38] sm:$0xff] %v2355
        %3596 = vst [vmem:[%s137 + $0x48] sm:$0xff] %v2458
        %3597 = vst [vmem:[%s137 + $0x58] sm:$0xff] %v2561
        %3598 = vst [vmem:[%s137 + $0x68] sm:$0xff] %v2664
        %3599 = vst [vmem:[%s137 + $0x78] sm:$0xff] %v2767
        %3600 = vst [vmem:[%s137 + $0x88] sm:$0xff] %v2870
        %3601 = vst [vmem:[%s137 + $0x98] sm:$0xff] %v2973
        %3602 = vst [vmem:[%s137 + $0xa8] sm:$0xff] %v3076
        %3603 = vst [vmem:[%s137 + $0xb8] sm:$0xff] %v3179
        %3604 = vst [vmem:[%s137 + $0xc8] sm:$0xff] %v3282
        %3605 = vst [vmem:[%s137 + $0xd8] sm:$0xff] %v3385
        %3606 = vst [vmem:[%s137 + $0xe8] sm:$0xff] %v3488
        %3607 = vst [vmem:[%s137 + $0xf8] sm:$0xff] %v3591
        %s3608 = sand.u32 %s71, 1
        %s3609 = scalar_lea.sflag [#allocation3], %s3608
        %s3610 = sand.u32 %s71, 1
        %s3611 = smul.addr %s3610, 256
        %s3612 = scalar_lea.vmem [#allocation2], %s3611
        // Predicated region
        $region29: #{tpu_custom_call.1} parent=27 // pred_check
          %p3613 = pneg %p81
        $region30: #{tpu_custom_call.1} parent=27 // pred_check_branch
          %3615 = sbr.rel (%p3613) target = $region32
        $region31: #{tpu_custom_call.1} parent=27 // pred_region
          %s3616 = smul.u32 16, %s16
          %s3618 = ssub.s32 4096, 4096
          %3619 = vsyncadd %s3609, %s3618
          %s3620 = smul.addr %s3616, 2
          %s3621 = smul.addr %s3620, 128
          %s3622 = scalar_lea.hbm %s2, %s3621
          %s3623 = sshll.u32 %s3612, 4
          %s3624 = int_to_ptr.vmem [resolvable:$true] %s3623
          %3629 = dma.vmem_to_hbm [thread:$0]  %s3624, 4096, %s3622, %s3609, 256, 256, 16
        $region32: #{tpu_custom_call.1} parent=27 // pred_fallthru
          _
      $region28: #{tpu_custom_call.1} parent=5 // pred_fallthru
        _
      %p3630 = scmp.le.s32.totalorder 2, %s11
      // Predicated region
      $region33: #{tpu_custom_call.1} parent=5 // pred_check
        %p3631 = pneg %p3630
      $region34: #{tpu_custom_call.1} parent=5 // pred_check_branch
        %3633 = sbr.rel (%p3631) target = $region36
      $region35: #{tpu_custom_call.1} parent=5 // pred_region
        %s3634 = ssub.s32 %s11, 2
        // Predicated region
        $region37: #{tpu_custom_call.1} parent=35 // pred_check
          %p3635 = pneg %p87
        $region38: #{tpu_custom_call.1} parent=35 // pred_check_branch
          %3637 = sbr.rel (%p3635) target = $region40
        $region39: #{tpu_custom_call.1} parent=35 // pred_region
          %s3638 = sand.u32 %s72, 1
          %s3639 = scalar_lea.sflag [#allocation3], %s3638
          %s3640 = sand.u32 %s72, 1
          %s3641 = smul.addr %s3640, 256
          %s3642 = scalar_lea.vmem [#allocation2], %s3641
          %3643 = dma.done %s3639, 4096
        $region40: #{tpu_custom_call.1} parent=35 // pred_fallthru
          _
      $region36: #{tpu_custom_call.1} parent=5 // pred_fallthru
        _
    $region6: #{tpu_custom_call.1} parent=1 // loop_footer
      %s15 = sadd.s32 1, %s11
    $region7: #{tpu_custom_call.1} parent=1 // loop_footer_branch
      %10 = sbr.rel target = $region3
    $region8: #{tpu_custom_call.1} parent=1 // loop_exit
      _
    %3644 = vsyncpa [#allocation3], 1
    %s3645 = scalar_lea.sflag [#allocation3], 1
    %3646 = vsyncpa %s3645, 1

</llo_original>
